<compile_context>
chip_gen: v7x
topology: tpu7x:2x2x1
jax: 0.10.0
libtpu: 0.0.40
codegen_flags: <defaults>
</compile_context>

<pallas_src>
import functools

import jax
import jax.numpy as jnp
from jax.experimental import pallas as pl
from jax.experimental.pallas import tpu as pltpu

EPS = 1e-5
LANE = 128


def _round_up(x, m):
    return (x + m - 1) // m * m


def _pick_tile_h(H, W, Kp, budget_bytes=6 << 20):
    """Largest divisor of H whose bf16 im2col scratch fits `budget_bytes`.

    Keeps >= 2 row tiles when H > 8 so the grid has enough steps to pipeline
    and to exercise/feed both megacore TensorCores.
    """
    cap = H if H <= 8 else max(8, H // 2)
    best = 1
    for th in range(1, H + 1):
        if H % th == 0 and th <= cap and th * W * Kp * 2 <= budget_bytes:
            best = th
    return best


def _vmem_limit(*byte_sizes):
    # Explicit scoped-VMEM request sized from the actual working set
    # (raises v5e's 16 MiB default; capped so it stays legal on v7x's 64 MiB).
    need = sum(byte_sizes) + (4 << 20)
    return int(min(max(2 * need, 32 << 20), 64 << 20))


# ----------------------------------------------------------------------------
# Kernel 1: fused [previous-layer BN+ReLU prologue] -> 3x3 SAME conv
# (packed-K im2col, one bf16 MXU matmul per row tile) -> per-batch BN partial
# sums accumulated across row tiles.
# ----------------------------------------------------------------------------
def _conv3x3_kernel(x_ref, sc_ref, sh_ref, w_ref,
                    y_ref, s_ref, ss_ref, patch_ref, *, apply_prologue):
    # x_ref     : (1, H, W+2, Cs)    stored input: zero W-halo cols, no H-halo rows
    # sc_ref    : (1, Cs)            folded BN scale of the PREVIOUS layer
    # sh_ref    : (1, Cs)            folded BN shift of the PREVIOUS layer
    # w_ref     : (Kp, Cop)  bf16    rows packed (ky, kx, cin), K padded to 128
    # y_ref     : (1, TH, W+2, Cop)  conv-output row tile (zero W-halo cols)
    # s_ref     : (1, 1, Cop)        per-batch sum   accumulator (over H, W)
    # ss_ref    : (1, 1, Cop)        per-batch sumsq accumulator
    # patch_ref : (TH*W, Kp) bf16    im2col scratch
    H, Wp2, Cs = x_ref.shape[1], x_ref.shape[2], x_ref.shape[3]
    W = Wp2 - 2
    TH = y_ref.shape[1]
    Cop = y_ref.shape[3]
    Kp = patch_ref.shape[1]

    t = pl.program_id(1)
    n_t = pl.num_programs(1)
    row0 = pl.multiple_of(t * TH, TH)          # first output row of this tile

    def load_rows(start, n):
        v = x_ref[0, pl.ds(start, n), :, :]
        if apply_prologue:
            # Fused BN+ReLU of the previous layer (no standalone pass, no
            # full-area interior mask).
            v = jnp.maximum(v * sc_ref[0] + sh_ref[0], 0.0)
        return v

    # (TH+2)-row slab with a 1-row halo; missing boundary rows are zeroed with
    # a scalar multiply (clamped reads keep the indices in range).
    mid = load_rows(row0, TH)                                    # (TH, W+2, Cs)
    top = load_rows(jnp.maximum(row0 - 1, 0), 1) * (t > 0).astype(jnp.float32)
    bot = load_rows(jnp.minimum(row0 + TH, H - 1), 1) * (
        t < n_t - 1).astype(jnp.float32)
    a = jnp.concatenate([top, mid, bot], axis=0)                 # (TH+2, W+2, Cs)

    if apply_prologue:
        # BN+ReLU turned the stored zero W-halo columns into relu(shift);
        # restore them with a single broadcast multiply (O(one row) mask).
        col = jax.lax.broadcasted_iota(jnp.int32, (1, Wp2, Cs), 1)
        a = a * ((col >= 1) & (col <= W)).astype(a.dtype)

    # im2col, packed K: tap j = 3*ky + kx occupies columns [j*Cs, (j+1)*Cs).
    for ky in range(3):
        for kx in range(3):
            j = ky * 3 + kx
            tap = a[ky:ky + TH, kx:kx + W, :].reshape(TH * W, Cs)
            patch_ref[:, j * Cs:(j + 1) * Cs] = tap.astype(patch_ref.dtype)
    if 9 * Cs < Kp:
        # Zero the K padding (the matching weight rows are zero, but the VMEM
        # scratch is uninitialized -> avoid NaN * 0).
        patch_ref[:, 9 * Cs:] = jnp.zeros((TH * W, Kp - 9 * Cs),
                                          patch_ref.dtype)

    # Single bf16 MXU matmul with f32 accumulation.  The conv bias is dropped:
    # it cancels exactly under training-mode BatchNorm (mean subtraction).
    res = jnp.dot(patch_ref[...], w_ref[...],
                  preferred_element_type=jnp.float32)            # (TH*W, Cop)

    # Per-batch BN partial sums, accumulated over the ("arbitrary") tile axis.
    @pl.when(t == 0)
    def _():
        s_ref[...] = jnp.zeros_like(s_ref)
        ss_ref[...] = jnp.zeros_like(ss_ref)

    s_ref[0, 0, :] += jnp.sum(res, axis=0)
    ss_ref[0, 0, :] += jnp.sum(res * res, axis=0)

    # Conv-output row tile in "zero W-halo" layout: interior store plus two
    # one-column halo stores (no full-block zero fill).
    y_ref[0, :, 1:1 + W, :] = res.reshape(TH, W, Cop)
    zcol = jnp.zeros((TH, 1, Cop), jnp.float32)
    y_ref[0, :, 0:1, :] = zcol
    y_ref[0, :, Wp2 - 1:Wp2, :] = zcol


def conv3x3(x_stored, w_packed, scale_in, shift_in, cout_p, *,
            apply_prologue, tile_h):
    """x_stored: (N, H, W+2, Cs) f32 with zero W-halo columns (no H-halo rows).
    w_packed: (Kp, cout_p) bf16, rows packed (ky, kx, cin)."""
    N, H, Wp2, Cs = x_stored.shape
    W = Wp2 - 2
    Kp = w_packed.shape[0]
    assert H % tile_h == 0
    n_t = H // tile_h

    vlim = _vmem_limit(2 * H * Wp2 * Cs * 4,            # input image block (x2)
                       2 * tile_h * Wp2 * cout_p * 4,   # output row tile (x2)
                       2 * Kp * cout_p * 2,             # bf16 weights (x2)
                       tile_h * W * Kp * 2)             # bf16 im2col scratch

    kernel = functools.partial(_conv3x3_kernel, apply_prologue=apply_prologue)
    y, s, ss = pl.pallas_call(
        kernel,
        out_shape=(
            jax.ShapeDtypeStruct((N, H, Wp2, cout_p), jnp.float32),
            jax.ShapeDtypeStruct((N, 1, cout_p), jnp.float32),
            jax.ShapeDtypeStruct((N, 1, cout_p), jnp.float32),
        ),
        grid_spec=pltpu.PrefetchScalarGridSpec(
            num_scalar_prefetch=0,
            grid=(N, n_t),
            in_specs=[
                # Full image per batch, revisited across row tiles (fetched
                # once per b).  Weights / BN params are constant blocks.
                pl.BlockSpec((1, H, Wp2, Cs), lambda b, t: (b, 0, 0, 0)),
                pl.BlockSpec((1, Cs), lambda b, t: (0, 0)),
                pl.BlockSpec((1, Cs), lambda b, t: (0, 0)),
                pl.BlockSpec((Kp, cout_p), lambda b, t: (0, 0)),
            ],
            out_specs=(
                pl.BlockSpec((1, tile_h, Wp2, cout_p),
                             lambda b, t: (b, t, 0, 0)),
                pl.BlockSpec((1, 1, cout_p), lambda b, t: (b, 0, 0)),
                pl.BlockSpec((1, 1, cout_p), lambda b, t: (b, 0, 0)),
            ),
            scratch_shapes=[pltpu.VMEM((tile_h * W, Kp), jnp.bfloat16)],
        ),
        compiler_params=pltpu.CompilerParams(
            # Batch axis feeds megacore; the row-tile axis carries the BN-stat
            # accumulator, so it stays "arbitrary".
            dimension_semantics=("parallel", "arbitrary"),
            vmem_limit_bytes=vlim),
    )(x_stored,
      scale_in.reshape(1, Cs).astype(jnp.float32),
      shift_in.reshape(1, Cs).astype(jnp.float32),
      w_packed)
    return y, s, ss


# ----------------------------------------------------------------------------
# Kernel 2: final BN+ReLU epilogue.  Reads a conv-output row tile, writes the
# (N, H, W, C_real) NHWC result directly (channel slice fused in).
# ----------------------------------------------------------------------------
def _bn_relu_kernel(y_ref, sc_ref, sh_ref, o_ref):
    W = o_ref.shape[2]
    Cout = o_ref.shape[3]
    y = y_ref[0, :, 1:1 + W, :]                            # (TH, W, Cp)
    v = jnp.maximum(y * sc_ref[0] + sh_ref[0], 0.0)
    o_ref[0, :, :, :] = v[:, :, :Cout]


def bn_relu_epilogue(y_stored, scale, shift, c_out, *, tile_h):
    N, H, Wp2, Cp = y_stored.shape
    W = Wp2 - 2
    assert H % tile_h == 0
    n_t = H // tile_h
    vlim = _vmem_limit(2 * tile_h * Wp2 * Cp * 4, 2 * tile_h * W * c_out * 4)
    return pl.pallas_call(
        _bn_relu_kernel,
        out_shape=jax.ShapeDtypeStruct((N, H, W, c_out), jnp.float32),
        grid_spec=pltpu.PrefetchScalarGridSpec(
            num_scalar_prefetch=0,
            grid=(N, n_t),
            in_specs=[
                pl.BlockSpec((1, tile_h, Wp2, Cp), lambda b, t: (b, t, 0, 0)),
                pl.BlockSpec((1, Cp), lambda b, t: (0, 0)),
                pl.BlockSpec((1, Cp), lambda b, t: (0, 0)),
            ],
            out_specs=pl.BlockSpec((1, tile_h, W, c_out),
                                   lambda b, t: (b, t, 0, 0)),
        ),
        compiler_params=pltpu.CompilerParams(
            dimension_semantics=("parallel", "parallel"),
            vmem_limit_bytes=vlim),
    )(y_stored,
      scale.reshape(1, Cp).astype(jnp.float32),
      shift.reshape(1, Cp).astype(jnp.float32))


# ----------------------------------------------------------------------------
# BN fold: per-batch partials -> per-channel scale/shift (plain JAX, tiny)
# ----------------------------------------------------------------------------
def _fold_bn(s, ss, gamma_p, beta_p, count):
    # s, ss: (N, 1, C) per-batch partial sums of the (bias-less) conv output.
    s_tot = jnp.sum(s, axis=0)[0]
    ss_tot = jnp.sum(ss, axis=0)[0]
    mean = s_tot / count
    # Biased variance (training-mode BN).  E[x^2]-E[x]^2 in f32 is adequate at
    # these magnitudes; use a centered two-pass reduction for very large N*H*W.
    var = jnp.maximum(ss_tot / count - mean * mean, 0.0)
    scale = gamma_p * jax.lax.rsqrt(var + EPS)
    shift = beta_p - mean * scale
    return scale, shift


def _pack_weight(w_hwio, cin_stored, cout_p):
    """(3,3,cin,cout) HWIO -> (round_up(9*cin_stored, 128), cout_p) bf16,
    rows packed as (ky, kx, cin)."""
    kh, kw, cin, cout = w_hwio.shape
    w = w_hwio.astype(jnp.float32)
    if cin_stored > cin:
        w = jnp.pad(w, ((0, 0), (0, 0), (0, cin_stored - cin), (0, 0)))
    k = kh * kw * cin_stored
    w2d = w.reshape(k, cout)
    kp = _round_up(k, LANE)
    w2d = jnp.pad(w2d, ((0, kp - k), (0, cout_p - cout)))
    return w2d.astype(jnp.bfloat16)


def _pad_vec(v, n):
    return jnp.pad(v.astype(jnp.float32), (0, n - v.shape[0]))


# ----------------------------------------------------------------------------
# UNetConvBlock forward
# ----------------------------------------------------------------------------
@jax.jit
def unet_conv_block(x_nchw, params):
    """params = [(w_hwio, bias, gamma, beta), (w_hwio, bias, gamma, beta)].

    Conv biases are accepted for interface parity but unused: under
    training-mode BatchNorm a per-channel bias cancels exactly against the
    mean subtraction (stats and activations are both unaffected).
    """
    (w1, b1, g1, be1), (w2, b2, g2, be2) = params
    del b1, b2
    N, Cin, H, W = x_nchw.shape
    C1, C2 = w1.shape[-1], w2.shape[-1]
    C1p = _round_up(C1, LANE)
    C2p = _round_up(C2, LANE)
    count = float(N * H * W)

    # NCHW -> NHWC; add the zero W-halo columns once.  H-halo rows are handled
    # inside the kernels so the stored layout stays cleanly row-tileable.
    x = jnp.transpose(x_nchw, (0, 2, 3, 1)).astype(jnp.float32)
    x = jnp.pad(x, ((0, 0), (0, 0), (1, 1), (0, 0)))        # (N, H, W+2, Cin)

    # ---- layer 1: conv, packed K = round_up(9*Cin, 128), no prologue ----
    w1p = _pack_weight(w1, Cin, C1p)
    th1 = _pick_tile_h(H, W, w1p.shape[0])
    ident_sc = jnp.ones((Cin,), jnp.float32)                # prologue disabled
    ident_sh = jnp.zeros((Cin,), jnp.float32)
    y1, s1, ss1 = conv3x3(x, w1p, ident_sc, ident_sh, C1p,
                          apply_prologue=False, tile_h=th1)
    scale1, shift1 = _fold_bn(s1, ss1, _pad_vec(g1, C1p), _pad_vec(be1, C1p),
                              count)

    # ---- layer 2: conv with fused BN1+ReLU prologue ----
    w2p = _pack_weight(w2, C1p, C2p)
    th2 = _pick_tile_h(H, W, w2p.shape[0])
    y2, s2, ss2 = conv3x3(y1, w2p, scale1, shift1, C2p,
                          apply_prologue=True, tile_h=th2)
    scale2, shift2 = _fold_bn(s2, ss2, _pad_vec(g2, C2p), _pad_vec(be2, C2p),
                              count)

    # ---- final BN2 + ReLU epilogue (channel slice fused into the kernel) ----
    out_nhwc = bn_relu_epilogue(y2, scale2, shift2, C2, tile_h=th2)
    return jnp.transpose(out_nhwc, (0, 3, 1, 2))            # NHWC -> NCHW


# Pure-JAX reference (NCHW, matches PyTorch training-mode forward)
def reference(x_nchw, params):
    x = x_nchw.astype(jnp.float32)
    for (w_hwio, b, gamma, beta) in params:
        w_oihw = jnp.transpose(w_hwio, (3, 2, 0, 1))
        y = jax.lax.conv_general_dilated(
            x, w_oihw, window_strides=(1, 1), padding=((1, 1), (1, 1)),
            dimension_numbers=("NCHW", "OIHW", "NCHW"))
        y = y + b[None, :, None, None]
        mean = jnp.mean(y, axis=(0, 2, 3), keepdims=True)
        var = jnp.var(y, axis=(0, 2, 3), keepdims=True)  # biased
        y = (y - mean) / jnp.sqrt(var + EPS)
        y = y * gamma[None, :, None, None] + beta[None, :, None, None]
        x = jnp.maximum(y, 0.0)
    return x


if __name__ == "__main__":
    key = jax.random.PRNGKey(0)
    N, Cin, Cout, H, W = 2, 4, 8, 16, 16

    ks = jax.random.split(key, 9)
    x = jax.random.normal(ks[0], (N, Cin, H, W), jnp.float32)

    # Deterministic synthetic parameters (HWIO conv weights).
    w1 = 0.1 * jax.random.normal(ks[1], (3, 3, Cin, Cout), jnp.float32)
    b1 = 0.1 * jax.random.normal(ks[2], (Cout,), jnp.float32)
    g1 = 1.0 + 0.1 * jax.random.normal(ks[3], (Cout,), jnp.float32)
    be1 = 0.1 * jax.random.normal(ks[4], (Cout,), jnp.float32)

    w2 = 0.1 * jax.random.normal(ks[5], (3, 3, Cout, Cout), jnp.float32)
    b2 = 0.1 * jax.random.normal(ks[6], (Cout,), jnp.float32)
    g2 = 1.0 + 0.1 * jax.random.normal(ks[7], (Cout,), jnp.float32)
    be2 = 0.1 * jax.random.normal(ks[8], (Cout,), jnp.float32)

    params = [(w1, b1, g1, be1), (w2, b2, g2, be2)]

    out = jax.block_until_ready(unet_conv_block(x, params))
    ref = jax.block_until_ready(reference(x, params))

    assert out.shape == (N, Cout, H, W), out.shape
    err = float(jnp.max(jnp.abs(out - ref)))
    # bf16 MXU operands (f32 accumulation / BN math) -> looser tolerance than
    # a pure-f32 pipeline.
    assert jnp.allclose(out, ref, rtol=3e-2, atol=3e-2), err

    print("KERNEL_OK")
</pallas_src>

<mosaic_0001>
module attributes {stable_mosaic.version = 11 : i64} {
  func.func @_conv3x3_kernel(%arg0: i32, %arg1: i32, %arg2: memref<1x16x18x4xf32, #tpu.memory_space<vmem>>, %arg3: memref<1x4xf32, #tpu.memory_space<vmem>>, %arg4: memref<1x4xf32, #tpu.memory_space<vmem>>, %arg5: memref<128x128xbf16, #tpu.memory_space<vmem>>, %arg6: memref<1x8x18x128xf32, #tpu.memory_space<vmem>>, %arg7: memref<1x1x128xf32, #tpu.memory_space<vmem>>, %arg8: memref<1x1x128xf32, #tpu.memory_space<vmem>>, %arg9: memref<128x128xbf16, #tpu.memory_space<vmem>>) attributes {dimension_semantics = [#tpu.dimension_semantics<parallel>, #tpu.dimension_semantics<arbitrary>], iteration_bounds = array<i64: 2, 2>, scalar_prefetch = 0 : i64, scratch_operands = 1 : i64, tpu.core_type = #tpu.core_type<tc>, window_params = [{transform_indices = @transform_0, window_bounds = array<i64: 1, 16, 18, 4>}, {pipeline_mode = #tpu.pipeline_mode<synchronous>, transform_indices = @transform_1, window_bounds = array<i64: 1, 4>}, {pipeline_mode = #tpu.pipeline_mode<synchronous>, transform_indices = @transform_2, window_bounds = array<i64: 1, 4>}, {pipeline_mode = #tpu.pipeline_mode<synchronous>, transform_indices = @transform_3, window_bounds = array<i64: 128, 128>}, {transform_indices = @transform_4, window_bounds = array<i64: 1, 8, 18, 128>}, {transform_indices = @transform_5, window_bounds = array<i64: 1, 1, 128>}, {transform_indices = @transform_6, window_bounds = array<i64: 1, 1, 128>}]} {
    %c8_i32 = arith.constant 8 : i32
    %0 = arith.muli %arg1, %c8_i32 : i32
    %1 = tpu.assume_multiple %0, 8 : i32
    %c0 = arith.constant 0 : index
    %2 = arith.index_cast %1 : i32 to index
    %c0_0 = arith.constant 0 : index
    %c0_1 = arith.constant 0 : index
    %3 = vector.load %arg2[%c0, %2, %c0_0, %c0_1] : memref<1x16x18x4xf32, #tpu.memory_space<vmem>>, vector<1x8x18x4xf32>
    %4 = vector.shape_cast %3 : vector<1x8x18x4xf32> to vector<8x18x4xf32>
    %c1_i32 = arith.constant 1 : i32
    %5 = arith.subi %1, %c1_i32 : i32
    %c0_i32 = arith.constant 0 : i32
    %6 = arith.maxsi %5, %c0_i32 : i32
    %c0_2 = arith.constant 0 : index
    %7 = arith.index_cast %6 : i32 to index
    %c0_3 = arith.constant 0 : index
    %c0_4 = arith.constant 0 : index
    %8 = vector.load %arg2[%c0_2, %7, %c0_3, %c0_4] : memref<1x16x18x4xf32, #tpu.memory_space<vmem>>, vector<1x1x18x4xf32>
    %9 = vector.shape_cast %8 : vector<1x1x18x4xf32> to vector<1x18x4xf32>
    %c0_i32_5 = arith.constant 0 : i32
    %10 = arith.cmpi sgt, %arg1, %c0_i32_5 : i32
    %11 = arith.extui %10 : i1 to i32
    %12 = arith.sitofp %11 : i32 to f32
    %13 = vector.broadcast %12 : f32 to vector<1x18x4xf32>
    %14 = arith.mulf %9, %13 : vector<1x18x4xf32>
    %c8_i32_6 = arith.constant 8 : i32
    %15 = arith.addi %1, %c8_i32_6 : i32
    %c15_i32 = arith.constant 15 : i32
    %16 = arith.minsi %15, %c15_i32 : i32
    %c0_7 = arith.constant 0 : index
    %17 = arith.index_cast %16 : i32 to index
    %c0_8 = arith.constant 0 : index
    %c0_9 = arith.constant 0 : index
    %18 = vector.load %arg2[%c0_7, %17, %c0_8, %c0_9] : memref<1x16x18x4xf32, #tpu.memory_space<vmem>>, vector<1x1x18x4xf32>
    %19 = vector.shape_cast %18 : vector<1x1x18x4xf32> to vector<1x18x4xf32>
    %c1_i32_10 = arith.constant 1 : i32
    %20 = arith.cmpi slt, %arg1, %c1_i32_10 : i32
    %21 = arith.extui %20 : i1 to i32
    %22 = arith.sitofp %21 : i32 to f32
    %23 = vector.broadcast %22 : f32 to vector<1x18x4xf32>
    %24 = arith.mulf %19, %23 : vector<1x18x4xf32>
    %25 = tpu.concatenate %14, %4, %24 in 0 : vector<1x18x4xf32>, vector<8x18x4xf32>, vector<1x18x4xf32> -> vector<10x18x4xf32>
    %26 = vector.extract_strided_slice %25 {offsets = [0, 0, 0], sizes = [8, 16, 4], strides = [1, 1, 1]} : vector<10x18x4xf32> to vector<8x16x4xf32>
    %27 = vector.shape_cast %26 : vector<8x16x4xf32> to vector<128x4xf32>
    %28 = arith.truncf %27 : vector<128x4xf32> to vector<128x4xbf16>
    %c0_11 = arith.constant 0 : index
    %c0_12 = arith.constant 0 : index
    %29 = vector.load %arg9[%c0_11, %c0_12] : memref<128x128xbf16, #tpu.memory_space<vmem>>, vector<128x4xbf16>
    tpu.vector_store %arg9[%c0_11, %c0_12], %28 {strides = array<i32>} : memref<128x128xbf16, #tpu.memory_space<vmem>>, vector<128x4xbf16>,
    %30 = vector.extract_strided_slice %25 {offsets = [0, 1, 0], sizes = [8, 16, 4], strides = [1, 1, 1]} : vector<10x18x4xf32> to vector<8x16x4xf32>
    %31 = vector.shape_cast %30 : vector<8x16x4xf32> to vector<128x4xf32>
    %32 = arith.truncf %31 : vector<128x4xf32> to vector<128x4xbf16>
    %c0_13 = arith.constant 0 : index
    %c4 = arith.constant 4 : index
    %33 = vector.load %arg9[%c0_13, %c4] : memref<128x128xbf16, #tpu.memory_space<vmem>>, vector<128x4xbf16>
    tpu.vector_store %arg9[%c0_13, %c4], %32 {strides = array<i32>} : memref<128x128xbf16, #tpu.memory_space<vmem>>, vector<128x4xbf16>,
    %34 = vector.extract_strided_slice %25 {offsets = [0, 2, 0], sizes = [8, 16, 4], strides = [1, 1, 1]} : vector<10x18x4xf32> to vector<8x16x4xf32>
    %35 = vector.shape_cast %34 : vector<8x16x4xf32> to vector<128x4xf32>
    %36 = arith.truncf %35 : vector<128x4xf32> to vector<128x4xbf16>
    %c0_14 = arith.constant 0 : index
    %c8 = arith.constant 8 : index
    %37 = vector.load %arg9[%c0_14, %c8] : memref<128x128xbf16, #tpu.memory_space<vmem>>, vector<128x4xbf16>
    tpu.vector_store %arg9[%c0_14, %c8], %36 {strides = array<i32>} : memref<128x128xbf16, #tpu.memory_space<vmem>>, vector<128x4xbf16>,
    %38 = vector.extract_strided_slice %25 {offsets = [1, 0, 0], sizes = [8, 16, 4], strides = [1, 1, 1]} : vector<10x18x4xf32> to vector<8x16x4xf32>
    %39 = vector.shape_cast %38 : vector<8x16x4xf32> to vector<128x4xf32>
    %40 = arith.truncf %39 : vector<128x4xf32> to vector<128x4xbf16>
    %c0_15 = arith.constant 0 : index
    %c12 = arith.constant 12 : index
    %41 = vector.load %arg9[%c0_15, %c12] : memref<128x128xbf16, #tpu.memory_space<vmem>>, vector<128x4xbf16>
    tpu.vector_store %arg9[%c0_15, %c12], %40 {strides = array<i32>} : memref<128x128xbf16, #tpu.memory_space<vmem>>, vector<128x4xbf16>,
    %42 = vector.extract_strided_slice %25 {offsets = [1, 1, 0], sizes = [8, 16, 4], strides = [1, 1, 1]} : vector<10x18x4xf32> to vector<8x16x4xf32>
    %43 = vector.shape_cast %42 : vector<8x16x4xf32> to vector<128x4xf32>
    %44 = arith.truncf %43 : vector<128x4xf32> to vector<128x4xbf16>
    %c0_16 = arith.constant 0 : index
    %c16 = arith.constant 16 : index
    %45 = vector.load %arg9[%c0_16, %c16] : memref<128x128xbf16, #tpu.memory_space<vmem>>, vector<128x4xbf16>
    tpu.vector_store %arg9[%c0_16, %c16], %44 {strides = array<i32>} : memref<128x128xbf16, #tpu.memory_space<vmem>>, vector<128x4xbf16>,
    %46 = vector.extract_strided_slice %25 {offsets = [1, 2, 0], sizes = [8, 16, 4], strides = [1, 1, 1]} : vector<10x18x4xf32> to vector<8x16x4xf32>
    %47 = vector.shape_cast %46 : vector<8x16x4xf32> to vector<128x4xf32>
    %48 = arith.truncf %47 : vector<128x4xf32> to vector<128x4xbf16>
    %c0_17 = arith.constant 0 : index
    %c20 = arith.constant 20 : index
    %49 = vector.load %arg9[%c0_17, %c20] : memref<128x128xbf16, #tpu.memory_space<vmem>>, vector<128x4xbf16>
    tpu.vector_store %arg9[%c0_17, %c20], %48 {strides = array<i32>} : memref<128x128xbf16, #tpu.memory_space<vmem>>, vector<128x4xbf16>,
    %50 = vector.extract_strided_slice %25 {offsets = [2, 0, 0], sizes = [8, 16, 4], strides = [1, 1, 1]} : vector<10x18x4xf32> to vector<8x16x4xf32>
    %51 = vector.shape_cast %50 : vector<8x16x4xf32> to vector<128x4xf32>
    %52 = arith.truncf %51 : vector<128x4xf32> to vector<128x4xbf16>
    %c0_18 = arith.constant 0 : index
    %c24 = arith.constant 24 : index
    %53 = vector.load %arg9[%c0_18, %c24] : memref<128x128xbf16, #tpu.memory_space<vmem>>, vector<128x4xbf16>
    tpu.vector_store %arg9[%c0_18, %c24], %52 {strides = array<i32>} : memref<128x128xbf16, #tpu.memory_space<vmem>>, vector<128x4xbf16>,
    %54 = vector.extract_strided_slice %25 {offsets = [2, 1, 0], sizes = [8, 16, 4], strides = [1, 1, 1]} : vector<10x18x4xf32> to vector<8x16x4xf32>
    %55 = vector.shape_cast %54 : vector<8x16x4xf32> to vector<128x4xf32>
    %56 = arith.truncf %55 : vector<128x4xf32> to vector<128x4xbf16>
    %c0_19 = arith.constant 0 : index
    %c28 = arith.constant 28 : index
    %57 = vector.load %arg9[%c0_19, %c28] : memref<128x128xbf16, #tpu.memory_space<vmem>>, vector<128x4xbf16>
    tpu.vector_store %arg9[%c0_19, %c28], %56 {strides = array<i32>} : memref<128x128xbf16, #tpu.memory_space<vmem>>, vector<128x4xbf16>,
    %58 = vector.extract_strided_slice %25 {offsets = [2, 2, 0], sizes = [8, 16, 4], strides = [1, 1, 1]} : vector<10x18x4xf32> to vector<8x16x4xf32>
    %59 = vector.shape_cast %58 : vector<8x16x4xf32> to vector<128x4xf32>
    %60 = arith.truncf %59 : vector<128x4xf32> to vector<128x4xbf16>
    %c0_20 = arith.constant 0 : index
    %c32 = arith.constant 32 : index
    %61 = vector.load %arg9[%c0_20, %c32] : memref<128x128xbf16, #tpu.memory_space<vmem>>, vector<128x4xbf16>
    tpu.vector_store %arg9[%c0_20, %c32], %60 {strides = array<i32>} : memref<128x128xbf16, #tpu.memory_space<vmem>>, vector<128x4xbf16>,
    %cst = arith.constant 0.000000e+00 : bf16
    %62 = vector.broadcast %cst : bf16 to vector<128x92xbf16>
    %c0_21 = arith.constant 0 : index
    %c36 = arith.constant 36 : index
    %63 = vector.load %arg9[%c0_21, %c36] : memref<128x128xbf16, #tpu.memory_space<vmem>>, vector<128x92xbf16>
    tpu.vector_store %arg9[%c0_21, %c36], %62 {strides = array<i32>} : memref<128x128xbf16, #tpu.memory_space<vmem>>, vector<128x92xbf16>,
    %c0_22 = arith.constant 0 : index
    %c0_23 = arith.constant 0 : index
    %64 = vector.load %arg9[%c0_22, %c0_23] : memref<128x128xbf16, #tpu.memory_space<vmem>>, vector<128x128xbf16>
    %c0_24 = arith.constant 0 : index
    %c0_25 = arith.constant 0 : index
    %65 = vector.load %arg5[%c0_24, %c0_25] : memref<128x128xbf16, #tpu.memory_space<vmem>>, vector<128x128xbf16>
    %cst_26 = arith.constant dense<0.000000e+00> : vector<128x128xf32>
    %66 = tpu.matmul %64, %65, %cst_26 {dimension_numbers = #tpu.dot_dimension_numbers<[1], [0], [0], [1], [0, 0, 1, 1], [], []>} : vector<128x128xbf16>, vector<128x128xbf16>, vector<128x128xf32> -> vector<128x128xf32>
    %c0_i32_27 = arith.constant 0 : i32
    %67 = arith.cmpi eq, %arg1, %c0_i32_27 : i32
    %68 = arith.extui %67 : i1 to i32
    %c0_i32_28 = arith.constant 0 : i32
    %69 = arith.cmpi ne, %68, %c0_i32_28 : i32
    scf.if %69 {
      %cst_54 = arith.constant 0.000000e+00 : f32
      %96 = vector.broadcast %cst_54 : f32 to vector<1x1x128xf32>
      %c0_55 = arith.constant 0 : index
      %c0_56 = arith.constant 0 : index
      %c0_57 = arith.constant 0 : index
      %97 = vector.load %arg7[%c0_55, %c0_56, %c0_57] : memref<1x1x128xf32, #tpu.memory_space<vmem>>, vector<1x1x128xf32>
      tpu.vector_store %arg7[%c0_55, %c0_56, %c0_57], %96 {strides = array<i32>} : memref<1x1x128xf32, #tpu.memory_space<vmem>>, vector<1x1x128xf32>,
      %cst_58 = arith.constant 0.000000e+00 : f32
      %98 = vector.broadcast %cst_58 : f32 to vector<1x1x128xf32>
      %c0_59 = arith.constant 0 : index
      %c0_60 = arith.constant 0 : index
      %c0_61 = arith.constant 0 : index
      %99 = vector.load %arg8[%c0_59, %c0_60, %c0_61] : memref<1x1x128xf32, #tpu.memory_space<vmem>>, vector<1x1x128xf32>
      tpu.vector_store %arg8[%c0_59, %c0_60, %c0_61], %98 {strides = array<i32>} : memref<1x1x128xf32, #tpu.memory_space<vmem>>, vector<1x1x128xf32>,
    } else {
    }
    %c0_29 = arith.constant 0 : index
    %c0_30 = arith.constant 0 : index
    %c0_31 = arith.constant 0 : index
    %70 = vector.load %arg7[%c0_29, %c0_30, %c0_31] : memref<1x1x128xf32, #tpu.memory_space<vmem>>, vector<1x1x128xf32>
    %71 = vector.shape_cast %70 : vector<1x1x128xf32> to vector<128xf32>
    %cst_32 = arith.constant dense<0.000000e+00> : vector<128xf32>
    %72 = vector.multi_reduction <add>, %66, %cst_32 [0] : vector<128x128xf32> to vector<128xf32>
    %73 = arith.addf %71, %72 : vector<128xf32>
    %c0_33 = arith.constant 0 : index
    %c0_34 = arith.constant 0 : index
    %c0_35 = arith.constant 0 : index
    %74 = vector.load %arg7[%c0_33, %c0_34, %c0_35] : memref<1x1x128xf32, #tpu.memory_space<vmem>>, vector<1x1x128xf32>
    %75 = vector.shape_cast %74 : vector<1x1x128xf32> to vector<128xf32>
    %76 = vector.shape_cast %73 : vector<128xf32> to vector<1x1x128xf32>
    tpu.vector_store %arg7[%c0_33, %c0_34, %c0_35], %76 {strides = array<i32>} : memref<1x1x128xf32, #tpu.memory_space<vmem>>, vector<1x1x128xf32>,
    %c0_36 = arith.constant 0 : index
    %c0_37 = arith.constant 0 : index
    %c0_38 = arith.constant 0 : index
    %77 = vector.load %arg8[%c0_36, %c0_37, %c0_38] : memref<1x1x128xf32, #tpu.memory_space<vmem>>, vector<1x1x128xf32>
    %78 = vector.shape_cast %77 : vector<1x1x128xf32> to vector<128xf32>
    %79 = arith.mulf %66, %66 : vector<128x128xf32>
    %cst_39 = arith.constant dense<0.000000e+00> : vector<128xf32>
    %80 = vector.multi_reduction <add>, %79, %cst_39 [0] : vector<128x128xf32> to vector<128xf32>
    %81 = arith.addf %78, %80 : vector<128xf32>
    %c0_40 = arith.constant 0 : index
    %c0_41 = arith.constant 0 : index
    %c0_42 = arith.constant 0 : index
    %82 = vector.load %arg8[%c0_40, %c0_41, %c0_42] : memref<1x1x128xf32, #tpu.memory_space<vmem>>, vector<1x1x128xf32>
    %83 = vector.shape_cast %82 : vector<1x1x128xf32> to vector<128xf32>
    %84 = vector.shape_cast %81 : vector<128xf32> to vector<1x1x128xf32>
    tpu.vector_store %arg8[%c0_40, %c0_41, %c0_42], %84 {strides = array<i32>} : memref<1x1x128xf32, #tpu.memory_space<vmem>>, vector<1x1x128xf32>,
    %85 = vector.shape_cast %66 : vector<128x128xf32> to vector<8x16x128xf32>
    %c0_43 = arith.constant 0 : index
    %c0_44 = arith.constant 0 : index
    %c1 = arith.constant 1 : index
    %c0_45 = arith.constant 0 : index
    %86 = vector.load %arg6[%c0_43, %c0_44, %c1, %c0_45] : memref<1x8x18x128xf32, #tpu.memory_space<vmem>>, vector<1x8x16x128xf32>
    %87 = vector.shape_cast %86 : vector<1x8x16x128xf32> to vector<8x16x128xf32>
    %88 = vector.shape_cast %85 : vector<8x16x128xf32> to vector<1x8x16x128xf32>
    tpu.vector_store %arg6[%c0_43, %c0_44, %c1, %c0_45], %88 {strides = array<i32>} : memref<1x8x18x128xf32, #tpu.memory_space<vmem>>, vector<1x8x16x128xf32>,
    %cst_46 = arith.constant 0.000000e+00 : f32
    %89 = vector.broadcast %cst_46 : f32 to vector<8x1x128xf32>
    %c0_47 = arith.constant 0 : index
    %c0_48 = arith.constant 0 : index
    %c0_49 = arith.constant 0 : index
    %c0_50 = arith.constant 0 : index
    %90 = vector.load %arg6[%c0_47, %c0_48, %c0_49, %c0_50] : memref<1x8x18x128xf32, #tpu.memory_space<vmem>>, vector<1x8x1x128xf32>
    %91 = vector.shape_cast %90 : vector<1x8x1x128xf32> to vector<8x1x128xf32>
    %92 = vector.shape_cast %89 : vector<8x1x128xf32> to vector<1x8x1x128xf32>
    tpu.vector_store %arg6[%c0_47, %c0_48, %c0_49, %c0_50], %92 {strides = array<i32>} : memref<1x8x18x128xf32, #tpu.memory_space<vmem>>, vector<1x8x1x128xf32>,
    %c0_51 = arith.constant 0 : index
    %c0_52 = arith.constant 0 : index
    %c17 = arith.constant 17 : index
    %c0_53 = arith.constant 0 : index
    %93 = vector.load %arg6[%c0_51, %c0_52, %c17, %c0_53] : memref<1x8x18x128xf32, #tpu.memory_space<vmem>>, vector<1x8x1x128xf32>
    %94 = vector.shape_cast %93 : vector<1x8x1x128xf32> to vector<8x1x128xf32>
    %95 = vector.shape_cast %89 : vector<8x1x128xf32> to vector<1x8x1x128xf32>
    tpu.vector_store %arg6[%c0_51, %c0_52, %c17, %c0_53], %95 {strides = array<i32>} : memref<1x8x18x128xf32, #tpu.memory_space<vmem>>, vector<1x8x1x128xf32>,
    return
  }
  func.func @transform_0(%arg0: i32, %arg1: i32) -> (i32, i32, i32, i32) {
    %c0_i32 = arith.constant 0 : i32
    %c0_i32_0 = arith.constant 0 : i32
    %c0_i32_1 = arith.constant 0 : i32
    %c0_i32_2 = arith.constant 0 : i32
    return %arg0, %c0_i32, %c0_i32_0, %c0_i32_1 : i32, i32, i32, i32
  }
  func.func @transform_1(%arg0: i32, %arg1: i32) -> (i32, i32) {
    %c0_i32 = arith.constant 0 : i32
    %c0_i32_0 = arith.constant 0 : i32
    %c0_i32_1 = arith.constant 0 : i32
    return %c0_i32, %c0_i32_0 : i32, i32
  }
  func.func @transform_2(%arg0: i32, %arg1: i32) -> (i32, i32) {
    %c0_i32 = arith.constant 0 : i32
    %c0_i32_0 = arith.constant 0 : i32
    %c0_i32_1 = arith.constant 0 : i32
    return %c0_i32, %c0_i32_0 : i32, i32
  }
  func.func @transform_3(%arg0: i32, %arg1: i32) -> (i32, i32) {
    %c0_i32 = arith.constant 0 : i32
    %c0_i32_0 = arith.constant 0 : i32
    %c0_i32_1 = arith.constant 0 : i32
    return %c0_i32, %c0_i32_0 : i32, i32
  }
  func.func @transform_4(%arg0: i32, %arg1: i32) -> (i32, i32, i32, i32) {
    %c0_i32 = arith.constant 0 : i32
    %c0_i32_0 = arith.constant 0 : i32
    %c0_i32_1 = arith.constant 0 : i32
    return %arg0, %arg1, %c0_i32, %c0_i32_0 : i32, i32, i32, i32
  }
  func.func @transform_5(%arg0: i32, %arg1: i32) -> (i32, i32, i32) {
    %c0_i32 = arith.constant 0 : i32
    %c0_i32_0 = arith.constant 0 : i32
    %c0_i32_1 = arith.constant 0 : i32
    return %arg0, %c0_i32, %c0_i32_0 : i32, i32, i32
  }
  func.func @transform_6(%arg0: i32, %arg1: i32) -> (i32, i32, i32) {
    %c0_i32 = arith.constant 0 : i32
    %c0_i32_0 = arith.constant 0 : i32
    %c0_i32_1 = arith.constant 0 : i32
    return %arg0, %c0_i32, %c0_i32_0 : i32, i32, i32
  }
}

module attributes {stable_mosaic.version = 11 : i64} {
  func.func @_bn_relu_kernel(%arg0: i32, %arg1: i32, %arg2: memref<1x8x18x128xf32, #tpu.memory_space<vmem>>, %arg3: memref<1x128xf32, #tpu.memory_space<vmem>>, %arg4: memref<1x128xf32, #tpu.memory_space<vmem>>, %arg5: memref<1x8x16x8xf32, #tpu.memory_space<vmem>>) attributes {dimension_semantics = [#tpu.dimension_semantics<parallel>, #tpu.dimension_semantics<parallel>], iteration_bounds = array<i64: 2, 2>, scalar_prefetch = 0 : i64, scratch_operands = 0 : i64, tpu.core_type = #tpu.core_type<tc>, window_params = [{transform_indices = @transform_0, window_bounds = array<i64: 1, 8, 18, 128>}, {pipeline_mode = #tpu.pipeline_mode<synchronous>, transform_indices = @transform_1, window_bounds = array<i64: 1, 128>}, {pipeline_mode = #tpu.pipeline_mode<synchronous>, transform_indices = @transform_2, window_bounds = array<i64: 1, 128>}, {transform_indices = @transform_3, window_bounds = array<i64: 1, 8, 16, 8>}]} {
    %c0 = arith.constant 0 : index
    %c0_0 = arith.constant 0 : index
    %c1 = arith.constant 1 : index
    %c0_1 = arith.constant 0 : index
    %0 = vector.load %arg2[%c0, %c0_0, %c1, %c0_1] : memref<1x8x18x128xf32, #tpu.memory_space<vmem>>, vector<1x8x16x128xf32>
    %1 = vector.shape_cast %0 : vector<1x8x16x128xf32> to vector<8x16x128xf32>
    %c0_2 = arith.constant 0 : index
    %c0_3 = arith.constant 0 : index
    %2 = vector.load %arg3[%c0_2, %c0_3] : memref<1x128xf32, #tpu.memory_space<vmem>>, vector<1x128xf32>
    %3 = vector.shape_cast %2 : vector<1x128xf32> to vector<128xf32>
    %4 = vector.shape_cast %3 : vector<128xf32> to vector<1x1x128xf32>
    %5 = vector.broadcast %4 : vector<1x1x128xf32> to vector<8x16x128xf32>
    %6 = arith.mulf %1, %5 : vector<8x16x128xf32>
    %c0_4 = arith.constant 0 : index
    %c0_5 = arith.constant 0 : index
    %7 = vector.load %arg4[%c0_4, %c0_5] : memref<1x128xf32, #tpu.memory_space<vmem>>, vector<1x128xf32>
    %8 = vector.shape_cast %7 : vector<1x128xf32> to vector<128xf32>
    %9 = vector.shape_cast %8 : vector<128xf32> to vector<1x1x128xf32>
    %10 = vector.broadcast %9 : vector<1x1x128xf32> to vector<8x16x128xf32>
    %11 = arith.addf %6, %10 : vector<8x16x128xf32>
    %cst = arith.constant 0.000000e+00 : f32
    %12 = vector.broadcast %cst : f32 to vector<8x16x128xf32>
    %13 = arith.maximumf %11, %12 : vector<8x16x128xf32>
    %14 = vector.extract_strided_slice %13 {offsets = [0, 0, 0], sizes = [8, 16, 8], strides = [1, 1, 1]} : vector<8x16x128xf32> to vector<8x16x8xf32>
    %c0_6 = arith.constant 0 : index
    %c0_7 = arith.constant 0 : index
    %c0_8 = arith.constant 0 : index
    %c0_9 = arith.constant 0 : index
    %15 = vector.load %arg5[%c0_6, %c0_7, %c0_8, %c0_9] : memref<1x8x16x8xf32, #tpu.memory_space<vmem>>, vector<1x8x16x8xf32>
    %16 = vector.shape_cast %15 : vector<1x8x16x8xf32> to vector<8x16x8xf32>
    %17 = vector.shape_cast %14 : vector<8x16x8xf32> to vector<1x8x16x8xf32>
    tpu.vector_store %arg5[%c0_6, %c0_7, %c0_8, %c0_9], %17 {strides = array<i32>} : memref<1x8x16x8xf32, #tpu.memory_space<vmem>>, vector<1x8x16x8xf32>,
    return
  }
  func.func @transform_0(%arg0: i32, %arg1: i32) -> (i32, i32, i32, i32) {
    %c0_i32 = arith.constant 0 : i32
    %c0_i32_0 = arith.constant 0 : i32
    %c0_i32_1 = arith.constant 0 : i32
    return %arg0, %arg1, %c0_i32, %c0_i32_0 : i32, i32, i32, i32
  }
  func.func @transform_1(%arg0: i32, %arg1: i32) -> (i32, i32) {
    %c0_i32 = arith.constant 0 : i32
    %c0_i32_0 = arith.constant 0 : i32
    %c0_i32_1 = arith.constant 0 : i32
    return %c0_i32, %c0_i32_0 : i32, i32
  }
  func.func @transform_2(%arg0: i32, %arg1: i32) -> (i32, i32) {
    %c0_i32 = arith.constant 0 : i32
    %c0_i32_0 = arith.constant 0 : i32
    %c0_i32_1 = arith.constant 0 : i32
    return %c0_i32, %c0_i32_0 : i32, i32
  }
  func.func @transform_3(%arg0: i32, %arg1: i32) -> (i32, i32, i32, i32) {
    %c0_i32 = arith.constant 0 : i32
    %c0_i32_0 = arith.constant 0 : i32
    %c0_i32_1 = arith.constant 0 : i32
    return %arg0, %arg1, %c0_i32, %c0_i32_0 : i32, i32, i32, i32
  }
}

module attributes {stable_mosaic.version = 11 : i64} {
  func.func @_conv3x3_kernel(%arg0: i32, %arg1: i32, %arg2: memref<1x16x18x128xf32, #tpu.memory_space<vmem>>, %arg3: memref<1x128xf32, #tpu.memory_space<vmem>>, %arg4: memref<1x128xf32, #tpu.memory_space<vmem>>, %arg5: memref<1152x128xbf16, #tpu.memory_space<vmem>>, %arg6: memref<1x8x18x128xf32, #tpu.memory_space<vmem>>, %arg7: memref<1x1x128xf32, #tpu.memory_space<vmem>>, %arg8: memref<1x1x128xf32, #tpu.memory_space<vmem>>, %arg9: memref<128x1152xbf16, #tpu.memory_space<vmem>>) attributes {dimension_semantics = [#tpu.dimension_semantics<parallel>, #tpu.dimension_semantics<arbitrary>], iteration_bounds = array<i64: 2, 2>, scalar_prefetch = 0 : i64, scratch_operands = 1 : i64, tpu.core_type = #tpu.core_type<tc>, window_params = [{transform_indices = @transform_0, window_bounds = array<i64: 1, 16, 18, 128>}, {pipeline_mode = #tpu.pipeline_mode<synchronous>, transform_indices = @transform_1, window_bounds = array<i64: 1, 128>}, {pipeline_mode = #tpu.pipeline_mode<synchronous>, transform_indices = @transform_2, window_bounds = array<i64: 1, 128>}, {pipeline_mode = #tpu.pipeline_mode<synchronous>, transform_indices = @transform_3, window_bounds = array<i64: 1152, 128>}, {transform_indices = @transform_4, window_bounds = array<i64: 1, 8, 18, 128>}, {transform_indices = @transform_5, window_bounds = array<i64: 1, 1, 128>}, {transform_indices = @transform_6, window_bounds = array<i64: 1, 1, 128>}]} {
    %c8_i32 = arith.constant 8 : i32
    %0 = arith.muli %arg1, %c8_i32 : i32
    %1 = tpu.assume_multiple %0, 8 : i32
    %c0 = arith.constant 0 : index
    %2 = arith.index_cast %1 : i32 to index
    %c0_0 = arith.constant 0 : index
    %c0_1 = arith.constant 0 : index
    %3 = vector.load %arg2[%c0, %2, %c0_0, %c0_1] : memref<1x16x18x128xf32, #tpu.memory_space<vmem>>, vector<1x8x18x128xf32>
    %4 = vector.shape_cast %3 : vector<1x8x18x128xf32> to vector<8x18x128xf32>
    %c0_2 = arith.constant 0 : index
    %c0_3 = arith.constant 0 : index
    %5 = vector.load %arg3[%c0_2, %c0_3] : memref<1x128xf32, #tpu.memory_space<vmem>>, vector<1x128xf32>
    %6 = vector.shape_cast %5 : vector<1x128xf32> to vector<128xf32>
    %7 = vector.shape_cast %6 : vector<128xf32> to vector<1x1x128xf32>
    %8 = vector.broadcast %7 : vector<1x1x128xf32> to vector<8x18x128xf32>
    %9 = arith.mulf %4, %8 : vector<8x18x128xf32>
    %c0_4 = arith.constant 0 : index
    %c0_5 = arith.constant 0 : index
    %10 = vector.load %arg4[%c0_4, %c0_5] : memref<1x128xf32, #tpu.memory_space<vmem>>, vector<1x128xf32>
    %11 = vector.shape_cast %10 : vector<1x128xf32> to vector<128xf32>
    %12 = vector.shape_cast %11 : vector<128xf32> to vector<1x1x128xf32>
    %13 = vector.broadcast %12 : vector<1x1x128xf32> to vector<8x18x128xf32>
    %14 = arith.addf %9, %13 : vector<8x18x128xf32>
    %cst = arith.constant 0.000000e+00 : f32
    %15 = vector.broadcast %cst : f32 to vector<8x18x128xf32>
    %16 = arith.maximumf %14, %15 : vector<8x18x128xf32>
    %c1_i32 = arith.constant 1 : i32
    %17 = arith.subi %1, %c1_i32 : i32
    %c0_i32 = arith.constant 0 : i32
    %18 = arith.maxsi %17, %c0_i32 : i32
    %c0_6 = arith.constant 0 : index
    %19 = arith.index_cast %18 : i32 to index
    %c0_7 = arith.constant 0 : index
    %c0_8 = arith.constant 0 : index
    %20 = vector.load %arg2[%c0_6, %19, %c0_7, %c0_8] : memref<1x16x18x128xf32, #tpu.memory_space<vmem>>, vector<1x1x18x128xf32>
    %21 = vector.shape_cast %20 : vector<1x1x18x128xf32> to vector<1x18x128xf32>
    %c0_9 = arith.constant 0 : index
    %c0_10 = arith.constant 0 : index
    %22 = vector.load %arg3[%c0_9, %c0_10] : memref<1x128xf32, #tpu.memory_space<vmem>>, vector<1x128xf32>
    %23 = vector.shape_cast %22 : vector<1x128xf32> to vector<128xf32>
    %24 = vector.shape_cast %23 : vector<128xf32> to vector<1x1x128xf32>
    %25 = vector.broadcast %24 : vector<1x1x128xf32> to vector<1x18x128xf32>
    %26 = arith.mulf %21, %25 : vector<1x18x128xf32>
    %c0_11 = arith.constant 0 : index
    %c0_12 = arith.constant 0 : index
    %27 = vector.load %arg4[%c0_11, %c0_12] : memref<1x128xf32, #tpu.memory_space<vmem>>, vector<1x128xf32>
    %28 = vector.shape_cast %27 : vector<1x128xf32> to vector<128xf32>
    %29 = vector.shape_cast %28 : vector<128xf32> to vector<1x1x128xf32>
    %30 = vector.broadcast %29 : vector<1x1x128xf32> to vector<1x18x128xf32>
    %31 = arith.addf %26, %30 : vector<1x18x128xf32>
    %cst_13 = arith.constant 0.000000e+00 : f32
    %32 = vector.broadcast %cst_13 : f32 to vector<1x18x128xf32>
    %33 = arith.maximumf %31, %32 : vector<1x18x128xf32>
    %c0_i32_14 = arith.constant 0 : i32
    %34 = arith.cmpi sgt, %arg1, %c0_i32_14 : i32
    %35 = arith.extui %34 : i1 to i32
    %36 = arith.sitofp %35 : i32 to f32
    %37 = vector.broadcast %36 : f32 to vector<1x18x128xf32>
    %38 = arith.mulf %33, %37 : vector<1x18x128xf32>
    %c8_i32_15 = arith.constant 8 : i32
    %39 = arith.addi %1, %c8_i32_15 : i32
    %c15_i32 = arith.constant 15 : i32
    %40 = arith.minsi %39, %c15_i32 : i32
    %c0_16 = arith.constant 0 : index
    %41 = arith.index_cast %40 : i32 to index
    %c0_17 = arith.constant 0 : index
    %c0_18 = arith.constant 0 : index
    %42 = vector.load %arg2[%c0_16, %41, %c0_17, %c0_18] : memref<1x16x18x128xf32, #tpu.memory_space<vmem>>, vector<1x1x18x128xf32>
    %43 = vector.shape_cast %42 : vector<1x1x18x128xf32> to vector<1x18x128xf32>
    %c0_19 = arith.constant 0 : index
    %c0_20 = arith.constant 0 : index
    %44 = vector.load %arg3[%c0_19, %c0_20] : memref<1x128xf32, #tpu.memory_space<vmem>>, vector<1x128xf32>
    %45 = vector.shape_cast %44 : vector<1x128xf32> to vector<128xf32>
    %46 = vector.shape_cast %45 : vector<128xf32> to vector<1x1x128xf32>
    %47 = vector.broadcast %46 : vector<1x1x128xf32> to vector<1x18x128xf32>
    %48 = arith.mulf %43, %47 : vector<1x18x128xf32>
    %c0_21 = arith.constant 0 : index
    %c0_22 = arith.constant 0 : index
    %49 = vector.load %arg4[%c0_21, %c0_22] : memref<1x128xf32, #tpu.memory_space<vmem>>, vector<1x128xf32>
    %50 = vector.shape_cast %49 : vector<1x128xf32> to vector<128xf32>
    %51 = vector.shape_cast %50 : vector<128xf32> to vector<1x1x128xf32>
    %52 = vector.broadcast %51 : vector<1x1x128xf32> to vector<1x18x128xf32>
    %53 = arith.addf %48, %52 : vector<1x18x128xf32>
    %cst_23 = arith.constant 0.000000e+00 : f32
    %54 = vector.broadcast %cst_23 : f32 to vector<1x18x128xf32>
    %55 = arith.maximumf %53, %54 : vector<1x18x128xf32>
    %c1_i32_24 = arith.constant 1 : i32
    %56 = arith.cmpi slt, %arg1, %c1_i32_24 : i32
    %57 = arith.extui %56 : i1 to i32
    %58 = arith.sitofp %57 : i32 to f32
    %59 = vector.broadcast %58 : f32 to vector<1x18x128xf32>
    %60 = arith.mulf %55, %59 : vector<1x18x128xf32>
    %61 = tpu.concatenate %38, %16, %60 in 0 : vector<1x18x128xf32>, vector<8x18x128xf32>, vector<1x18x128xf32> -> vector<10x18x128xf32>
    %62 = tpu.iota {dimensions = array<i32: 1>} : vector<1x18x128xi32>
    %c1_i32_25 = arith.constant 1 : i32
    %63 = vector.broadcast %c1_i32_25 : i32 to vector<1x18x128xi32>
    %64 = arith.cmpi sge, %62, %63 : vector<1x18x128xi32>
    %c16_i32 = arith.constant 16 : i32
    %65 = vector.broadcast %c16_i32 : i32 to vector<1x18x128xi32>
    %66 = arith.cmpi sle, %62, %65 : vector<1x18x128xi32>
    %67 = arith.andi %64, %66 : vector<1x18x128xi1>
    %68 = arith.extui %67 : vector<1x18x128xi1> to vector<1x18x128xi32>
    %69 = arith.sitofp %68 : vector<1x18x128xi32> to vector<1x18x128xf32>
    %70 = vector.broadcast %69 : vector<1x18x128xf32> to vector<10x18x128xf32>
    %71 = arith.mulf %61, %70 : vector<10x18x128xf32>
    %72 = vector.extract_strided_slice %71 {offsets = [0, 0, 0], sizes = [8, 16, 128], strides = [1, 1, 1]} : vector<10x18x128xf32> to vector<8x16x128xf32>
    %73 = vector.shape_cast %72 : vector<8x16x128xf32> to vector<128x128xf32>
    %74 = arith.truncf %73 : vector<128x128xf32> to vector<128x128xbf16>
    %c0_26 = arith.constant 0 : index
    %c0_27 = arith.constant 0 : index
    %75 = vector.load %arg9[%c0_26, %c0_27] : memref<128x1152xbf16, #tpu.memory_space<vmem>>, vector<128x128xbf16>
    tpu.vector_store %arg9[%c0_26, %c0_27], %74 {strides = array<i32>} : memref<128x1152xbf16, #tpu.memory_space<vmem>>, vector<128x128xbf16>,
    %76 = vector.extract_strided_slice %71 {offsets = [0, 1, 0], sizes = [8, 16, 128], strides = [1, 1, 1]} : vector<10x18x128xf32> to vector<8x16x128xf32>
    %77 = vector.shape_cast %76 : vector<8x16x128xf32> to vector<128x128xf32>
    %78 = arith.truncf %77 : vector<128x128xf32> to vector<128x128xbf16>
    %c0_28 = arith.constant 0 : index
    %c128 = arith.constant 128 : index
    %79 = vector.load %arg9[%c0_28, %c128] : memref<128x1152xbf16, #tpu.memory_space<vmem>>, vector<128x128xbf16>
    tpu.vector_store %arg9[%c0_28, %c128], %78 {strides = array<i32>} : memref<128x1152xbf16, #tpu.memory_space<vmem>>, vector<128x128xbf16>,
    %80 = vector.extract_strided_slice %71 {offsets = [0, 2, 0], sizes = [8, 16, 128], strides = [1, 1, 1]} : vector<10x18x128xf32> to vector<8x16x128xf32>
    %81 = vector.shape_cast %80 : vector<8x16x128xf32> to vector<128x128xf32>
    %82 = arith.truncf %81 : vector<128x128xf32> to vector<128x128xbf16>
    %c0_29 = arith.constant 0 : index
    %c256 = arith.constant 256 : index
    %83 = vector.load %arg9[%c0_29, %c256] : memref<128x1152xbf16, #tpu.memory_space<vmem>>, vector<128x128xbf16>
    tpu.vector_store %arg9[%c0_29, %c256], %82 {strides = array<i32>} : memref<128x1152xbf16, #tpu.memory_space<vmem>>, vector<128x128xbf16>,
    %84 = vector.extract_strided_slice %71 {offsets = [1, 0, 0], sizes = [8, 16, 128], strides = [1, 1, 1]} : vector<10x18x128xf32> to vector<8x16x128xf32>
    %85 = vector.shape_cast %84 : vector<8x16x128xf32> to vector<128x128xf32>
    %86 = arith.truncf %85 : vector<128x128xf32> to vector<128x128xbf16>
    %c0_30 = arith.constant 0 : index
    %c384 = arith.constant 384 : index
    %87 = vector.load %arg9[%c0_30, %c384] : memref<128x1152xbf16, #tpu.memory_space<vmem>>, vector<128x128xbf16>
    tpu.vector_store %arg9[%c0_30, %c384], %86 {strides = array<i32>} : memref<128x1152xbf16, #tpu.memory_space<vmem>>, vector<128x128xbf16>,
    %88 = vector.extract_strided_slice %71 {offsets = [1, 1, 0], sizes = [8, 16, 128], strides = [1, 1, 1]} : vector<10x18x128xf32> to vector<8x16x128xf32>
    %89 = vector.shape_cast %88 : vector<8x16x128xf32> to vector<128x128xf32>
    %90 = arith.truncf %89 : vector<128x128xf32> to vector<128x128xbf16>
    %c0_31 = arith.constant 0 : index
    %c512 = arith.constant 512 : index
    %91 = vector.load %arg9[%c0_31, %c512] : memref<128x1152xbf16, #tpu.memory_space<vmem>>, vector<128x128xbf16>
    tpu.vector_store %arg9[%c0_31, %c512], %90 {strides = array<i32>} : memref<128x1152xbf16, #tpu.memory_space<vmem>>, vector<128x128xbf16>,
    %92 = vector.extract_strided_slice %71 {offsets = [1, 2, 0], sizes = [8, 16, 128], strides = [1, 1, 1]} : vector<10x18x128xf32> to vector<8x16x128xf32>
    %93 = vector.shape_cast %92 : vector<8x16x128xf32> to vector<128x128xf32>
    %94 = arith.truncf %93 : vector<128x128xf32> to vector<128x128xbf16>
    %c0_32 = arith.constant 0 : index
    %c640 = arith.constant 640 : index
    %95 = vector.load %arg9[%c0_32, %c640] : memref<128x1152xbf16, #tpu.memory_space<vmem>>, vector<128x128xbf16>
    tpu.vector_store %arg9[%c0_32, %c640], %94 {strides = array<i32>} : memref<128x1152xbf16, #tpu.memory_space<vmem>>, vector<128x128xbf16>,
    %96 = vector.extract_strided_slice %71 {offsets = [2, 0, 0], sizes = [8, 16, 128], strides = [1, 1, 1]} : vector<10x18x128xf32> to vector<8x16x128xf32>
    %97 = vector.shape_cast %96 : vector<8x16x128xf32> to vector<128x128xf32>
    %98 = arith.truncf %97 : vector<128x128xf32> to vector<128x128xbf16>
    %c0_33 = arith.constant 0 : index
    %c768 = arith.constant 768 : index
    %99 = vector.load %arg9[%c0_33, %c768] : memref<128x1152xbf16, #tpu.memory_space<vmem>>, vector<128x128xbf16>
    tpu.vector_store %arg9[%c0_33, %c768], %98 {strides = array<i32>} : memref<128x1152xbf16, #tpu.memory_space<vmem>>, vector<128x128xbf16>,
    %100 = vector.extract_strided_slice %71 {offsets = [2, 1, 0], sizes = [8, 16, 128], strides = [1, 1, 1]} : vector<10x18x128xf32> to vector<8x16x128xf32>
    %101 = vector.shape_cast %100 : vector<8x16x128xf32> to vector<128x128xf32>
    %102 = arith.truncf %101 : vector<128x128xf32> to vector<128x128xbf16>
    %c0_34 = arith.constant 0 : index
    %c896 = arith.constant 896 : index
    %103 = vector.load %arg9[%c0_34, %c896] : memref<128x1152xbf16, #tpu.memory_space<vmem>>, vector<128x128xbf16>
    tpu.vector_store %arg9[%c0_34, %c896], %102 {strides = array<i32>} : memref<128x1152xbf16, #tpu.memory_space<vmem>>, vector<128x128xbf16>,
    %104 = vector.extract_strided_slice %71 {offsets = [2, 2, 0], sizes = [8, 16, 128], strides = [1, 1, 1]} : vector<10x18x128xf32> to vector<8x16x128xf32>
    %105 = vector.shape_cast %104 : vector<8x16x128xf32> to vector<128x128xf32>
    %106 = arith.truncf %105 : vector<128x128xf32> to vector<128x128xbf16>
    %c0_35 = arith.constant 0 : index
    %c1024 = arith.constant 1024 : index
    %107 = vector.load %arg9[%c0_35, %c1024] : memref<128x1152xbf16, #tpu.memory_space<vmem>>, vector<128x128xbf16>
    tpu.vector_store %arg9[%c0_35, %c1024], %106 {strides = array<i32>} : memref<128x1152xbf16, #tpu.memory_space<vmem>>, vector<128x128xbf16>,
    %c0_36 = arith.constant 0 : index
    %c0_37 = arith.constant 0 : index
    %108 = vector.load %arg9[%c0_36, %c0_37] : memref<128x1152xbf16, #tpu.memory_space<vmem>>, vector<128x1152xbf16>
    %c0_38 = arith.constant 0 : index
    %c0_39 = arith.constant 0 : index
    %109 = vector.load %arg5[%c0_38, %c0_39] : memref<1152x128xbf16, #tpu.memory_space<vmem>>, vector<1152x128xbf16>
    %cst_40 = arith.constant dense<0.000000e+00> : vector<128x128xf32>
    %110 = tpu.matmul %108, %109, %cst_40 {dimension_numbers = #tpu.dot_dimension_numbers<[1], [0], [0], [1], [0, 0, 1, 1], [], []>} : vector<128x1152xbf16>, vector<1152x128xbf16>, vector<128x128xf32> -> vector<128x128xf32>
    %c0_i32_41 = arith.constant 0 : i32
    %111 = arith.cmpi eq, %arg1, %c0_i32_41 : i32
    %112 = arith.extui %111 : i1 to i32
    %c0_i32_42 = arith.constant 0 : i32
    %113 = arith.cmpi ne, %112, %c0_i32_42 : i32
    scf.if %113 {
      %cst_68 = arith.constant 0.000000e+00 : f32
      %140 = vector.broadcast %cst_68 : f32 to vector<1x1x128xf32>
      %c0_69 = arith.constant 0 : index
      %c0_70 = arith.constant 0 : index
      %c0_71 = arith.constant 0 : index
      %141 = vector.load %arg7[%c0_69, %c0_70, %c0_71] : memref<1x1x128xf32, #tpu.memory_space<vmem>>, vector<1x1x128xf32>
      tpu.vector_store %arg7[%c0_69, %c0_70, %c0_71], %140 {strides = array<i32>} : memref<1x1x128xf32, #tpu.memory_space<vmem>>, vector<1x1x128xf32>,
      %cst_72 = arith.constant 0.000000e+00 : f32
      %142 = vector.broadcast %cst_72 : f32 to vector<1x1x128xf32>
      %c0_73 = arith.constant 0 : index
      %c0_74 = arith.constant 0 : index
      %c0_75 = arith.constant 0 : index
      %143 = vector.load %arg8[%c0_73, %c0_74, %c0_75] : memref<1x1x128xf32, #tpu.memory_space<vmem>>, vector<1x1x128xf32>
      tpu.vector_store %arg8[%c0_73, %c0_74, %c0_75], %142 {strides = array<i32>} : memref<1x1x128xf32, #tpu.memory_space<vmem>>, vector<1x1x128xf32>,
    } else {
    }
    %c0_43 = arith.constant 0 : index
    %c0_44 = arith.constant 0 : index
    %c0_45 = arith.constant 0 : index
    %114 = vector.load %arg7[%c0_43, %c0_44, %c0_45] : memref<1x1x128xf32, #tpu.memory_space<vmem>>, vector<1x1x128xf32>
    %115 = vector.shape_cast %114 : vector<1x1x128xf32> to vector<128xf32>
    %cst_46 = arith.constant dense<0.000000e+00> : vector<128xf32>
    %116 = vector.multi_reduction <add>, %110, %cst_46 [0] : vector<128x128xf32> to vector<128xf32>
    %117 = arith.addf %115, %116 : vector<128xf32>
    %c0_47 = arith.constant 0 : index
    %c0_48 = arith.constant 0 : index
    %c0_49 = arith.constant 0 : index
    %118 = vector.load %arg7[%c0_47, %c0_48, %c0_49] : memref<1x1x128xf32, #tpu.memory_space<vmem>>, vector<1x1x128xf32>
    %119 = vector.shape_cast %118 : vector<1x1x128xf32> to vector<128xf32>
    %120 = vector.shape_cast %117 : vector<128xf32> to vector<1x1x128xf32>
    tpu.vector_store %arg7[%c0_47, %c0_48, %c0_49], %120 {strides = array<i32>} : memref<1x1x128xf32, #tpu.memory_space<vmem>>, vector<1x1x128xf32>,
    %c0_50 = arith.constant 0 : index
    %c0_51 = arith.constant 0 : index
    %c0_52 = arith.constant 0 : index
    %121 = vector.load %arg8[%c0_50, %c0_51, %c0_52] : memref<1x1x128xf32, #tpu.memory_space<vmem>>, vector<1x1x128xf32>
    %122 = vector.shape_cast %121 : vector<1x1x128xf32> to vector<128xf32>
    %123 = arith.mulf %110, %110 : vector<128x128xf32>
    %cst_53 = arith.constant dense<0.000000e+00> : vector<128xf32>
    %124 = vector.multi_reduction <add>, %123, %cst_53 [0] : vector<128x128xf32> to vector<128xf32>
    %125 = arith.addf %122, %124 : vector<128xf32>
    %c0_54 = arith.constant 0 : index
    %c0_55 = arith.constant 0 : index
    %c0_56 = arith.constant 0 : index
    %126 = vector.load %arg8[%c0_54, %c0_55, %c0_56] : memref<1x1x128xf32, #tpu.memory_space<vmem>>, vector<1x1x128xf32>
    %127 = vector.shape_cast %126 : vector<1x1x128xf32> to vector<128xf32>
    %128 = vector.shape_cast %125 : vector<128xf32> to vector<1x1x128xf32>
    tpu.vector_store %arg8[%c0_54, %c0_55, %c0_56], %128 {strides = array<i32>} : memref<1x1x128xf32, #tpu.memory_space<vmem>>, vector<1x1x128xf32>,
    %129 = vector.shape_cast %110 : vector<128x128xf32> to vector<8x16x128xf32>
    %c0_57 = arith.constant 0 : index
    %c0_58 = arith.constant 0 : index
    %c1 = arith.constant 1 : index
    %c0_59 = arith.constant 0 : index
    %130 = vector.load %arg6[%c0_57, %c0_58, %c1, %c0_59] : memref<1x8x18x128xf32, #tpu.memory_space<vmem>>, vector<1x8x16x128xf32>
    %131 = vector.shape_cast %130 : vector<1x8x16x128xf32> to vector<8x16x128xf32>
    %132 = vector.shape_cast %129 : vector<8x16x128xf32> to vector<1x8x16x128xf32>
    tpu.vector_store %arg6[%c0_57, %c0_58, %c1, %c0_59], %132 {strides = array<i32>} : memref<1x8x18x128xf32, #tpu.memory_space<vmem>>, vector<1x8x16x128xf32>,
    %cst_60 = arith.constant 0.000000e+00 : f32
    %133 = vector.broadcast %cst_60 : f32 to vector<8x1x128xf32>
    %c0_61 = arith.constant 0 : index
    %c0_62 = arith.constant 0 : index
    %c0_63 = arith.constant 0 : index
    %c0_64 = arith.constant 0 : index
    %134 = vector.load %arg6[%c0_61, %c0_62, %c0_63, %c0_64] : memref<1x8x18x128xf32, #tpu.memory_space<vmem>>, vector<1x8x1x128xf32>
    %135 = vector.shape_cast %134 : vector<1x8x1x128xf32> to vector<8x1x128xf32>
    %136 = vector.shape_cast %133 : vector<8x1x128xf32> to vector<1x8x1x128xf32>
    tpu.vector_store %arg6[%c0_61, %c0_62, %c0_63, %c0_64], %136 {strides = array<i32>} : memref<1x8x18x128xf32, #tpu.memory_space<vmem>>, vector<1x8x1x128xf32>,
    %c0_65 = arith.constant 0 : index
    %c0_66 = arith.constant 0 : index
    %c17 = arith.constant 17 : index
    %c0_67 = arith.constant 0 : index
    %137 = vector.load %arg6[%c0_65, %c0_66, %c17, %c0_67] : memref<1x8x18x128xf32, #tpu.memory_space<vmem>>, vector<1x8x1x128xf32>
    %138 = vector.shape_cast %137 : vector<1x8x1x128xf32> to vector<8x1x128xf32>
    %139 = vector.shape_cast %133 : vector<8x1x128xf32> to vector<1x8x1x128xf32>
    tpu.vector_store %arg6[%c0_65, %c0_66, %c17, %c0_67], %139 {strides = array<i32>} : memref<1x8x18x128xf32, #tpu.memory_space<vmem>>, vector<1x8x1x128xf32>,
    return
  }
  func.func @transform_0(%arg0: i32, %arg1: i32) -> (i32, i32, i32, i32) {
    %c0_i32 = arith.constant 0 : i32
    %c0_i32_0 = arith.constant 0 : i32
    %c0_i32_1 = arith.constant 0 : i32
    %c0_i32_2 = arith.constant 0 : i32
    return %arg0, %c0_i32, %c0_i32_0, %c0_i32_1 : i32, i32, i32, i32
  }
  func.func @transform_1(%arg0: i32, %arg1: i32) -> (i32, i32) {
    %c0_i32 = arith.constant 0 : i32
    %c0_i32_0 = arith.constant 0 : i32
    %c0_i32_1 = arith.constant 0 : i32
    return %c0_i32, %c0_i32_0 : i32, i32
  }
  func.func @transform_2(%arg0: i32, %arg1: i32) -> (i32, i32) {
    %c0_i32 = arith.constant 0 : i32
    %c0_i32_0 = arith.constant 0 : i32
    %c0_i32_1 = arith.constant 0 : i32
    return %c0_i32, %c0_i32_0 : i32, i32
  }
  func.func @transform_3(%arg0: i32, %arg1: i32) -> (i32, i32) {
    %c0_i32 = arith.constant 0 : i32
    %c0_i32_0 = arith.constant 0 : i32
    %c0_i32_1 = arith.constant 0 : i32
    return %c0_i32, %c0_i32_0 : i32, i32
  }
  func.func @transform_4(%arg0: i32, %arg1: i32) -> (i32, i32, i32, i32) {
    %c0_i32 = arith.constant 0 : i32
    %c0_i32_0 = arith.constant 0 : i32
    %c0_i32_1 = arith.constant 0 : i32
    return %arg0, %arg1, %c0_i32, %c0_i32_0 : i32, i32, i32, i32
  }
  func.func @transform_5(%arg0: i32, %arg1: i32) -> (i32, i32, i32) {
    %c0_i32 = arith.constant 0 : i32
    %c0_i32_0 = arith.constant 0 : i32
    %c0_i32_1 = arith.constant 0 : i32
    return %arg0, %c0_i32, %c0_i32_0 : i32, i32, i32
  }
  func.func @transform_6(%arg0: i32, %arg1: i32) -> (i32, i32, i32) {
    %c0_i32 = arith.constant 0 : i32
    %c0_i32_0 = arith.constant 0 : i32
    %c0_i32_1 = arith.constant 0 : i32
    return %arg0, %c0_i32, %c0_i32_0 : i32, i32, i32
  }
}

</mosaic_0001>

<llo_original>
// kernel: unet_conv_block.5
$region0: #{unet_conv_block.5}
  #allocation0 [shape = 'u32[]', space=smem, size = 0x4, offset = 0x4, fixed_abs, tag = 'smem constant byte address 0x4 - core index']
  #allocation1 [shape = 'u32[144,128]{1,0:T(1,128)}', space=vmem, size = 0x12000, scoped, tag = 'internal scratch']
  %s0 = inlined_call_operand.vmem [shape: f32[2,16,18,128], index: 0, kind: input, shape index: {}]
  %s1 = inlined_call_operand.vmem [shape: f32[1,128], index: 1, kind: input, shape index: {}]
  %s2 = inlined_call_operand.vmem [shape: f32[1,128], index: 2, kind: input, shape index: {}]
  %s3 = inlined_call_operand.vmem [shape: f32[2,16,16,8], index: 3, kind: output, shape index: {}]
  %s4 = sld [smem:[#allocation0]]
  $region45: #{unet_conv_block.5} parent=0
    _
  %s6 = ssub.s32 1, %s4
  %s7 = scalar_select 0, %s6, %s4
  loop: start=0, step=1, limit=6
  $region2: #{unet_conv_block.5} parent=0 // loop_pre_header
    _
  $region3: #{unet_conv_block.5} parent=0 // loop_header
    %s9 = sphi 0, %s13
    %p10 = scmp.ge.s32.totalorder %s9, 6
    %s16 = sphi 0, %s28
    %s17 = sphi 0, %s24
    %s18 = sphi 0, %s16
    %s19 = sphi 0, %s17
    %s20 = sphi 0, %s18
    %s21 = sphi 0, %s19
    %s33 = sphi 0, %s35
    %s36 = sphi 0, %s33
    %s37 = sphi 0, %s36
    %s53 = sphi 0, %s37
    %s57 = sphi 0, %s57
    %s59 = sphi 0, %s57
    %s60 = sphi 0, %s59
    %s74 = sphi 0, %s60
    %s78 = sphi 0, %s78
    %s80 = sphi 0, %s78
    %s81 = sphi 0, %s80
    %s95 = sphi 0, %s81
    %s103 = sphi 0, %s105
    %s106 = sphi 0, %s103
    %s107 = sphi 0, %s106
    %s123 = sphi 0, %s107
  $region4: #{unet_conv_block.5} parent=0 // loop_header_branch
    %12 = sbr.rel (%p10) target = $region8
  $region5: #{unet_conv_block.5} parent=0 // loop_body
    %s14 = ssub.s32 %s9, 1
    %s15 = ssub.s32 %s9, 2
    %s22 = sadd.s32 1, %s17
    %p23 = scmp.ge.s32.totalorder %s22, 2
    %s24 = scalar_select %p23, 0, %s22
    %s25 = sadd.s32 1, %s16
    %s26 = scalar_select %p23, %s25, %s16
    %p27 = scmp.ge.s32.totalorder %s26, 2
    %s28 = scalar_select %p27, 0, %s26
    %s29 = ssub.s32 %s16, %s28
    %s30 = ssub.s32 %s17, %s24
    %s31 = sor.u32 %s29, %s30
    %p32 = scmp.eq.s32.totalorder %s31, 0
    %s34 = sadd.s32 %s33, 1
    %s35 = scalar_select %p32, %s33, %s34
    %p38 = pneg %p32
    %p39 = scmp.eq.s32.totalorder %s9, 3
    %p40 = por %p38, %p39
    %p41 = scmp.ne.s32.totalorder %s33, %s36
    %p42 = scmp.eq.s32.totalorder %s9, 0
    %p43 = por %p41, %p42
    %p44 = scmp.ne.s32.totalorder %s33, %s36
    %p45 = scmp.eq.s32.totalorder %s14, 3
    %p46 = por %p44, %p45
    %p47 = scmp.ne.s32.totalorder %s36, %s37
    %p48 = scmp.eq.s32.totalorder %s14, 0
    %p49 = por %p47, %p48
    %p50 = scmp.ne.s32.totalorder %s36, %s37
    %p51 = scmp.eq.s32.totalorder %s15, 3
    %p52 = por %p50, %p51
    %p54 = scmp.ne.s32.totalorder %s37, %s53
    %p55 = scmp.eq.s32.totalorder %s15, 0
    %p56 = por %p54, %p55
    %s58 = sadd.s32 %s57, 1
    %p61 = scmp.eq.s32.totalorder %s9, 3
    %p62 = scmp.ne.s32.totalorder %s57, %s59
    %p63 = scmp.eq.s32.totalorder %s9, 0
    %p64 = por %p62, %p63
    %p65 = scmp.ne.s32.totalorder %s57, %s59
    %p66 = scmp.eq.s32.totalorder %s14, 3
    %p67 = por %p65, %p66
    %p68 = scmp.ne.s32.totalorder %s59, %s60
    %p69 = scmp.eq.s32.totalorder %s14, 0
    %p70 = por %p68, %p69
    %p71 = scmp.ne.s32.totalorder %s59, %s60
    %p72 = scmp.eq.s32.totalorder %s15, 3
    %p73 = por %p71, %p72
    %p75 = scmp.ne.s32.totalorder %s60, %s74
    %p76 = scmp.eq.s32.totalorder %s15, 0
    %p77 = por %p75, %p76
    %s79 = sadd.s32 %s78, 1
    %p82 = scmp.eq.s32.totalorder %s9, 3
    %p83 = scmp.ne.s32.totalorder %s78, %s80
    %p84 = scmp.eq.s32.totalorder %s9, 0
    %p85 = por %p83, %p84
    %p86 = scmp.ne.s32.totalorder %s78, %s80
    %p87 = scmp.eq.s32.totalorder %s14, 3
    %p88 = por %p86, %p87
    %p89 = scmp.ne.s32.totalorder %s80, %s81
    %p90 = scmp.eq.s32.totalorder %s14, 0
    %p91 = por %p89, %p90
    %p92 = scmp.ne.s32.totalorder %s80, %s81
    %p93 = scmp.eq.s32.totalorder %s15, 3
    %p94 = por %p92, %p93
    %p96 = scmp.ne.s32.totalorder %s81, %s95
    %p97 = scmp.eq.s32.totalorder %s15, 0
    %p98 = por %p96, %p97
    %s99 = ssub.s32 %s16, %s28
    %s100 = ssub.s32 %s17, %s24
    %s101 = sor.u32 %s99, %s100
    %p102 = scmp.eq.s32.totalorder %s101, 0
    %s104 = sadd.s32 %s103, 1
    %s105 = scalar_select %p102, %s103, %s104
    %p108 = pneg %p102
    %p109 = scmp.eq.s32.totalorder %s9, 3
    %p110 = por %p108, %p109
    %p111 = scmp.ne.s32.totalorder %s103, %s106
    %p112 = scmp.eq.s32.totalorder %s9, 0
    %p113 = por %p111, %p112
    %p114 = scmp.ne.s32.totalorder %s103, %s106
    %p115 = scmp.eq.s32.totalorder %s14, 3
    %p116 = por %p114, %p115
    %p117 = scmp.ne.s32.totalorder %s106, %s107
    %p118 = scmp.eq.s32.totalorder %s14, 0
    %p119 = por %p117, %p118
    %p120 = scmp.ne.s32.totalorder %s106, %s107
    %p121 = scmp.eq.s32.totalorder %s15, 3
    %p122 = por %p120, %p121
    %p124 = scmp.ne.s32.totalorder %s107, %s123
    %p125 = scmp.eq.s32.totalorder %s15, 0
    %p126 = por %p124, %p125
    %p127 = scmp.le.s32.totalorder 1, %s9
    %p128 = scmp.lt.s32.totalorder %s9, 5
    %p129 = pnand %p127, %p128
    %p130 = pneg %p129
    // Predicated region
    $region9: #{unet_conv_block.5} parent=5 // pred_check
      _
    $region10: #{unet_conv_block.5} parent=5 // pred_check_branch
      %132 = sbr.rel (%p129) target = $region12
    $region11: #{unet_conv_block.5} parent=5 // pred_region
      %s133 = ssub.s32 %s9, 1
      // Predicated region
      $region13: #{unet_conv_block.5} parent=11 // pred_check
        %p134 = pneg %p70
      $region14: #{unet_conv_block.5} parent=11 // pred_check_branch
        %136 = sbr.rel (%p134) target = $region16
      $region15: #{unet_conv_block.5} parent=11 // pred_region
        _
      $region16: #{unet_conv_block.5} parent=11 // pred_fallthru
        _
      // Predicated region
      $region17: #{unet_conv_block.5} parent=11 // pred_check
        %p137 = pneg %p91
      $region18: #{unet_conv_block.5} parent=11 // pred_check_branch
        %139 = sbr.rel (%p137) target = $region20
      $region19: #{unet_conv_block.5} parent=11 // pred_region
        _
      $region20: #{unet_conv_block.5} parent=11 // pred_fallthru
        _
    $region12: #{unet_conv_block.5} parent=5 // pred_fallthru
      _
    %p140 = scmp.lt.s32.totalorder %s9, 4
    // Predicated region
    $region21: #{unet_conv_block.5} parent=5 // pred_check
      %p141 = pneg %p140
    $region22: #{unet_conv_block.5} parent=5 // pred_check_branch
      %143 = sbr.rel (%p141) target = $region24
    $region23: #{unet_conv_block.5} parent=5 // pred_region
      // Predicated region
      $region25: #{unet_conv_block.5} parent=23 // pred_check
        %p144 = pneg %p43
      $region26: #{unet_conv_block.5} parent=23 // pred_check_branch
        %146 = sbr.rel (%p144) target = $region28
      $region27: #{unet_conv_block.5} parent=23 // pred_region
        %s147 = smul.u32 8, %s17
        %p148 = scmp.lt.s32.totalorder %s16, 1
        %s149 = scalar_select %p148, %s16, 1
        %p150 = scmp.lt.s32.totalorder %s147, 15
        %s151 = scalar_select %p150, %s147, 15
        %s152 = smul.addr %s151, 3
        %s153 = smul.addr %s149, 48
        %s154 = sadd.s32 %s152, %s153
        %s155 = smul.addr %s154, 8
        %s156 = scalar_lea.vmem %s0, %s155
        %s157 = smul.u32 8, %s17
      $region28: #{unet_conv_block.5} parent=23 // pred_fallthru
        _
    $region24: #{unet_conv_block.5} parent=5 // pred_fallthru
      _
    %p158 = scmp.le.s32.totalorder 1, %s9
    %p159 = scmp.lt.s32.totalorder %s9, 5
    %p160 = pnand %p158, %p159
    %p161 = pneg %p160
    // Predicated region
    $region29: #{unet_conv_block.5} parent=5 // pred_check
      _
    $region30: #{unet_conv_block.5} parent=5 // pred_check_branch
      %163 = sbr.rel (%p160) target = $region32
    $region31: #{unet_conv_block.5} parent=5 // pred_region
      %s164 = ssub.s32 %s9, 1
      %s165 = smul.u32 8, %s19
      %p166 = scmp.lt.s32.totalorder %s18, 1
      %s167 = scalar_select %p166, %s18, 1
      %p168 = scmp.lt.s32.totalorder %s165, 15
      %s169 = scalar_select %p168, %s165, 15
      %s170 = smul.addr %s169, 3
      %s171 = smul.addr %s167, 48
      %s172 = sadd.s32 %s170, %s171
      %s173 = smul.addr %s172, 8
      %s174 = scalar_lea.vmem %s0, %s173
      %p175 = pneg %p49
      %p176 = pneg %p46
      %p177 = pneg %p70
      %p178 = pneg %p67
      %p179 = pneg %p91
      %p180 = pneg %p88
      %p181 = pneg %p119
      %p182 = pneg %p116
      %s183 = smul.u32 8, %s19
      %p184 = scmp.lt.s32.totalorder %s18, 1
      %s185 = scalar_select %p184, %s18, 1
      %p186 = scmp.lt.s32.totalorder %s183, 15
      %s187 = scalar_select %p186, %s183, 15
      %s188 = smul.addr %s187, 2
      %s189 = smul.addr %s185, 32
      %s190 = sadd.s32 %s188, %s189
      %s191 = smul.addr %s190, 8
      %s192 = scalar_lea.vmem %s3, %s191
      %s193 = smul.u32 8, %s19
      %p194 = scmp.lt.s32.totalorder %s18, 1
      %s195 = scalar_select %p194, %s18, 1
      %p196 = scmp.lt.s32.totalorder %s193, 15
      %s197 = scalar_select %p196, %s193, 15
      %s198 = smul.addr %s197, 3
      %s199 = smul.addr %s195, 48
      %s200 = sadd.s32 %s198, %s199
      %s201 = smul.addr %s200, 8
      %s202 = scalar_lea.vmem %s0, %s201
      %s203 = smul.u32 8, %s19
      %s204 = smul.u32 8, %s19
      %p205 = scmp.lt.s32.totalorder %s18, 1
      %s206 = scalar_select %p205, %s18, 1
      %p207 = scmp.lt.s32.totalorder %s204, 15
      %s208 = scalar_select %p207, %s204, 15
      %s209 = smul.addr %s208, 2
      %s210 = smul.addr %s206, 32
      %s211 = sadd.s32 %s209, %s210
      %s212 = smul.addr %s211, 8
      %s213 = scalar_lea.vmem %s3, %s212
      %s214 = smul.u32 8, %s19
      %v215 = vld [vmem:[%s202 + $0x1] sm:$0xff]
      %v216 = vld [vmem:[%s202 + $0x9] sm:$0xff]
      %v217 = vld [vmem:[%s202 + $0x19] sm:$0xff]
      %v218 = vld [vmem:[%s202 + $0x21] sm:$0xff]
      %v219 = vld [vmem:[%s202 + $0x31] sm:$0xff]
      %v220 = vld [vmem:[%s202 + $0x39] sm:$0xff]
      %v221 = vld [vmem:[%s202 + $0x49] sm:$0xff]
      %v222 = vld [vmem:[%s202 + $0x51] sm:$0xff]
      %v223 = vld [vmem:[%s202 + $0x61] sm:$0xff]
      %v224 = vld [vmem:[%s202 + $0x69] sm:$0xff]
      %v225 = vld [vmem:[%s202 + $0x79] sm:$0xff]
      %v226 = vld [vmem:[%s202 + $0x81] sm:$0xff]
      %v227 = vld [vmem:[%s202 + $0x91] sm:$0xff]
      %v228 = vld [vmem:[%s202 + $0x99] sm:$0xff]
      %v229 = vld [vmem:[%s202 + $0xa9] sm:$0xff]
      %v230 = vld [vmem:[%s202 + $0xb1] sm:$0xff]
      %v231 = vld [vmem:[%s1] sm:$0x1]
      %v233 = vlaneseq
      %v234 = vshrl.u32 %v233, 7
      %v235 = vsub.s32 0, %v234
      %v236 = vrot.slane %v231, %v235
      %v238 = vmul.f32 %v215, %v236
      %v239 = vmul.f32 %v216, %v236
      %v240 = vmul.f32 %v217, %v236
      %v241 = vmul.f32 %v218, %v236
      %v242 = vmul.f32 %v219, %v236
      %v243 = vmul.f32 %v220, %v236
      %v244 = vmul.f32 %v221, %v236
      %v245 = vmul.f32 %v222, %v236
      %v246 = vmul.f32 %v223, %v236
      %v247 = vmul.f32 %v224, %v236
      %v248 = vmul.f32 %v225, %v236
      %v249 = vmul.f32 %v226, %v236
      %v250 = vmul.f32 %v227, %v236
      %v251 = vmul.f32 %v228, %v236
      %v252 = vmul.f32 %v229, %v236
      %v253 = vmul.f32 %v230, %v236
      %v254 = vld [vmem:[%s2] sm:$0x1]
      %v256 = vlaneseq
      %v257 = vshrl.u32 %v256, 7
      %v258 = vsub.s32 0, %v257
      %v259 = vrot.slane %v254, %v258
      %v261 = vadd.f32 %v238, %v259
      %v262 = vadd.f32 %v239, %v259
      %v263 = vadd.f32 %v240, %v259
      %v264 = vadd.f32 %v241, %v259
      %v265 = vadd.f32 %v242, %v259
      %v266 = vadd.f32 %v243, %v259
      %v267 = vadd.f32 %v244, %v259
      %v268 = vadd.f32 %v245, %v259
      %v269 = vadd.f32 %v246, %v259
      %v270 = vadd.f32 %v247, %v259
      %v271 = vadd.f32 %v248, %v259
      %v272 = vadd.f32 %v249, %v259
      %v273 = vadd.f32 %v250, %v259
      %v274 = vadd.f32 %v251, %v259
      %v275 = vadd.f32 %v252, %v259
      %v276 = vadd.f32 %v253, %v259
      %v277 = vmax.f32 %v261, 0.0
      %v278 = vmax.f32 %v262, 0.0
      %v279 = vmax.f32 %v263, 0.0
      %v280 = vmax.f32 %v264, 0.0
      %v281 = vmax.f32 %v265, 0.0
      %v282 = vmax.f32 %v266, 0.0
      %v283 = vmax.f32 %v267, 0.0
      %v284 = vmax.f32 %v268, 0.0
      %v285 = vmax.f32 %v269, 0.0
      %v286 = vmax.f32 %v270, 0.0
      %v287 = vmax.f32 %v271, 0.0
      %v288 = vmax.f32 %v272, 0.0
      %v289 = vmax.f32 %v273, 0.0
      %v290 = vmax.f32 %v274, 0.0
      %v291 = vmax.f32 %v275, 0.0
      %v292 = vmax.f32 %v276, 0.0
      %vm293 = vcmask 64512
      %294 = vst.msk [vmem:[%s213] sm:$0xff] %vm293, %v277
      %295 = vst.msk [vmem:[%s213 + $0x8] sm:$0xff] %vm293, %v278
      %296 = vst.msk [vmem:[%s213 + $0x10] sm:$0xff] %vm293, %v279
      %297 = vst.msk [vmem:[%s213 + $0x18] sm:$0xff] %vm293, %v280
      %298 = vst.msk [vmem:[%s213 + $0x20] sm:$0xff] %vm293, %v281
      %299 = vst.msk [vmem:[%s213 + $0x28] sm:$0xff] %vm293, %v282
      %300 = vst.msk [vmem:[%s213 + $0x30] sm:$0xff] %vm293, %v283
      %301 = vst.msk [vmem:[%s213 + $0x38] sm:$0xff] %vm293, %v284
      %302 = vst.msk [vmem:[%s213 + $0x40] sm:$0xff] %vm293, %v285
      %303 = vst.msk [vmem:[%s213 + $0x48] sm:$0xff] %vm293, %v286
      %304 = vst.msk [vmem:[%s213 + $0x50] sm:$0xff] %vm293, %v287
      %305 = vst.msk [vmem:[%s213 + $0x58] sm:$0xff] %vm293, %v288
      %306 = vst.msk [vmem:[%s213 + $0x60] sm:$0xff] %vm293, %v289
      %307 = vst.msk [vmem:[%s213 + $0x68] sm:$0xff] %vm293, %v290
      %308 = vst.msk [vmem:[%s213 + $0x70] sm:$0xff] %vm293, %v291
      %309 = vst.msk [vmem:[%s213 + $0x78] sm:$0xff] %vm293, %v292
      %s310 = smul.u32 8, %s19
      %p311 = scmp.lt.s32.totalorder %s18, 1
      %s312 = scalar_select %p311, %s18, 1
      %p313 = scmp.lt.s32.totalorder %s310, 15
      %s314 = scalar_select %p313, %s310, 15
      %s315 = smul.addr %s314, 2
      %s316 = smul.addr %s312, 32
      %s317 = sadd.s32 %s315, %s316
      %s318 = smul.addr %s317, 8
      %s319 = scalar_lea.vmem %s3, %s318
      // Predicated region
      $region33: #{unet_conv_block.5} parent=31 // pred_check
        %p320 = pneg %p116
      $region34: #{unet_conv_block.5} parent=31 // pred_check_branch
        %322 = sbr.rel (%p320) target = $region36
      $region35: #{unet_conv_block.5} parent=31 // pred_region
        %s323 = smul.u32 8, %s19
      $region36: #{unet_conv_block.5} parent=31 // pred_fallthru
        _
    $region32: #{unet_conv_block.5} parent=5 // pred_fallthru
      _
    %p324 = scmp.le.s32.totalorder 2, %s9
    // Predicated region
    $region37: #{unet_conv_block.5} parent=5 // pred_check
      %p325 = pneg %p324
    $region38: #{unet_conv_block.5} parent=5 // pred_check_branch
      %327 = sbr.rel (%p325) target = $region40
    $region39: #{unet_conv_block.5} parent=5 // pred_region
      %s328 = ssub.s32 %s9, 2
      // Predicated region
      $region41: #{unet_conv_block.5} parent=39 // pred_check
        %p329 = pneg %p122
      $region42: #{unet_conv_block.5} parent=39 // pred_check_branch
        %331 = sbr.rel (%p329) target = $region44
      $region43: #{unet_conv_block.5} parent=39 // pred_region
        %s332 = smul.u32 8, %s21
        %p333 = scmp.lt.s32.totalorder %s20, 1
        %s334 = scalar_select %p333, %s20, 1
        %p335 = scmp.lt.s32.totalorder %s332, 15
        %s336 = scalar_select %p335, %s332, 15
        %s337 = smul.addr %s336, 2
        %s338 = smul.addr %s334, 32
        %s339 = sadd.s32 %s337, %s338
        %s340 = smul.addr %s339, 8
        %s341 = scalar_lea.vmem %s3, %s340
      $region44: #{unet_conv_block.5} parent=39 // pred_fallthru
        _
    $region40: #{unet_conv_block.5} parent=5 // pred_fallthru
      _
  $region6: #{unet_conv_block.5} parent=0 // loop_footer
    %s13 = sadd.s32 1, %s9
  $region7: #{unet_conv_block.5} parent=0 // loop_footer_branch
    %8 = sbr.rel target = $region3
  $region8: #{unet_conv_block.5} parent=0 // loop_exit
    _

// kernel: unet_conv_block.3
$region0: #{unet_conv_block.3}
  #allocation0 [shape = 'u32[]', space=smem, size = 0x4, offset = 0x4, fixed_abs, tag = 'smem constant byte address 0x4 - core index']
  #allocation1 [shape = 'u32[144,128]{1,0:T(1,128)}', space=vmem, size = 0x12000, scoped, tag = 'internal scratch']
  #allocation2 [shape = 'bf16[128,128]{1,0:T(16,128)(2,1)}', space=vmem, size = 0x8000, scoped, tag = 'scratch operand']
  %s0 = inlined_call_operand.vmem [shape: f32[2,16,18,4], index: 0, kind: input, shape index: {}]
  %s1 = inlined_call_operand.vmem [shape: f32[1,4], index: 1, kind: input, shape index: {}]
  %s2 = inlined_call_operand.vmem [shape: f32[1,4], index: 2, kind: input, shape index: {}]
  %s3 = inlined_call_operand.vmem [shape: bf16[128,128], index: 3, kind: input, shape index: {}]
  %s4 = inlined_call_operand.vmem [shape: f32[2,16,18,128], index: 4, kind: output, shape index: {0}]
  %s5 = inlined_call_operand.vmem [shape: f32[2,1,128], index: 5, kind: output, shape index: {1}]
  %s6 = inlined_call_operand.vmem [shape: f32[2,1,128], index: 6, kind: output, shape index: {2}]
  %7 = xla_tuple %s4, %s5, %s6
  %s8 = sld [smem:[#allocation0]]
  $region69: #{unet_conv_block.3} parent=0
    _
  %s10 = ssub.s32 1, %s8
  %s11 = scalar_select 0, %s10, %s8
  loop: start=0, step=1, limit=6
  $region2: #{unet_conv_block.3} parent=0 // loop_pre_header
    _
  $region3: #{unet_conv_block.3} parent=0 // loop_header
    %s13 = sphi 0, %s17
    %p14 = scmp.ge.s32.totalorder %s13, 6
    %s20 = sphi 0, %s32
    %s21 = sphi 0, %s28
    %s22 = sphi 0, %s20
    %s23 = sphi 0, %s21
    %s24 = sphi 0, %s22
    %s25 = sphi 0, %s23
    %s35 = sphi 0, %s37
    %s38 = sphi 0, %s35
    %s39 = sphi 0, %s38
    %s55 = sphi 0, %s39
    %s59 = sphi 0, %s59
    %s61 = sphi 0, %s59
    %s62 = sphi 0, %s61
    %s76 = sphi 0, %s62
    %s80 = sphi 0, %s80
    %s82 = sphi 0, %s80
    %s83 = sphi 0, %s82
    %s97 = sphi 0, %s83
    %s101 = sphi 0, %s101
    %s103 = sphi 0, %s101
    %s104 = sphi 0, %s103
    %s118 = sphi 0, %s104
    %s126 = sphi 0, %s128
    %s129 = sphi 0, %s126
    %s130 = sphi 0, %s129
    %s146 = sphi 0, %s130
    %s152 = sphi 0, %s154
    %s155 = sphi 0, %s152
    %s156 = sphi 0, %s155
    %s172 = sphi 0, %s156
    %s178 = sphi 0, %s180
    %s181 = sphi 0, %s178
    %s182 = sphi 0, %s181
    %s198 = sphi 0, %s182
  $region4: #{unet_conv_block.3} parent=0 // loop_header_branch
    %16 = sbr.rel (%p14) target = $region8
  $region5: #{unet_conv_block.3} parent=0 // loop_body
    %s18 = ssub.s32 %s13, 1
    %s19 = ssub.s32 %s13, 2
    %s26 = sadd.s32 1, %s21
    %p27 = scmp.ge.s32.totalorder %s26, 2
    %s28 = scalar_select %p27, 0, %s26
    %s29 = sadd.s32 1, %s20
    %s30 = scalar_select %p27, %s29, %s20
    %p31 = scmp.ge.s32.totalorder %s30, 2
    %s32 = scalar_select %p31, 0, %s30
    %s33 = ssub.s32 %s20, %s32
    %p34 = scmp.eq.s32.totalorder %s33, 0
    %s36 = sadd.s32 %s35, 1
    %s37 = scalar_select %p34, %s35, %s36
    %p40 = pneg %p34
    %p41 = scmp.eq.s32.totalorder %s13, 3
    %p42 = por %p40, %p41
    %p43 = scmp.ne.s32.totalorder %s35, %s38
    %p44 = scmp.eq.s32.totalorder %s13, 0
    %p45 = por %p43, %p44
    %p46 = scmp.ne.s32.totalorder %s35, %s38
    %p47 = scmp.eq.s32.totalorder %s18, 3
    %p48 = por %p46, %p47
    %p49 = scmp.ne.s32.totalorder %s38, %s39
    %p50 = scmp.eq.s32.totalorder %s18, 0
    %p51 = por %p49, %p50
    %p52 = scmp.ne.s32.totalorder %s38, %s39
    %p53 = scmp.eq.s32.totalorder %s19, 3
    %p54 = por %p52, %p53
    %p56 = scmp.ne.s32.totalorder %s39, %s55
    %p57 = scmp.eq.s32.totalorder %s19, 0
    %p58 = por %p56, %p57
    %s60 = sadd.s32 %s59, 1
    %p63 = scmp.eq.s32.totalorder %s13, 3
    %p64 = scmp.ne.s32.totalorder %s59, %s61
    %p65 = scmp.eq.s32.totalorder %s13, 0
    %p66 = por %p64, %p65
    %p67 = scmp.ne.s32.totalorder %s59, %s61
    %p68 = scmp.eq.s32.totalorder %s18, 3
    %p69 = por %p67, %p68
    %p70 = scmp.ne.s32.totalorder %s61, %s62
    %p71 = scmp.eq.s32.totalorder %s18, 0
    %p72 = por %p70, %p71
    %p73 = scmp.ne.s32.totalorder %s61, %s62
    %p74 = scmp.eq.s32.totalorder %s19, 3
    %p75 = por %p73, %p74
    %p77 = scmp.ne.s32.totalorder %s62, %s76
    %p78 = scmp.eq.s32.totalorder %s19, 0
    %p79 = por %p77, %p78
    %s81 = sadd.s32 %s80, 1
    %p84 = scmp.eq.s32.totalorder %s13, 3
    %p85 = scmp.ne.s32.totalorder %s80, %s82
    %p86 = scmp.eq.s32.totalorder %s13, 0
    %p87 = por %p85, %p86
    %p88 = scmp.ne.s32.totalorder %s80, %s82
    %p89 = scmp.eq.s32.totalorder %s18, 3
    %p90 = por %p88, %p89
    %p91 = scmp.ne.s32.totalorder %s82, %s83
    %p92 = scmp.eq.s32.totalorder %s18, 0
    %p93 = por %p91, %p92
    %p94 = scmp.ne.s32.totalorder %s82, %s83
    %p95 = scmp.eq.s32.totalorder %s19, 3
    %p96 = por %p94, %p95
    %p98 = scmp.ne.s32.totalorder %s83, %s97
    %p99 = scmp.eq.s32.totalorder %s19, 0
    %p100 = por %p98, %p99
    %s102 = sadd.s32 %s101, 1
    %p105 = scmp.eq.s32.totalorder %s13, 3
    %p106 = scmp.ne.s32.totalorder %s101, %s103
    %p107 = scmp.eq.s32.totalorder %s13, 0
    %p108 = por %p106, %p107
    %p109 = scmp.ne.s32.totalorder %s101, %s103
    %p110 = scmp.eq.s32.totalorder %s18, 3
    %p111 = por %p109, %p110
    %p112 = scmp.ne.s32.totalorder %s103, %s104
    %p113 = scmp.eq.s32.totalorder %s18, 0
    %p114 = por %p112, %p113
    %p115 = scmp.ne.s32.totalorder %s103, %s104
    %p116 = scmp.eq.s32.totalorder %s19, 3
    %p117 = por %p115, %p116
    %p119 = scmp.ne.s32.totalorder %s104, %s118
    %p120 = scmp.eq.s32.totalorder %s19, 0
    %p121 = por %p119, %p120
    %s122 = ssub.s32 %s20, %s32
    %s123 = ssub.s32 %s21, %s28
    %s124 = sor.u32 %s122, %s123
    %p125 = scmp.eq.s32.totalorder %s124, 0
    %s127 = sadd.s32 %s126, 1
    %s128 = scalar_select %p125, %s126, %s127
    %p131 = pneg %p125
    %p132 = scmp.eq.s32.totalorder %s13, 3
    %p133 = por %p131, %p132
    %p134 = scmp.ne.s32.totalorder %s126, %s129
    %p135 = scmp.eq.s32.totalorder %s13, 0
    %p136 = por %p134, %p135
    %p137 = scmp.ne.s32.totalorder %s126, %s129
    %p138 = scmp.eq.s32.totalorder %s18, 3
    %p139 = por %p137, %p138
    %p140 = scmp.ne.s32.totalorder %s129, %s130
    %p141 = scmp.eq.s32.totalorder %s18, 0
    %p142 = por %p140, %p141
    %p143 = scmp.ne.s32.totalorder %s129, %s130
    %p144 = scmp.eq.s32.totalorder %s19, 3
    %p145 = por %p143, %p144
    %p147 = scmp.ne.s32.totalorder %s130, %s146
    %p148 = scmp.eq.s32.totalorder %s19, 0
    %p149 = por %p147, %p148
    %s150 = ssub.s32 %s20, %s32
    %p151 = scmp.eq.s32.totalorder %s150, 0
    %s153 = sadd.s32 %s152, 1
    %s154 = scalar_select %p151, %s152, %s153
    %p157 = pneg %p151
    %p158 = scmp.eq.s32.totalorder %s13, 3
    %p159 = por %p157, %p158
    %p160 = scmp.ne.s32.totalorder %s152, %s155
    %p161 = scmp.eq.s32.totalorder %s13, 0
    %p162 = por %p160, %p161
    %p163 = scmp.ne.s32.totalorder %s152, %s155
    %p164 = scmp.eq.s32.totalorder %s18, 3
    %p165 = por %p163, %p164
    %p166 = scmp.ne.s32.totalorder %s155, %s156
    %p167 = scmp.eq.s32.totalorder %s18, 0
    %p168 = por %p166, %p167
    %p169 = scmp.ne.s32.totalorder %s155, %s156
    %p170 = scmp.eq.s32.totalorder %s19, 3
    %p171 = por %p169, %p170
    %p173 = scmp.ne.s32.totalorder %s156, %s172
    %p174 = scmp.eq.s32.totalorder %s19, 0
    %p175 = por %p173, %p174
    %s176 = ssub.s32 %s20, %s32
    %p177 = scmp.eq.s32.totalorder %s176, 0
    %s179 = sadd.s32 %s178, 1
    %s180 = scalar_select %p177, %s178, %s179
    %p183 = pneg %p177
    %p184 = scmp.eq.s32.totalorder %s13, 3
    %p185 = por %p183, %p184
    %p186 = scmp.ne.s32.totalorder %s178, %s181
    %p187 = scmp.eq.s32.totalorder %s13, 0
    %p188 = por %p186, %p187
    %p189 = scmp.ne.s32.totalorder %s178, %s181
    %p190 = scmp.eq.s32.totalorder %s18, 3
    %p191 = por %p189, %p190
    %p192 = scmp.ne.s32.totalorder %s181, %s182
    %p193 = scmp.eq.s32.totalorder %s18, 0
    %p194 = por %p192, %p193
    %p195 = scmp.ne.s32.totalorder %s181, %s182
    %p196 = scmp.eq.s32.totalorder %s19, 3
    %p197 = por %p195, %p196
    %p199 = scmp.ne.s32.totalorder %s182, %s198
    %p200 = scmp.eq.s32.totalorder %s19, 0
    %p201 = por %p199, %p200
    %p202 = scmp.le.s32.totalorder 1, %s13
    %p203 = scmp.lt.s32.totalorder %s13, 5
    %p204 = pnand %p202, %p203
    %p205 = pneg %p204
    // Predicated region
    $region9: #{unet_conv_block.3} parent=5 // pred_check
      _
    $region10: #{unet_conv_block.3} parent=5 // pred_check_branch
      %207 = sbr.rel (%p204) target = $region12
    $region11: #{unet_conv_block.3} parent=5 // pred_region
      %s208 = ssub.s32 %s13, 1
      // Predicated region
      $region13: #{unet_conv_block.3} parent=11 // pred_check
        %p209 = pneg %p72
      $region14: #{unet_conv_block.3} parent=11 // pred_check_branch
        %211 = sbr.rel (%p209) target = $region16
      $region15: #{unet_conv_block.3} parent=11 // pred_region
        _
      $region16: #{unet_conv_block.3} parent=11 // pred_fallthru
        _
      // Predicated region
      $region17: #{unet_conv_block.3} parent=11 // pred_check
        %p212 = pneg %p93
      $region18: #{unet_conv_block.3} parent=11 // pred_check_branch
        %214 = sbr.rel (%p212) target = $region20
      $region19: #{unet_conv_block.3} parent=11 // pred_region
        _
      $region20: #{unet_conv_block.3} parent=11 // pred_fallthru
        _
      // Predicated region
      $region21: #{unet_conv_block.3} parent=11 // pred_check
        %p215 = pneg %p114
      $region22: #{unet_conv_block.3} parent=11 // pred_check_branch
        %217 = sbr.rel (%p215) target = $region24
      $region23: #{unet_conv_block.3} parent=11 // pred_region
        _
      $region24: #{unet_conv_block.3} parent=11 // pred_fallthru
        _
    $region12: #{unet_conv_block.3} parent=5 // pred_fallthru
      _
    %p218 = scmp.lt.s32.totalorder %s13, 4
    // Predicated region
    $region25: #{unet_conv_block.3} parent=5 // pred_check
      %p219 = pneg %p218
    $region26: #{unet_conv_block.3} parent=5 // pred_check_branch
      %221 = sbr.rel (%p219) target = $region28
    $region27: #{unet_conv_block.3} parent=5 // pred_region
      // Predicated region
      $region29: #{unet_conv_block.3} parent=27 // pred_check
        %p222 = pneg %p45
      $region30: #{unet_conv_block.3} parent=27 // pred_check_branch
        %224 = sbr.rel (%p222) target = $region32
      $region31: #{unet_conv_block.3} parent=27 // pred_region
        %p225 = scmp.lt.s32.totalorder %s20, 1
        %s226 = scalar_select %p225, %s20, 1
        %s227 = smul.addr %s226, 48
        %s228 = smul.addr %s227, 8
        %s229 = scalar_lea.vmem %s0, %s228
      $region32: #{unet_conv_block.3} parent=27 // pred_fallthru
        _
    $region28: #{unet_conv_block.3} parent=5 // pred_fallthru
      _
    %p230 = scmp.le.s32.totalorder 1, %s13
    %p231 = scmp.lt.s32.totalorder %s13, 5
    %p232 = pnand %p230, %p231
    %p233 = pneg %p232
    // Predicated region
    $region33: #{unet_conv_block.3} parent=5 // pred_check
      _
    $region34: #{unet_conv_block.3} parent=5 // pred_check_branch
      %235 = sbr.rel (%p232) target = $region36
    $region35: #{unet_conv_block.3} parent=5 // pred_region
      %s236 = ssub.s32 %s13, 1
      %p237 = scmp.lt.s32.totalorder %s22, 1
      %s238 = scalar_select %p237, %s22, 1
      %s239 = smul.addr %s238, 48
      %s240 = smul.addr %s239, 8
      %s241 = scalar_lea.vmem %s0, %s240
      %p242 = pneg %p51
      %p243 = pneg %p48
      %p244 = pneg %p72
      %p245 = pneg %p69
      %p246 = pneg %p93
      %p247 = pneg %p90
      %p248 = pneg %p114
      %p249 = pneg %p111
      %p250 = pneg %p142
      %p251 = pneg %p139
      %s252 = smul.u32 8, %s23
      %p253 = scmp.lt.s32.totalorder %s22, 1
      %s254 = scalar_select %p253, %s22, 1
      %p255 = scmp.lt.s32.totalorder %s252, 15
      %s256 = scalar_select %p255, %s252, 15
      %s257 = smul.addr %s256, 3
      %s258 = smul.addr %s254, 48
      %s259 = sadd.s32 %s257, %s258
      %s260 = smul.addr %s259, 8
      %s261 = scalar_lea.vmem %s4, %s260
      %p262 = pneg %p168
      %p263 = pneg %p165
      %p264 = scmp.lt.s32.totalorder %s22, 1
      %s265 = scalar_select %p264, %s22, 1
      %s266 = scalar_lea.vmem %s5, %s265
      %p267 = pneg %p194
      %p268 = pneg %p191
      %p269 = scmp.lt.s32.totalorder %s22, 1
      %s270 = scalar_select %p269, %s22, 1
      %s271 = scalar_lea.vmem %s6, %s270
      %p272 = scmp.lt.s32.totalorder %s22, 1
      %s273 = scalar_select %p272, %s22, 1
      %s274 = smul.addr %s273, 48
      %s275 = smul.addr %s274, 8
      %s276 = scalar_lea.vmem %s0, %s275
      %s277 = smul.u32 8, %s23
      %p278 = scmp.lt.s32.totalorder %s22, 1
      %s279 = scalar_select %p278, %s22, 1
      %p280 = scmp.lt.s32.totalorder %s277, 15
      %s281 = scalar_select %p280, %s277, 15
      %s282 = smul.addr %s281, 3
      %s283 = smul.addr %s279, 48
      %s284 = sadd.s32 %s282, %s283
      %s285 = smul.addr %s284, 8
      %s286 = scalar_lea.vmem %s4, %s285
      %s287 = smul.u32 8, %s23
      %p288 = scmp.lt.s32.totalorder %s22, 1
      %s289 = scalar_select %p288, %s22, 1
      %s290 = scalar_lea.vmem %s5, %s289
      %p291 = scmp.lt.s32.totalorder %s22, 1
      %s292 = scalar_select %p291, %s22, 1
      %s293 = scalar_lea.vmem %s6, %s292
      %s295 = smul.u32 %s23, 8
      %s296 = smul.u32 %s295, 24
      %s297 = scalar_lea.vmem %s276, %s296
      %v298 = vld [vmem:[%s297] sm:$0xff]
      %v299 = vld [vmem:[%s297 + $0x8] sm:$0xff]
      %v300 = vld [vmem:[%s297 + $0x10] sm:$0x3]
      %v301 = vld [vmem:[%s297 + $0x18] sm:$0xff]
      %v302 = vld [vmem:[%s297 + $0x20] sm:$0xff]
      %v303 = vld [vmem:[%s297 + $0x28] sm:$0x3]
      %v304 = vld [vmem:[%s297 + $0x30] sm:$0xff]
      %v305 = vld [vmem:[%s297 + $0x38] sm:$0xff]
      %v306 = vld [vmem:[%s297 + $0x40] sm:$0x3]
      %v307 = vld [vmem:[%s297 + $0x48] sm:$0xff]
      %v308 = vld [vmem:[%s297 + $0x50] sm:$0xff]
      %v309 = vld [vmem:[%s297 + $0x58] sm:$0x3]
      %v310 = vld [vmem:[%s297 + $0x60] sm:$0xff]
      %v311 = vld [vmem:[%s297 + $0x68] sm:$0xff]
      %v312 = vld [vmem:[%s297 + $0x70] sm:$0x3]
      %v313 = vld [vmem:[%s297 + $0x78] sm:$0xff]
      %v314 = vld [vmem:[%s297 + $0x80] sm:$0xff]
      %v315 = vld [vmem:[%s297 + $0x88] sm:$0x3]
      %v316 = vld [vmem:[%s297 + $0x90] sm:$0xff]
      %v317 = vld [vmem:[%s297 + $0x98] sm:$0xff]
      %v318 = vld [vmem:[%s297 + $0xa0] sm:$0x3]
      %v319 = vld [vmem:[%s297 + $0xa8] sm:$0xff]
      %v320 = vld [vmem:[%s297 + $0xb0] sm:$0xff]
      %v321 = vld [vmem:[%s297 + $0xb8] sm:$0x3]
      %s322 = ssub.s32 %s295, 1
      %p323 = scmp.gt.s32.totalorder %s322, 0
      %s324 = scalar_select %p323, %s322, 0
      %s325 = smul.u32 %s324, 24
      %s326 = scalar_lea.vmem %s276, %s325
      %v327 = vld [vmem:[%s326] sm:$0xff]
      %v328 = vld [vmem:[%s326 + $0x8] sm:$0xff]
      %v329 = vld [vmem:[%s326 + $0x10] sm:$0x3]
      %p330 = scmp.gt.s32.totalorder %s23, 0
      %s331 = scalar_select %p330, 1, 0
      %s332 = scvt.s32.f32 %s331
      %v333 = vstv %s332
      %v334 = vmul.f32 %v327, %v333
      %v335 = vmul.f32 %v328, %v333
      %v336 = vmul.f32 %v329, %v333
      %s337 = sadd.s32 %s295, 8
      %p338 = scmp.lt.s32.totalorder %s337, 15
      %s339 = scalar_select %p338, %s337, 15
      %s340 = smul.u32 %s339, 24
      %s341 = scalar_lea.vmem %s276, %s340
      %v342 = vld [vmem:[%s341] sm:$0xff]
      %v343 = vld [vmem:[%s341 + $0x8] sm:$0xff]
      %v344 = vld [vmem:[%s341 + $0x10] sm:$0x3]
      %p345 = scmp.lt.s32.totalorder %s23, 1
      %s346 = scalar_select %p345, 1, 0
      %s347 = scvt.s32.f32 %s346
      %v348 = vstv %s347
      %v349 = vmul.f32 %v342, %v348
      %v350 = vmul.f32 %v343, %v348
      %v351 = vmul.f32 %v344, %v348
      %v352 = vpack.c.bf16 %v335, %v334
      %v353 = vpack.c.bf16 %v299, %v298
      %v354 = vpack.c.bf16 %v302, %v301
      %v355 = vpack.c.bf16 %v305, %v304
      %v356 = vpack.c.bf16 %v308, %v307
      %v357 = vpack.c.bf16 %v311, %v310
      %v358 = vpack.c.bf16 %v314, %v313
      %v359 = vpack.c.bf16 %v317, %v316
      %vm360 = vcmask 31744
      %361 = vst.msk [vmem:[#allocation2] sm:$0xff] %vm360, %v352
      %362 = vst.msk [vmem:[#allocation2 + $0x8] sm:$0xff] %vm360, %v353
      %363 = vst.msk [vmem:[#allocation2 + $0x10] sm:$0xff] %vm360, %v354
      %364 = vst.msk [vmem:[#allocation2 + $0x18] sm:$0xff] %vm360, %v355
      %365 = vst.msk [vmem:[#allocation2 + $0x20] sm:$0xff] %vm360, %v356
      %366 = vst.msk [vmem:[#allocation2 + $0x28] sm:$0xff] %vm360, %v357
      %367 = vst.msk [vmem:[#allocation2 + $0x30] sm:$0xff] %vm360, %v358
      %368 = vst.msk [vmem:[#allocation2 + $0x38] sm:$0xff] %vm360, %v359
      %vm393 = vcmask 1046528
      %v394 = vrot.slane %v334, 1
      %v395 = vrot.slane %v335, 1
      %v396 = vsel %vm393, %v394, %v395
      %v397 = vrot.slane %v336, 1
      %v398 = vsel %vm393, %v395, %v397
      %v399 = vrot.slane %v298, 1
      %v400 = vrot.slane %v299, 1
      %v401 = vsel %vm393, %v399, %v400
      %v402 = vrot.slane %v300, 1
      %v403 = vsel %vm393, %v400, %v402
      %v404 = vrot.slane %v301, 1
      %v405 = vrot.slane %v302, 1
      %v406 = vsel %vm393, %v404, %v405
      %v407 = vrot.slane %v303, 1
      %v408 = vsel %vm393, %v405, %v407
      %v409 = vrot.slane %v304, 1
      %v410 = vrot.slane %v305, 1
      %v411 = vsel %vm393, %v409, %v410
      %v412 = vrot.slane %v306, 1
      %v413 = vsel %vm393, %v410, %v412
      %v414 = vrot.slane %v307, 1
      %v415 = vrot.slane %v308, 1
      %v416 = vsel %vm393, %v414, %v415
      %v417 = vrot.slane %v309, 1
      %v418 = vsel %vm393, %v415, %v417
      %v419 = vrot.slane %v310, 1
      %v420 = vrot.slane %v311, 1
      %v421 = vsel %vm393, %v419, %v420
      %v422 = vrot.slane %v312, 1
      %v423 = vsel %vm393, %v420, %v422
      %v424 = vrot.slane %v313, 1
      %v425 = vrot.slane %v314, 1
      %v426 = vsel %vm393, %v424, %v425
      %v427 = vrot.slane %v315, 1
      %v428 = vsel %vm393, %v425, %v427
      %v429 = vrot.slane %v316, 1
      %v430 = vrot.slane %v317, 1
      %v431 = vsel %vm393, %v429, %v430
      %v432 = vrot.slane %v318, 1
      %v433 = vsel %vm393, %v430, %v432
      %v450 = vpack.c.bf16 %v398, %v396
      %v451 = vpack.c.bf16 %v403, %v401
      %v452 = vpack.c.bf16 %v408, %v406
      %v453 = vpack.c.bf16 %v413, %v411
      %v454 = vpack.c.bf16 %v418, %v416
      %v455 = vpack.c.bf16 %v423, %v421
      %v456 = vpack.c.bf16 %v428, %v426
      %v457 = vpack.c.bf16 %v433, %v431
      %466 = vrot.lane.b32.xlu0 %v450, 4
      %v467 = vpop.permute.xlu0 %466
      %468 = vrot.lane.b32.xlu0 %v451, 4
      %v469 = vpop.permute.xlu0 %468
      %470 = vrot.lane.b32.xlu0 %v452, 4
      %v471 = vpop.permute.xlu0 %470
      %472 = vrot.lane.b32.xlu0 %v453, 4
      %v473 = vpop.permute.xlu0 %472
      %474 = vrot.lane.b32.xlu0 %v454, 4
      %v475 = vpop.permute.xlu0 %474
      %476 = vrot.lane.b32.xlu0 %v455, 4
      %v477 = vpop.permute.xlu0 %476
      %478 = vrot.lane.b32.xlu0 %v456, 4
      %v479 = vpop.permute.xlu0 %478
      %480 = vrot.lane.b32.xlu0 %v457, 4
      %v481 = vpop.permute.xlu0 %480
      %vm490 = vcmask 64544
      %491 = vst.msk [vmem:[#allocation2] sm:$0xff] %vm490, %v467
      %492 = vst.msk [vmem:[#allocation2 + $0x8] sm:$0xff] %vm490, %v469
      %493 = vst.msk [vmem:[#allocation2 + $0x10] sm:$0xff] %vm490, %v471
      %494 = vst.msk [vmem:[#allocation2 + $0x18] sm:$0xff] %vm490, %v473
      %495 = vst.msk [vmem:[#allocation2 + $0x20] sm:$0xff] %vm490, %v475
      %496 = vst.msk [vmem:[#allocation2 + $0x28] sm:$0xff] %vm490, %v477
      %497 = vst.msk [vmem:[#allocation2 + $0x30] sm:$0xff] %vm490, %v479
      %498 = vst.msk [vmem:[#allocation2 + $0x38] sm:$0xff] %vm490, %v481
      %vm499 = vcmask 1045504
      %v500 = vrot.slane %v334, 2
      %v501 = vrot.slane %v335, 2
      %v502 = vsel %vm499, %v500, %v501
      %v503 = vrot.slane %v336, 2
      %v504 = vsel %vm499, %v501, %v503
      %v505 = vrot.slane %v298, 2
      %v506 = vrot.slane %v299, 2
      %v507 = vsel %vm499, %v505, %v506
      %v508 = vrot.slane %v300, 2
      %v509 = vsel %vm499, %v506, %v508
      %v510 = vrot.slane %v301, 2
      %v511 = vrot.slane %v302, 2
      %v512 = vsel %vm499, %v510, %v511
      %v513 = vrot.slane %v303, 2
      %v514 = vsel %vm499, %v511, %v513
      %v515 = vrot.slane %v304, 2
      %v516 = vrot.slane %v305, 2
      %v517 = vsel %vm499, %v515, %v516
      %v518 = vrot.slane %v306, 2
      %v519 = vsel %vm499, %v516, %v518
      %v520 = vrot.slane %v307, 2
      %v521 = vrot.slane %v308, 2
      %v522 = vsel %vm499, %v520, %v521
      %v523 = vrot.slane %v309, 2
      %v524 = vsel %vm499, %v521, %v523
      %v525 = vrot.slane %v310, 2
      %v526 = vrot.slane %v311, 2
      %v527 = vsel %vm499, %v525, %v526
      %v528 = vrot.slane %v312, 2
      %v529 = vsel %vm499, %v526, %v528
      %v530 = vrot.slane %v313, 2
      %v531 = vrot.slane %v314, 2
      %v532 = vsel %vm499, %v530, %v531
      %v533 = vrot.slane %v315, 2
      %v534 = vsel %vm499, %v531, %v533
      %v535 = vrot.slane %v316, 2
      %v536 = vrot.slane %v317, 2
      %v537 = vsel %vm499, %v535, %v536
      %v538 = vrot.slane %v318, 2
      %v539 = vsel %vm499, %v536, %v538
      %v556 = vpack.c.bf16 %v504, %v502
      %v557 = vpack.c.bf16 %v509, %v507
      %v558 = vpack.c.bf16 %v514, %v512
      %v559 = vpack.c.bf16 %v519, %v517
      %v560 = vpack.c.bf16 %v524, %v522
      %v561 = vpack.c.bf16 %v529, %v527
      %v562 = vpack.c.bf16 %v534, %v532
      %v563 = vpack.c.bf16 %v539, %v537
      %572 = vrot.lane.b32.xlu0 %v556, 8
      %v573 = vpop.permute.xlu0 %572
      %574 = vrot.lane.b32.xlu0 %v557, 8
      %v575 = vpop.permute.xlu0 %574
      %576 = vrot.lane.b32.xlu0 %v558, 8
      %v577 = vpop.permute.xlu0 %576
      %578 = vrot.lane.b32.xlu0 %v559, 8
      %v579 = vpop.permute.xlu0 %578
      %580 = vrot.lane.b32.xlu0 %v560, 8
      %v581 = vpop.permute.xlu0 %580
      %582 = vrot.lane.b32.xlu0 %v561, 8
      %v583 = vpop.permute.xlu0 %582
      %584 = vrot.lane.b32.xlu0 %v562, 8
      %v585 = vpop.permute.xlu0 %584
      %586 = vrot.lane.b32.xlu0 %v563, 8
      %v587 = vpop.permute.xlu0 %586
      %vm596 = vcmask 97344
      %597 = vst.msk [vmem:[#allocation2] sm:$0xff] %vm596, %v573
      %598 = vst.msk [vmem:[#allocation2 + $0x8] sm:$0xff] %vm596, %v575
      %599 = vst.msk [vmem:[#allocation2 + $0x10] sm:$0xff] %vm596, %v577
      %600 = vst.msk [vmem:[#allocation2 + $0x18] sm:$0xff] %vm596, %v579
      %601 = vst.msk [vmem:[#allocation2 + $0x20] sm:$0xff] %vm596, %v581
      %602 = vst.msk [vmem:[#allocation2 + $0x28] sm:$0xff] %vm596, %v583
      %603 = vst.msk [vmem:[#allocation2 + $0x30] sm:$0xff] %vm596, %v585
      %604 = vst.msk [vmem:[#allocation2 + $0x38] sm:$0xff] %vm596, %v587
      %v605 = vpack.c.bf16 %v320, %v319
      %614 = vrot.lane.b32.xlu0 %v353, 12
      %v615 = vpop.permute.xlu0 %614
      %616 = vrot.lane.b32.xlu0 %v354, 12
      %v617 = vpop.permute.xlu0 %616
      %618 = vrot.lane.b32.xlu0 %v355, 12
      %v619 = vpop.permute.xlu0 %618
      %620 = vrot.lane.b32.xlu0 %v356, 12
      %v621 = vpop.permute.xlu0 %620
      %622 = vrot.lane.b32.xlu0 %v357, 12
      %v623 = vpop.permute.xlu0 %622
      %624 = vrot.lane.b32.xlu0 %v358, 12
      %v625 = vpop.permute.xlu0 %624
      %626 = vrot.lane.b32.xlu0 %v359, 12
      %v627 = vpop.permute.xlu0 %626
      %628 = vrot.lane.b32.xlu0 %v605, 12
      %v629 = vpop.permute.xlu0 %628
      %vm638 = vcmask 130144
      %639 = vst.msk [vmem:[#allocation2] sm:$0xff] %vm638, %v615
      %640 = vst.msk [vmem:[#allocation2 + $0x8] sm:$0xff] %vm638, %v617
      %641 = vst.msk [vmem:[#allocation2 + $0x10] sm:$0xff] %vm638, %v619
      %642 = vst.msk [vmem:[#allocation2 + $0x18] sm:$0xff] %vm638, %v621
      %643 = vst.msk [vmem:[#allocation2 + $0x20] sm:$0xff] %vm638, %v623
      %644 = vst.msk [vmem:[#allocation2 + $0x28] sm:$0xff] %vm638, %v625
      %645 = vst.msk [vmem:[#allocation2 + $0x30] sm:$0xff] %vm638, %v627
      %646 = vst.msk [vmem:[#allocation2 + $0x38] sm:$0xff] %vm638, %v629
      %v650 = vrot.slane %v319, 1
      %v651 = vrot.slane %v320, 1
      %v652 = vsel %vm393, %v650, %v651
      %v653 = vrot.slane %v321, 1
      %v654 = vsel %vm393, %v651, %v653
      %v657 = vpack.c.bf16 %v654, %v652
      %659 = vrot.lane.b32.xlu0 %v451, 16
      %v660 = vpop.permute.xlu0 %659
      %661 = vrot.lane.b32.xlu0 %v452, 16
      %v662 = vpop.permute.xlu0 %661
      %663 = vrot.lane.b32.xlu0 %v453, 16
      %v664 = vpop.permute.xlu0 %663
      %665 = vrot.lane.b32.xlu0 %v454, 16
      %v666 = vpop.permute.xlu0 %665
      %667 = vrot.lane.b32.xlu0 %v455, 16
      %v668 = vpop.permute.xlu0 %667
      %669 = vrot.lane.b32.xlu0 %v456, 16
      %v670 = vpop.permute.xlu0 %669
      %671 = vrot.lane.b32.xlu0 %v457, 16
      %v672 = vpop.permute.xlu0 %671
      %673 = vrot.lane.b32.xlu0 %v657, 16
      %v674 = vpop.permute.xlu0 %673
      %vm683 = vcmask 162944
      %684 = vst.msk [vmem:[#allocation2] sm:$0xff] %vm683, %v660
      %685 = vst.msk [vmem:[#allocation2 + $0x8] sm:$0xff] %vm683, %v662
      %686 = vst.msk [vmem:[#allocation2 + $0x10] sm:$0xff] %vm683, %v664
      %687 = vst.msk [vmem:[#allocation2 + $0x18] sm:$0xff] %vm683, %v666
      %688 = vst.msk [vmem:[#allocation2 + $0x20] sm:$0xff] %vm683, %v668
      %689 = vst.msk [vmem:[#allocation2 + $0x28] sm:$0xff] %vm683, %v670
      %690 = vst.msk [vmem:[#allocation2 + $0x30] sm:$0xff] %vm683, %v672
      %691 = vst.msk [vmem:[#allocation2 + $0x38] sm:$0xff] %vm683, %v674
      %v692 = vrot.slane %v319, 2
      %v693 = vrot.slane %v320, 2
      %v694 = vsel %vm499, %v692, %v693
      %v695 = vrot.slane %v321, 2
      %v696 = vsel %vm499, %v693, %v695
      %v699 = vpack.c.bf16 %v696, %v694
      %701 = vrot.lane.b32.xlu0 %v557, 20
      %v702 = vpop.permute.xlu0 %701
      %703 = vrot.lane.b32.xlu0 %v558, 20
      %v704 = vpop.permute.xlu0 %703
      %705 = vrot.lane.b32.xlu0 %v559, 20
      %v706 = vpop.permute.xlu0 %705
      %707 = vrot.lane.b32.xlu0 %v560, 20
      %v708 = vpop.permute.xlu0 %707
      %709 = vrot.lane.b32.xlu0 %v561, 20
      %v710 = vpop.permute.xlu0 %709
      %711 = vrot.lane.b32.xlu0 %v562, 20
      %v712 = vpop.permute.xlu0 %711
      %713 = vrot.lane.b32.xlu0 %v563, 20
      %v714 = vpop.permute.xlu0 %713
      %715 = vrot.lane.b32.xlu0 %v699, 20
      %v716 = vpop.permute.xlu0 %715
      %vm725 = vcmask 195744
      %726 = vst.msk [vmem:[#allocation2] sm:$0xff] %vm725, %v702
      %727 = vst.msk [vmem:[#allocation2 + $0x8] sm:$0xff] %vm725, %v704
      %728 = vst.msk [vmem:[#allocation2 + $0x10] sm:$0xff] %vm725, %v706
      %729 = vst.msk [vmem:[#allocation2 + $0x18] sm:$0xff] %vm725, %v708
      %730 = vst.msk [vmem:[#allocation2 + $0x20] sm:$0xff] %vm725, %v710
      %731 = vst.msk [vmem:[#allocation2 + $0x28] sm:$0xff] %vm725, %v712
      %732 = vst.msk [vmem:[#allocation2 + $0x30] sm:$0xff] %vm725, %v714
      %733 = vst.msk [vmem:[#allocation2 + $0x38] sm:$0xff] %vm725, %v716
      %v734 = vpack.c.bf16 %v350, %v349
      %736 = vrot.lane.b32.xlu0 %v354, 24
      %v737 = vpop.permute.xlu0 %736
      %738 = vrot.lane.b32.xlu0 %v355, 24
      %v739 = vpop.permute.xlu0 %738
      %740 = vrot.lane.b32.xlu0 %v356, 24
      %v741 = vpop.permute.xlu0 %740
      %742 = vrot.lane.b32.xlu0 %v357, 24
      %v743 = vpop.permute.xlu0 %742
      %744 = vrot.lane.b32.xlu0 %v358, 24
      %v745 = vpop.permute.xlu0 %744
      %746 = vrot.lane.b32.xlu0 %v359, 24
      %v747 = vpop.permute.xlu0 %746
      %748 = vrot.lane.b32.xlu0 %v605, 24
      %v749 = vpop.permute.xlu0 %748
      %750 = vrot.lane.b32.xlu0 %v734, 24
      %v751 = vpop.permute.xlu0 %750
      %vm760 = vcmask 228544
      %761 = vst.msk [vmem:[#allocation2] sm:$0xff] %vm760, %v737
      %762 = vst.msk [vmem:[#allocation2 + $0x8] sm:$0xff] %vm760, %v739
      %763 = vst.msk [vmem:[#allocation2 + $0x10] sm:$0xff] %vm760, %v741
      %764 = vst.msk [vmem:[#allocation2 + $0x18] sm:$0xff] %vm760, %v743
      %765 = vst.msk [vmem:[#allocation2 + $0x20] sm:$0xff] %vm760, %v745
      %766 = vst.msk [vmem:[#allocation2 + $0x28] sm:$0xff] %vm760, %v747
      %767 = vst.msk [vmem:[#allocation2 + $0x30] sm:$0xff] %vm760, %v749
      %768 = vst.msk [vmem:[#allocation2 + $0x38] sm:$0xff] %vm760, %v751
      %v772 = vrot.slane %v349, 1
      %v773 = vrot.slane %v350, 1
      %v774 = vsel %vm393, %v772, %v773
      %v775 = vrot.slane %v351, 1
      %v776 = vsel %vm393, %v773, %v775
      %v779 = vpack.c.bf16 %v776, %v774
      %781 = vrot.lane.b32.xlu0 %v452, 28
      %v782 = vpop.permute.xlu0 %781
      %783 = vrot.lane.b32.xlu0 %v453, 28
      %v784 = vpop.permute.xlu0 %783
      %785 = vrot.lane.b32.xlu0 %v454, 28
      %v786 = vpop.permute.xlu0 %785
      %787 = vrot.lane.b32.xlu0 %v455, 28
      %v788 = vpop.permute.xlu0 %787
      %789 = vrot.lane.b32.xlu0 %v456, 28
      %v790 = vpop.permute.xlu0 %789
      %791 = vrot.lane.b32.xlu0 %v457, 28
      %v792 = vpop.permute.xlu0 %791
      %793 = vrot.lane.b32.xlu0 %v657, 28
      %v794 = vpop.permute.xlu0 %793
      %795 = vrot.lane.b32.xlu0 %v779, 28
      %v796 = vpop.permute.xlu0 %795
      %vm805 = vcmask 261344
      %806 = vst.msk [vmem:[#allocation2] sm:$0xff] %vm805, %v782
      %807 = vst.msk [vmem:[#allocation2 + $0x8] sm:$0xff] %vm805, %v784
      %808 = vst.msk [vmem:[#allocation2 + $0x10] sm:$0xff] %vm805, %v786
      %809 = vst.msk [vmem:[#allocation2 + $0x18] sm:$0xff] %vm805, %v788
      %810 = vst.msk [vmem:[#allocation2 + $0x20] sm:$0xff] %vm805, %v790
      %811 = vst.msk [vmem:[#allocation2 + $0x28] sm:$0xff] %vm805, %v792
      %812 = vst.msk [vmem:[#allocation2 + $0x30] sm:$0xff] %vm805, %v794
      %813 = vst.msk [vmem:[#allocation2 + $0x38] sm:$0xff] %vm805, %v796
      %v814 = vrot.slane %v349, 2
      %v815 = vrot.slane %v350, 2
      %v816 = vsel %vm499, %v814, %v815
      %v817 = vrot.slane %v351, 2
      %v818 = vsel %vm499, %v815, %v817
      %v821 = vpack.c.bf16 %v818, %v816
      %823 = vrot.lane.b32.xlu0 %v558, 32
      %v824 = vpop.permute.xlu0 %823
      %825 = vrot.lane.b32.xlu0 %v559, 32
      %v826 = vpop.permute.xlu0 %825
      %827 = vrot.lane.b32.xlu0 %v560, 32
      %v828 = vpop.permute.xlu0 %827
      %829 = vrot.lane.b32.xlu0 %v561, 32
      %v830 = vpop.permute.xlu0 %829
      %831 = vrot.lane.b32.xlu0 %v562, 32
      %v832 = vpop.permute.xlu0 %831
      %833 = vrot.lane.b32.xlu0 %v563, 32
      %v834 = vpop.permute.xlu0 %833
      %835 = vrot.lane.b32.xlu0 %v699, 32
      %v836 = vpop.permute.xlu0 %835
      %837 = vrot.lane.b32.xlu0 %v821, 32
      %v838 = vpop.permute.xlu0 %837
      %vm847 = vcmask 294144
      %848 = vst.msk [vmem:[#allocation2] sm:$0xff] %vm847, %v824
      %849 = vst.msk [vmem:[#allocation2 + $0x8] sm:$0xff] %vm847, %v826
      %850 = vst.msk [vmem:[#allocation2 + $0x10] sm:$0xff] %vm847, %v828
      %851 = vst.msk [vmem:[#allocation2 + $0x18] sm:$0xff] %vm847, %v830
      %852 = vst.msk [vmem:[#allocation2 + $0x20] sm:$0xff] %vm847, %v832
      %853 = vst.msk [vmem:[#allocation2 + $0x28] sm:$0xff] %vm847, %v834
      %854 = vst.msk [vmem:[#allocation2 + $0x30] sm:$0xff] %vm847, %v836
      %855 = vst.msk [vmem:[#allocation2 + $0x38] sm:$0xff] %vm847, %v838
      %vm856 = vcmask 1047840
      %857 = vst.msk [vmem:[#allocation2] sm:$0xff] %vm856, 0
      %858 = vst.msk [vmem:[#allocation2 + $0x8] sm:$0xff] %vm856, 0
      %859 = vst.msk [vmem:[#allocation2 + $0x10] sm:$0xff] %vm856, 0
      %860 = vst.msk [vmem:[#allocation2 + $0x18] sm:$0xff] %vm856, 0
      %861 = vst.msk [vmem:[#allocation2 + $0x20] sm:$0xff] %vm856, 0
      %862 = vst.msk [vmem:[#allocation2 + $0x28] sm:$0xff] %vm856, 0
      %863 = vst.msk [vmem:[#allocation2 + $0x30] sm:$0xff] %vm856, 0
      %864 = vst.msk [vmem:[#allocation2 + $0x38] sm:$0xff] %vm856, 0
      %v865 = vld [vmem:[#allocation2] sm:$0xff]
      %v866 = vld [vmem:[#allocation2 + $0x8] sm:$0xff]
      %v867 = vld [vmem:[#allocation2 + $0x10] sm:$0xff]
      %v868 = vld [vmem:[#allocation2 + $0x18] sm:$0xff]
      %v869 = vld [vmem:[#allocation2 + $0x20] sm:$0xff]
      %v870 = vld [vmem:[#allocation2 + $0x28] sm:$0xff]
      %v871 = vld [vmem:[#allocation2 + $0x30] sm:$0xff]
      %v872 = vld [vmem:[#allocation2 + $0x38] sm:$0xff]
      %v873 = vld [vmem:[%s3] sm:$0xf]
      %v874 = vld [vmem:[%s3 + $0x4] sm:$0xf]
      %v875 = vld [vmem:[%s3 + $0x8] sm:$0xf]
      %v876 = vld [vmem:[%s3 + $0xc] sm:$0xf]
      %v877 = vld [vmem:[%s3 + $0x10] sm:$0xf]
      %v878 = vld [vmem:[%s3 + $0x14] sm:$0xf]
      %v879 = vld [vmem:[%s3 + $0x18] sm:$0xf]
      %v880 = vld [vmem:[%s3 + $0x1c] sm:$0xf]
      %v881 = vld [vmem:[%s3 + $0x20] sm:$0xf]
      %v882 = vld [vmem:[%s3 + $0x24] sm:$0xf]
      %v883 = vld [vmem:[%s3 + $0x28] sm:$0xf]
      %v884 = vld [vmem:[%s3 + $0x2c] sm:$0xf]
      %v885 = vld [vmem:[%s3 + $0x30] sm:$0xf]
      %v886 = vld [vmem:[%s3 + $0x34] sm:$0xf]
      %v887 = vld [vmem:[%s3 + $0x38] sm:$0xf]
      %v888 = vld [vmem:[%s3 + $0x3c] sm:$0xf]
      %v905 = vunpack.c.l.b16 %v873
      %v906 = vunpack.c.l.b16 %v874
      %v907 = vunpack.c.l.b16 %v875
      %v908 = vunpack.c.l.b16 %v876
      %v909 = vunpack.c.l.b16 %v877
      %v910 = vunpack.c.l.b16 %v878
      %v911 = vunpack.c.l.b16 %v879
      %v912 = vunpack.c.l.b16 %v880
      %v913 = vunpack.c.l.b16 %v881
      %v914 = vunpack.c.l.b16 %v882
      %v915 = vunpack.c.l.b16 %v883
      %v916 = vunpack.c.l.b16 %v884
      %v917 = vunpack.c.l.b16 %v885
      %v918 = vunpack.c.l.b16 %v886
      %v919 = vunpack.c.l.b16 %v887
      %v920 = vunpack.c.l.b16 %v888
      %v921 = vpack.c.b16 %v906, %v905
      %v922 = vpack.c.b16 %v908, %v907
      %v923 = vpack.c.b16 %v910, %v909
      %v924 = vpack.c.b16 %v912, %v911
      %v925 = vpack.c.b16 %v914, %v913
      %v926 = vpack.c.b16 %v916, %v915
      %v927 = vpack.c.b16 %v918, %v917
      %v928 = vpack.c.b16 %v920, %v919
      %937 = vmatprep.subr.bf16.mxu0 0
      %938 = vmatpush1.bf16.msra.mxu0 %v921
      %939 = vmatprep.subr.bf16.mxu0 0
      %940 = vmatpush1.bf16.msra.mxu0 %v922
      %941 = vmatprep.subr.bf16.mxu0 0
      %942 = vmatpush1.bf16.msra.mxu0 %v923
      %943 = vmatprep.subr.bf16.mxu0 0
      %944 = vmatpush1.bf16.msra.mxu0 %v924
      %945 = vmatprep.subr.bf16.mxu0 0
      %946 = vmatpush1.bf16.msra.mxu0 %v925
      %947 = vmatprep.subr.bf16.mxu0 0
      %948 = vmatpush1.bf16.msra.mxu0 %v926
      %949 = vmatprep.subr.bf16.mxu0 0
      %950 = vmatpush1.bf16.msra.mxu0 %v927
      %951 = vmatprep.subr.bf16.mxu0 0
      %952 = vmatpush1.bf16.msra.mxu0 %v928
      %953 = vmatprep.subr.bf16.mxu0 0
      %954 = vmatpush1.bf16.msra.mxu0 0
      %955 = vmatprep.subr.bf16.mxu0 0
      %956 = vmatpush1.bf16.msra.mxu0 0
      %957 = vmatprep.subr.bf16.mxu0 0
      %958 = vmatpush1.bf16.msra.mxu0 0
      %959 = vmatprep.subr.bf16.mxu0 0
      %960 = vmatpush1.bf16.msra.mxu0 0
      %961 = vmatprep.subr.bf16.mxu0 0
      %962 = vmatpush1.bf16.msra.mxu0 0
      %963 = vmatprep.subr.bf16.mxu0 0
      %964 = vmatpush1.bf16.msra.mxu0 0
      %965 = vmatprep.subr.bf16.mxu0 0
      %966 = vmatpush1.bf16.msra.mxu0 0
      %967 = vmatprep.subr.bf16.mxu0 0
      %968 = vmatpush1.bf16.msra.mxu0 0
      %969 = vmatprep.mubr.bf16.mxu0 0
      %970 = vmatmul.mubr.bf16.gmra.mrb[0].mxu0 %v865
      %v971 = vpop.f32.mrb[0].mxu0
      %v972 = vadd.f32 0.0, %v971
      %v973 = vpop.f32.mrb[0].mxu0
      %v974 = vpop.f32.mrb[0].mxu0
      %v975 = vadd.f32 0.0, %v974
      %v976 = vpop.f32.mrb[0].mxu0
      %977 = vmatprep.mubr.bf16.mxu0 0
      %978 = vmatmul.mubr.bf16.gmra.mrb[0].mxu0 %v866
      %v979 = vpop.f32.mrb[0].mxu0
      %v980 = vadd.f32 0.0, %v979
      %v981 = vpop.f32.mrb[0].mxu0
      %v982 = vpop.f32.mrb[0].mxu0
      %v983 = vadd.f32 0.0, %v982
      %v984 = vpop.f32.mrb[0].mxu0
      %985 = vmatprep.mubr.bf16.mxu0 0
      %986 = vmatmul.mubr.bf16.gmra.mrb[0].mxu0 %v867
      %v987 = vpop.f32.mrb[0].mxu0
      %v988 = vadd.f32 0.0, %v987
      %v989 = vpop.f32.mrb[0].mxu0
      %v990 = vpop.f32.mrb[0].mxu0
      %v991 = vadd.f32 0.0, %v990
      %v992 = vpop.f32.mrb[0].mxu0
      %993 = vmatprep.mubr.bf16.mxu0 0
      %994 = vmatmul.mubr.bf16.gmra.mrb[0].mxu0 %v868
      %v995 = vpop.f32.mrb[0].mxu0
      %v996 = vadd.f32 0.0, %v995
      %v997 = vpop.f32.mrb[0].mxu0
      %v998 = vpop.f32.mrb[0].mxu0
      %v999 = vadd.f32 0.0, %v998
      %v1000 = vpop.f32.mrb[0].mxu0
      %1001 = vmatprep.mubr.bf16.mxu0 0
      %1002 = vmatmul.mubr.bf16.gmra.mrb[0].mxu0 %v869
      %v1003 = vpop.f32.mrb[0].mxu0
      %v1004 = vadd.f32 0.0, %v1003
      %v1005 = vpop.f32.mrb[0].mxu0
      %v1006 = vpop.f32.mrb[0].mxu0
      %v1007 = vadd.f32 0.0, %v1006
      %v1008 = vpop.f32.mrb[0].mxu0
      %1009 = vmatprep.mubr.bf16.mxu0 0
      %1010 = vmatmul.mubr.bf16.gmra.mrb[0].mxu0 %v870
      %v1011 = vpop.f32.mrb[0].mxu0
      %v1012 = vadd.f32 0.0, %v1011
      %v1013 = vpop.f32.mrb[0].mxu0
      %v1014 = vpop.f32.mrb[0].mxu0
      %v1015 = vadd.f32 0.0, %v1014
      %v1016 = vpop.f32.mrb[0].mxu0
      %1017 = vmatprep.mubr.bf16.mxu0 0
      %1018 = vmatmul.mubr.bf16.gmra.mrb[0].mxu0 %v871
      %v1019 = vpop.f32.mrb[0].mxu0
      %v1020 = vadd.f32 0.0, %v1019
      %v1021 = vpop.f32.mrb[0].mxu0
      %v1022 = vpop.f32.mrb[0].mxu0
      %v1023 = vadd.f32 0.0, %v1022
      %v1024 = vpop.f32.mrb[0].mxu0
      %1025 = vmatprep.mubr.bf16.mxu0 0
      %1026 = vmatmul.mubr.bf16.gmra.mrb[0].mxu0 %v872
      %v1027 = vpop.f32.mrb[0].mxu0
      %v1028 = vadd.f32 0.0, %v1027
      %v1029 = vpop.f32.mrb[0].mxu0
      %v1030 = vpop.f32.mrb[0].mxu0
      %v1031 = vadd.f32 0.0, %v1030
      %v1032 = vpop.f32.mrb[0].mxu0
      %1033 = vdwg.mxu0
      %p1034 = scmp.eq.s32.totalorder %s23, 0
      // Predicated region
      $region37: #{unet_conv_block.3} parent=35 // pred_check
        %p1035 = pneg %p1034
      $region38: #{unet_conv_block.3} parent=35 // pred_check_branch
        %1037 = sbr.rel (%p1035) target = $region40
      $region39: #{unet_conv_block.3} parent=35 // pred_region
        %1038 = vst [vmem:[%s290] sm:$0x1] 0.0
        %1039 = vst [vmem:[%s293] sm:$0x1] 0.0
      $region40: #{unet_conv_block.3} parent=35 // pred_fallthru
        _
      %v1040 = vld [vmem:[%s290] sm:$0x1]
      %v1041 = vadd.f32 %v972, %v975
      %v1042 = vadd.f32 %v1041, %v980
      %v1043 = vadd.f32 %v1042, %v983
      %v1044 = vadd.f32 %v1043, %v988
      %v1045 = vadd.f32 %v1044, %v991
      %v1046 = vadd.f32 %v1045, %v996
      %v1047 = vadd.f32 %v1046, %v999
      %v1048 = vadd.f32 %v1047, %v1004
      %v1049 = vadd.f32 %v1048, %v1007
      %v1050 = vadd.f32 %v1049, %v1012
      %v1051 = vadd.f32 %v1050, %v1015
      %v1052 = vadd.f32 %v1051, %v1020
      %v1053 = vadd.f32 %v1052, %v1023
      %v1054 = vadd.f32 %v1053, %v1028
      %v1055 = vadd.f32 %v1054, %v1031
      %v1056 = vrot.slane %v1055, 4
      %v1057 = vadd.f32 %v1055, %v1056
      %v1058 = vrot.slane %v1057, 2
      %v1059 = vadd.f32 %v1057, %v1058
      %v1060 = vrot.slane %v1059, 1
      %v1061 = vadd.f32 %v1059, %v1060
      %v1062 = vadd.f32 %v1040, %v1061
      %1063 = vst [vmem:[%s290] sm:$0x1] %v1062
      %v1064 = vld [vmem:[%s293] sm:$0x1]
      %v1065 = vmul.f32 %v972, %v972
      %v1066 = vmul.f32 %v975, %v975
      %v1067 = vmul.f32 %v980, %v980
      %v1068 = vmul.f32 %v983, %v983
      %v1069 = vmul.f32 %v988, %v988
      %v1070 = vmul.f32 %v991, %v991
      %v1071 = vmul.f32 %v996, %v996
      %v1072 = vmul.f32 %v999, %v999
      %v1073 = vmul.f32 %v1004, %v1004
      %v1074 = vmul.f32 %v1007, %v1007
      %v1075 = vmul.f32 %v1012, %v1012
      %v1076 = vmul.f32 %v1015, %v1015
      %v1077 = vmul.f32 %v1020, %v1020
      %v1078 = vmul.f32 %v1023, %v1023
      %v1079 = vmul.f32 %v1028, %v1028
      %v1080 = vmul.f32 %v1031, %v1031
      %v1081 = vadd.f32 %v1065, %v1066
      %v1082 = vadd.f32 %v1081, %v1067
      %v1083 = vadd.f32 %v1082, %v1068
      %v1084 = vadd.f32 %v1083, %v1069
      %v1085 = vadd.f32 %v1084, %v1070
      %v1086 = vadd.f32 %v1085, %v1071
      %v1087 = vadd.f32 %v1086, %v1072
      %v1088 = vadd.f32 %v1087, %v1073
      %v1089 = vadd.f32 %v1088, %v1074
      %v1090 = vadd.f32 %v1089, %v1075
      %v1091 = vadd.f32 %v1090, %v1076
      %v1092 = vadd.f32 %v1091, %v1077
      %v1093 = vadd.f32 %v1092, %v1078
      %v1094 = vadd.f32 %v1093, %v1079
      %v1095 = vadd.f32 %v1094, %v1080
      %v1096 = vrot.slane %v1095, 4
      %v1097 = vadd.f32 %v1095, %v1096
      %v1098 = vrot.slane %v1097, 2
      %v1099 = vadd.f32 %v1097, %v1098
      %v1100 = vrot.slane %v1099, 1
      %v1101 = vadd.f32 %v1099, %v1100
      %v1102 = vadd.f32 %v1064, %v1101
      %1103 = vst [vmem:[%s293] sm:$0x1] %v1102
      %1104 = vst [vmem:[%s286 + $0x1] sm:$0xff] %v972
      %1105 = vst [vmem:[%s286 + $0x9] sm:$0xff] %v975
      %1106 = vst [vmem:[%s286 + $0x19] sm:$0xff] %v980
      %1107 = vst [vmem:[%s286 + $0x21] sm:$0xff] %v983
      %1108 = vst [vmem:[%s286 + $0x31] sm:$0xff] %v988
      %1109 = vst [vmem:[%s286 + $0x39] sm:$0xff] %v991
      %1110 = vst [vmem:[%s286 + $0x49] sm:$0xff] %v996
      %1111 = vst [vmem:[%s286 + $0x51] sm:$0xff] %v999
      %1112 = vst [vmem:[%s286 + $0x61] sm:$0xff] %v1004
      %1113 = vst [vmem:[%s286 + $0x69] sm:$0xff] %v1007
      %1114 = vst [vmem:[%s286 + $0x79] sm:$0xff] %v1012
      %1115 = vst [vmem:[%s286 + $0x81] sm:$0xff] %v1015
      %1116 = vst [vmem:[%s286 + $0x91] sm:$0xff] %v1020
      %1117 = vst [vmem:[%s286 + $0x99] sm:$0xff] %v1023
      %1118 = vst [vmem:[%s286 + $0xa9] sm:$0xff] %v1028
      %1119 = vst [vmem:[%s286 + $0xb1] sm:$0xff] %v1031
      %1120 = vst [vmem:[%s286] sm:$0x1] 0.0
      %1121 = vst [vmem:[%s286 + $0x18] sm:$0x1] 0.0
      %1122 = vst [vmem:[%s286 + $0x30] sm:$0x1] 0.0
      %1123 = vst [vmem:[%s286 + $0x48] sm:$0x1] 0.0
      %1124 = vst [vmem:[%s286 + $0x60] sm:$0x1] 0.0
      %1125 = vst [vmem:[%s286 + $0x78] sm:$0x1] 0.0
      %1126 = vst [vmem:[%s286 + $0x90] sm:$0x1] 0.0
      %1127 = vst [vmem:[%s286 + $0xa8] sm:$0x1] 0.0
      %1128 = vst [vmem:[%s286 + $0x11] sm:$0x1] 0.0
      %1129 = vst [vmem:[%s286 + $0x29] sm:$0x1] 0.0
      %1130 = vst [vmem:[%s286 + $0x41] sm:$0x1] 0.0
      %1131 = vst [vmem:[%s286 + $0x59] sm:$0x1] 0.0
      %1132 = vst [vmem:[%s286 + $0x71] sm:$0x1] 0.0
      %1133 = vst [vmem:[%s286 + $0x89] sm:$0x1] 0.0
      %1134 = vst [vmem:[%s286 + $0xa1] sm:$0x1] 0.0
      %1135 = vst [vmem:[%s286 + $0xb9] sm:$0x1] 0.0
      %s1136 = smul.u32 8, %s23
      %p1137 = scmp.lt.s32.totalorder %s22, 1
      %s1138 = scalar_select %p1137, %s22, 1
      %p1139 = scmp.lt.s32.totalorder %s1136, 15
      %s1140 = scalar_select %p1139, %s1136, 15
      %s1141 = smul.addr %s1140, 3
      %s1142 = smul.addr %s1138, 48
      %s1143 = sadd.s32 %s1141, %s1142
      %s1144 = smul.addr %s1143, 8
      %s1145 = scalar_lea.vmem %s4, %s1144
      %p1146 = scmp.lt.s32.totalorder %s22, 1
      %s1147 = scalar_select %p1146, %s22, 1
      %s1148 = scalar_lea.vmem %s5, %s1147
      %p1149 = scmp.lt.s32.totalorder %s22, 1
      %s1150 = scalar_select %p1149, %s22, 1
      %s1151 = scalar_lea.vmem %s6, %s1150
      // Predicated region
      $region41: #{unet_conv_block.3} parent=35 // pred_check
        %p1152 = pneg %p139
      $region42: #{unet_conv_block.3} parent=35 // pred_check_branch
        %1154 = sbr.rel (%p1152) target = $region44
      $region43: #{unet_conv_block.3} parent=35 // pred_region
        %s1155 = smul.u32 8, %s23
      $region44: #{unet_conv_block.3} parent=35 // pred_fallthru
        _
      // Predicated region
      $region45: #{unet_conv_block.3} parent=35 // pred_check
        %p1156 = pneg %p165
      $region46: #{unet_conv_block.3} parent=35 // pred_check_branch
        %1158 = sbr.rel (%p1156) target = $region48
      $region47: #{unet_conv_block.3} parent=35 // pred_region
        _
      $region48: #{unet_conv_block.3} parent=35 // pred_fallthru
        _
      // Predicated region
      $region49: #{unet_conv_block.3} parent=35 // pred_check
        %p1159 = pneg %p191
      $region50: #{unet_conv_block.3} parent=35 // pred_check_branch
        %1161 = sbr.rel (%p1159) target = $region52
      $region51: #{unet_conv_block.3} parent=35 // pred_region
        _
      $region52: #{unet_conv_block.3} parent=35 // pred_fallthru
        _
    $region36: #{unet_conv_block.3} parent=5 // pred_fallthru
      _
    %p1162 = scmp.le.s32.totalorder 2, %s13
    // Predicated region
    $region53: #{unet_conv_block.3} parent=5 // pred_check
      %p1163 = pneg %p1162
    $region54: #{unet_conv_block.3} parent=5 // pred_check_branch
      %1165 = sbr.rel (%p1163) target = $region56
    $region55: #{unet_conv_block.3} parent=5 // pred_region
      %s1166 = ssub.s32 %s13, 2
      // Predicated region
      $region57: #{unet_conv_block.3} parent=55 // pred_check
        %p1167 = pneg %p145
      $region58: #{unet_conv_block.3} parent=55 // pred_check_branch
        %1169 = sbr.rel (%p1167) target = $region60
      $region59: #{unet_conv_block.3} parent=55 // pred_region
        %s1170 = smul.u32 8, %s25
        %p1171 = scmp.lt.s32.totalorder %s24, 1
        %s1172 = scalar_select %p1171, %s24, 1
        %p1173 = scmp.lt.s32.totalorder %s1170, 15
        %s1174 = scalar_select %p1173, %s1170, 15
        %s1175 = smul.addr %s1174, 3
        %s1176 = smul.addr %s1172, 48
        %s1177 = sadd.s32 %s1175, %s1176
        %s1178 = smul.addr %s1177, 8
        %s1179 = scalar_lea.vmem %s4, %s1178
      $region60: #{unet_conv_block.3} parent=55 // pred_fallthru
        _
      // Predicated region
      $region61: #{unet_conv_block.3} parent=55 // pred_check
        %p1180 = pneg %p171
      $region62: #{unet_conv_block.3} parent=55 // pred_check_branch
        %1182 = sbr.rel (%p1180) target = $region64
      $region63: #{unet_conv_block.3} parent=55 // pred_region
        %p1183 = scmp.lt.s32.totalorder %s24, 1
        %s1184 = scalar_select %p1183, %s24, 1
        %s1185 = scalar_lea.vmem %s5, %s1184
      $region64: #{unet_conv_block.3} parent=55 // pred_fallthru
        _
      // Predicated region
      $region65: #{unet_conv_block.3} parent=55 // pred_check
        %p1186 = pneg %p197
      $region66: #{unet_conv_block.3} parent=55 // pred_check_branch
        %1188 = sbr.rel (%p1186) target = $region68
      $region67: #{unet_conv_block.3} parent=55 // pred_region
        %p1189 = scmp.lt.s32.totalorder %s24, 1
        %s1190 = scalar_select %p1189, %s24, 1
        %s1191 = scalar_lea.vmem %s6, %s1190
      $region68: #{unet_conv_block.3} parent=55 // pred_fallthru
        _
    $region56: #{unet_conv_block.3} parent=5 // pred_fallthru
      _
  $region6: #{unet_conv_block.3} parent=0 // loop_footer
    %s17 = sadd.s32 1, %s13
  $region7: #{unet_conv_block.3} parent=0 // loop_footer_branch
    %12 = sbr.rel target = $region3
  $region8: #{unet_conv_block.3} parent=0 // loop_exit
    _

// kernel: unet_conv_block.4
$region0: #{unet_conv_block.4}
  #allocation0 [shape = 'u32[]', space=smem, size = 0x4, offset = 0x4, fixed_abs, tag = 'smem constant byte address 0x4 - core index']
  #allocation1 [shape = 'u32[144,128]{1,0:T(1,128)}', space=vmem, size = 0x12000, scoped, tag = 'internal scratch']
  #allocation2 [shape = 'bf16[128,1152]{1,0:T(16,128)(2,1)}', space=vmem, size = 0x48000, scoped, tag = 'scratch operand']
  %s0 = inlined_call_operand.vmem [shape: f32[2,16,18,128], index: 0, kind: input, shape index: {}]
  %s1 = inlined_call_operand.vmem [shape: f32[1,128], index: 1, kind: input, shape index: {}]
  %s2 = inlined_call_operand.vmem [shape: f32[1,128], index: 2, kind: input, shape index: {}]
  %s3 = inlined_call_operand.vmem [shape: bf16[1152,128], index: 3, kind: input, shape index: {}]
  %s4 = inlined_call_operand.vmem [shape: f32[2,16,18,128], index: 4, kind: output, shape index: {0}]
  %s5 = inlined_call_operand.vmem [shape: f32[2,1,128], index: 5, kind: output, shape index: {1}]
  %s6 = inlined_call_operand.vmem [shape: f32[2,1,128], index: 6, kind: output, shape index: {2}]
  %7 = xla_tuple %s4, %s5, %s6
  %s8 = sld [smem:[#allocation0]]
  $region69: #{unet_conv_block.4} parent=0
    _
  %s10 = ssub.s32 1, %s8
  %s11 = scalar_select 0, %s10, %s8
  loop: start=0, step=1, limit=6
  $region2: #{unet_conv_block.4} parent=0 // loop_pre_header
    _
  $region3: #{unet_conv_block.4} parent=0 // loop_header
    %s13 = sphi 0, %s17
    %p14 = scmp.ge.s32.totalorder %s13, 6
    %s20 = sphi 0, %s32
    %s21 = sphi 0, %s28
    %s22 = sphi 0, %s20
    %s23 = sphi 0, %s21
    %s24 = sphi 0, %s22
    %s25 = sphi 0, %s23
    %s35 = sphi 0, %s37
    %s38 = sphi 0, %s35
    %s39 = sphi 0, %s38
    %s55 = sphi 0, %s39
    %s59 = sphi 0, %s59
    %s61 = sphi 0, %s59
    %s62 = sphi 0, %s61
    %s76 = sphi 0, %s62
    %s80 = sphi 0, %s80
    %s82 = sphi 0, %s80
    %s83 = sphi 0, %s82
    %s97 = sphi 0, %s83
    %s101 = sphi 0, %s101
    %s103 = sphi 0, %s101
    %s104 = sphi 0, %s103
    %s118 = sphi 0, %s104
    %s126 = sphi 0, %s128
    %s129 = sphi 0, %s126
    %s130 = sphi 0, %s129
    %s146 = sphi 0, %s130
    %s152 = sphi 0, %s154
    %s155 = sphi 0, %s152
    %s156 = sphi 0, %s155
    %s172 = sphi 0, %s156
    %s178 = sphi 0, %s180
    %s181 = sphi 0, %s178
    %s182 = sphi 0, %s181
    %s198 = sphi 0, %s182
  $region4: #{unet_conv_block.4} parent=0 // loop_header_branch
    %16 = sbr.rel (%p14) target = $region8
  $region5: #{unet_conv_block.4} parent=0 // loop_body
    %s18 = ssub.s32 %s13, 1
    %s19 = ssub.s32 %s13, 2
    %s26 = sadd.s32 1, %s21
    %p27 = scmp.ge.s32.totalorder %s26, 2
    %s28 = scalar_select %p27, 0, %s26
    %s29 = sadd.s32 1, %s20
    %s30 = scalar_select %p27, %s29, %s20
    %p31 = scmp.ge.s32.totalorder %s30, 2
    %s32 = scalar_select %p31, 0, %s30
    %s33 = ssub.s32 %s20, %s32
    %p34 = scmp.eq.s32.totalorder %s33, 0
    %s36 = sadd.s32 %s35, 1
    %s37 = scalar_select %p34, %s35, %s36
    %p40 = pneg %p34
    %p41 = scmp.eq.s32.totalorder %s13, 3
    %p42 = por %p40, %p41
    %p43 = scmp.ne.s32.totalorder %s35, %s38
    %p44 = scmp.eq.s32.totalorder %s13, 0
    %p45 = por %p43, %p44
    %p46 = scmp.ne.s32.totalorder %s35, %s38
    %p47 = scmp.eq.s32.totalorder %s18, 3
    %p48 = por %p46, %p47
    %p49 = scmp.ne.s32.totalorder %s38, %s39
    %p50 = scmp.eq.s32.totalorder %s18, 0
    %p51 = por %p49, %p50
    %p52 = scmp.ne.s32.totalorder %s38, %s39
    %p53 = scmp.eq.s32.totalorder %s19, 3
    %p54 = por %p52, %p53
    %p56 = scmp.ne.s32.totalorder %s39, %s55
    %p57 = scmp.eq.s32.totalorder %s19, 0
    %p58 = por %p56, %p57
    %s60 = sadd.s32 %s59, 1
    %p63 = scmp.eq.s32.totalorder %s13, 3
    %p64 = scmp.ne.s32.totalorder %s59, %s61
    %p65 = scmp.eq.s32.totalorder %s13, 0
    %p66 = por %p64, %p65
    %p67 = scmp.ne.s32.totalorder %s59, %s61
    %p68 = scmp.eq.s32.totalorder %s18, 3
    %p69 = por %p67, %p68
    %p70 = scmp.ne.s32.totalorder %s61, %s62
    %p71 = scmp.eq.s32.totalorder %s18, 0
    %p72 = por %p70, %p71
    %p73 = scmp.ne.s32.totalorder %s61, %s62
    %p74 = scmp.eq.s32.totalorder %s19, 3
    %p75 = por %p73, %p74
    %p77 = scmp.ne.s32.totalorder %s62, %s76
    %p78 = scmp.eq.s32.totalorder %s19, 0
    %p79 = por %p77, %p78
    %s81 = sadd.s32 %s80, 1
    %p84 = scmp.eq.s32.totalorder %s13, 3
    %p85 = scmp.ne.s32.totalorder %s80, %s82
    %p86 = scmp.eq.s32.totalorder %s13, 0
    %p87 = por %p85, %p86
    %p88 = scmp.ne.s32.totalorder %s80, %s82
    %p89 = scmp.eq.s32.totalorder %s18, 3
    %p90 = por %p88, %p89
    %p91 = scmp.ne.s32.totalorder %s82, %s83
    %p92 = scmp.eq.s32.totalorder %s18, 0
    %p93 = por %p91, %p92
    %p94 = scmp.ne.s32.totalorder %s82, %s83
    %p95 = scmp.eq.s32.totalorder %s19, 3
    %p96 = por %p94, %p95
    %p98 = scmp.ne.s32.totalorder %s83, %s97
    %p99 = scmp.eq.s32.totalorder %s19, 0
    %p100 = por %p98, %p99
    %s102 = sadd.s32 %s101, 1
    %p105 = scmp.eq.s32.totalorder %s13, 3
    %p106 = scmp.ne.s32.totalorder %s101, %s103
    %p107 = scmp.eq.s32.totalorder %s13, 0
    %p108 = por %p106, %p107
    %p109 = scmp.ne.s32.totalorder %s101, %s103
    %p110 = scmp.eq.s32.totalorder %s18, 3
    %p111 = por %p109, %p110
    %p112 = scmp.ne.s32.totalorder %s103, %s104
    %p113 = scmp.eq.s32.totalorder %s18, 0
    %p114 = por %p112, %p113
    %p115 = scmp.ne.s32.totalorder %s103, %s104
    %p116 = scmp.eq.s32.totalorder %s19, 3
    %p117 = por %p115, %p116
    %p119 = scmp.ne.s32.totalorder %s104, %s118
    %p120 = scmp.eq.s32.totalorder %s19, 0
    %p121 = por %p119, %p120
    %s122 = ssub.s32 %s20, %s32
    %s123 = ssub.s32 %s21, %s28
    %s124 = sor.u32 %s122, %s123
    %p125 = scmp.eq.s32.totalorder %s124, 0
    %s127 = sadd.s32 %s126, 1
    %s128 = scalar_select %p125, %s126, %s127
    %p131 = pneg %p125
    %p132 = scmp.eq.s32.totalorder %s13, 3
    %p133 = por %p131, %p132
    %p134 = scmp.ne.s32.totalorder %s126, %s129
    %p135 = scmp.eq.s32.totalorder %s13, 0
    %p136 = por %p134, %p135
    %p137 = scmp.ne.s32.totalorder %s126, %s129
    %p138 = scmp.eq.s32.totalorder %s18, 3
    %p139 = por %p137, %p138
    %p140 = scmp.ne.s32.totalorder %s129, %s130
    %p141 = scmp.eq.s32.totalorder %s18, 0
    %p142 = por %p140, %p141
    %p143 = scmp.ne.s32.totalorder %s129, %s130
    %p144 = scmp.eq.s32.totalorder %s19, 3
    %p145 = por %p143, %p144
    %p147 = scmp.ne.s32.totalorder %s130, %s146
    %p148 = scmp.eq.s32.totalorder %s19, 0
    %p149 = por %p147, %p148
    %s150 = ssub.s32 %s20, %s32
    %p151 = scmp.eq.s32.totalorder %s150, 0
    %s153 = sadd.s32 %s152, 1
    %s154 = scalar_select %p151, %s152, %s153
    %p157 = pneg %p151
    %p158 = scmp.eq.s32.totalorder %s13, 3
    %p159 = por %p157, %p158
    %p160 = scmp.ne.s32.totalorder %s152, %s155
    %p161 = scmp.eq.s32.totalorder %s13, 0
    %p162 = por %p160, %p161
    %p163 = scmp.ne.s32.totalorder %s152, %s155
    %p164 = scmp.eq.s32.totalorder %s18, 3
    %p165 = por %p163, %p164
    %p166 = scmp.ne.s32.totalorder %s155, %s156
    %p167 = scmp.eq.s32.totalorder %s18, 0
    %p168 = por %p166, %p167
    %p169 = scmp.ne.s32.totalorder %s155, %s156
    %p170 = scmp.eq.s32.totalorder %s19, 3
    %p171 = por %p169, %p170
    %p173 = scmp.ne.s32.totalorder %s156, %s172
    %p174 = scmp.eq.s32.totalorder %s19, 0
    %p175 = por %p173, %p174
    %s176 = ssub.s32 %s20, %s32
    %p177 = scmp.eq.s32.totalorder %s176, 0
    %s179 = sadd.s32 %s178, 1
    %s180 = scalar_select %p177, %s178, %s179
    %p183 = pneg %p177
    %p184 = scmp.eq.s32.totalorder %s13, 3
    %p185 = por %p183, %p184
    %p186 = scmp.ne.s32.totalorder %s178, %s181
    %p187 = scmp.eq.s32.totalorder %s13, 0
    %p188 = por %p186, %p187
    %p189 = scmp.ne.s32.totalorder %s178, %s181
    %p190 = scmp.eq.s32.totalorder %s18, 3
    %p191 = por %p189, %p190
    %p192 = scmp.ne.s32.totalorder %s181, %s182
    %p193 = scmp.eq.s32.totalorder %s18, 0
    %p194 = por %p192, %p193
    %p195 = scmp.ne.s32.totalorder %s181, %s182
    %p196 = scmp.eq.s32.totalorder %s19, 3
    %p197 = por %p195, %p196
    %p199 = scmp.ne.s32.totalorder %s182, %s198
    %p200 = scmp.eq.s32.totalorder %s19, 0
    %p201 = por %p199, %p200
    %p202 = scmp.le.s32.totalorder 1, %s13
    %p203 = scmp.lt.s32.totalorder %s13, 5
    %p204 = pnand %p202, %p203
    %p205 = pneg %p204
    // Predicated region
    $region9: #{unet_conv_block.4} parent=5 // pred_check
      _
    $region10: #{unet_conv_block.4} parent=5 // pred_check_branch
      %207 = sbr.rel (%p204) target = $region12
    $region11: #{unet_conv_block.4} parent=5 // pred_region
      %s208 = ssub.s32 %s13, 1
      // Predicated region
      $region13: #{unet_conv_block.4} parent=11 // pred_check
        %p209 = pneg %p72
      $region14: #{unet_conv_block.4} parent=11 // pred_check_branch
        %211 = sbr.rel (%p209) target = $region16
      $region15: #{unet_conv_block.4} parent=11 // pred_region
        _
      $region16: #{unet_conv_block.4} parent=11 // pred_fallthru
        _
      // Predicated region
      $region17: #{unet_conv_block.4} parent=11 // pred_check
        %p212 = pneg %p93
      $region18: #{unet_conv_block.4} parent=11 // pred_check_branch
        %214 = sbr.rel (%p212) target = $region20
      $region19: #{unet_conv_block.4} parent=11 // pred_region
        _
      $region20: #{unet_conv_block.4} parent=11 // pred_fallthru
        _
      // Predicated region
      $region21: #{unet_conv_block.4} parent=11 // pred_check
        %p215 = pneg %p114
      $region22: #{unet_conv_block.4} parent=11 // pred_check_branch
        %217 = sbr.rel (%p215) target = $region24
      $region23: #{unet_conv_block.4} parent=11 // pred_region
        _
      $region24: #{unet_conv_block.4} parent=11 // pred_fallthru
        _
    $region12: #{unet_conv_block.4} parent=5 // pred_fallthru
      _
    %p218 = scmp.lt.s32.totalorder %s13, 4
    // Predicated region
    $region25: #{unet_conv_block.4} parent=5 // pred_check
      %p219 = pneg %p218
    $region26: #{unet_conv_block.4} parent=5 // pred_check_branch
      %221 = sbr.rel (%p219) target = $region28
    $region27: #{unet_conv_block.4} parent=5 // pred_region
      // Predicated region
      $region29: #{unet_conv_block.4} parent=27 // pred_check
        %p222 = pneg %p45
      $region30: #{unet_conv_block.4} parent=27 // pred_check_branch
        %224 = sbr.rel (%p222) target = $region32
      $region31: #{unet_conv_block.4} parent=27 // pred_region
        %p225 = scmp.lt.s32.totalorder %s20, 1
        %s226 = scalar_select %p225, %s20, 1
        %s227 = smul.addr %s226, 48
        %s228 = smul.addr %s227, 8
        %s229 = scalar_lea.vmem %s0, %s228
      $region32: #{unet_conv_block.4} parent=27 // pred_fallthru
        _
    $region28: #{unet_conv_block.4} parent=5 // pred_fallthru
      _
    %p230 = scmp.le.s32.totalorder 1, %s13
    %p231 = scmp.lt.s32.totalorder %s13, 5
    %p232 = pnand %p230, %p231
    %p233 = pneg %p232
    // Predicated region
    $region33: #{unet_conv_block.4} parent=5 // pred_check
      _
    $region34: #{unet_conv_block.4} parent=5 // pred_check_branch
      %235 = sbr.rel (%p232) target = $region36
    $region35: #{unet_conv_block.4} parent=5 // pred_region
      %s236 = ssub.s32 %s13, 1
      %p237 = scmp.lt.s32.totalorder %s22, 1
      %s238 = scalar_select %p237, %s22, 1
      %s239 = smul.addr %s238, 48
      %s240 = smul.addr %s239, 8
      %s241 = scalar_lea.vmem %s0, %s240
      %p242 = pneg %p51
      %p243 = pneg %p48
      %p244 = pneg %p72
      %p245 = pneg %p69
      %p246 = pneg %p93
      %p247 = pneg %p90
      %p248 = pneg %p114
      %p249 = pneg %p111
      %p250 = pneg %p142
      %p251 = pneg %p139
      %s252 = smul.u32 8, %s23
      %p253 = scmp.lt.s32.totalorder %s22, 1
      %s254 = scalar_select %p253, %s22, 1
      %p255 = scmp.lt.s32.totalorder %s252, 15
      %s256 = scalar_select %p255, %s252, 15
      %s257 = smul.addr %s256, 3
      %s258 = smul.addr %s254, 48
      %s259 = sadd.s32 %s257, %s258
      %s260 = smul.addr %s259, 8
      %s261 = scalar_lea.vmem %s4, %s260
      %p262 = pneg %p168
      %p263 = pneg %p165
      %p264 = scmp.lt.s32.totalorder %s22, 1
      %s265 = scalar_select %p264, %s22, 1
      %s266 = scalar_lea.vmem %s5, %s265
      %p267 = pneg %p194
      %p268 = pneg %p191
      %p269 = scmp.lt.s32.totalorder %s22, 1
      %s270 = scalar_select %p269, %s22, 1
      %s271 = scalar_lea.vmem %s6, %s270
      %p272 = scmp.lt.s32.totalorder %s22, 1
      %s273 = scalar_select %p272, %s22, 1
      %s274 = smul.addr %s273, 48
      %s275 = smul.addr %s274, 8
      %s276 = scalar_lea.vmem %s0, %s275
      %s277 = smul.u32 8, %s23
      %p278 = scmp.lt.s32.totalorder %s22, 1
      %s279 = scalar_select %p278, %s22, 1
      %p280 = scmp.lt.s32.totalorder %s277, 15
      %s281 = scalar_select %p280, %s277, 15
      %s282 = smul.addr %s281, 3
      %s283 = smul.addr %s279, 48
      %s284 = sadd.s32 %s282, %s283
      %s285 = smul.addr %s284, 8
      %s286 = scalar_lea.vmem %s4, %s285
      %s287 = smul.u32 8, %s23
      %p288 = scmp.lt.s32.totalorder %s22, 1
      %s289 = scalar_select %p288, %s22, 1
      %s290 = scalar_lea.vmem %s5, %s289
      %p291 = scmp.lt.s32.totalorder %s22, 1
      %s292 = scalar_select %p291, %s22, 1
      %s293 = scalar_lea.vmem %s6, %s292
      %s295 = smul.u32 %s23, 8
      %s296 = smul.u32 %s295, 24
      %s297 = scalar_lea.vmem %s276, %s296
      %v298 = vld [vmem:[%s297] sm:$0xff]
      %v299 = vld [vmem:[%s297 + $0x8] sm:$0xff]
      %v300 = vld [vmem:[%s297 + $0x10] sm:$0x3]
      %v301 = vld [vmem:[%s297 + $0x18] sm:$0xff]
      %v302 = vld [vmem:[%s297 + $0x20] sm:$0xff]
      %v303 = vld [vmem:[%s297 + $0x28] sm:$0x3]
      %v304 = vld [vmem:[%s297 + $0x30] sm:$0xff]
      %v305 = vld [vmem:[%s297 + $0x38] sm:$0xff]
      %v306 = vld [vmem:[%s297 + $0x40] sm:$0x3]
      %v307 = vld [vmem:[%s297 + $0x48] sm:$0xff]
      %v308 = vld [vmem:[%s297 + $0x50] sm:$0xff]
      %v309 = vld [vmem:[%s297 + $0x58] sm:$0x3]
      %v310 = vld [vmem:[%s297 + $0x60] sm:$0xff]
      %v311 = vld [vmem:[%s297 + $0x68] sm:$0xff]
      %v312 = vld [vmem:[%s297 + $0x70] sm:$0x3]
      %v313 = vld [vmem:[%s297 + $0x78] sm:$0xff]
      %v314 = vld [vmem:[%s297 + $0x80] sm:$0xff]
      %v315 = vld [vmem:[%s297 + $0x88] sm:$0x3]
      %v316 = vld [vmem:[%s297 + $0x90] sm:$0xff]
      %v317 = vld [vmem:[%s297 + $0x98] sm:$0xff]
      %v318 = vld [vmem:[%s297 + $0xa0] sm:$0x3]
      %v319 = vld [vmem:[%s297 + $0xa8] sm:$0xff]
      %v320 = vld [vmem:[%s297 + $0xb0] sm:$0xff]
      %v321 = vld [vmem:[%s297 + $0xb8] sm:$0x3]
      %v322 = vld [vmem:[%s1] sm:$0x1]
      %v324 = vlaneseq
      %v325 = vshrl.u32 %v324, 7
      %v326 = vsub.s32 0, %v325
      %v327 = vrot.slane %v322, %v326
      %v329 = vmul.f32 %v298, %v327
      %v330 = vmul.f32 %v299, %v327
      %v331 = vmul.f32 %v300, %v327
      %v332 = vmul.f32 %v301, %v327
      %v333 = vmul.f32 %v302, %v327
      %v334 = vmul.f32 %v303, %v327
      %v335 = vmul.f32 %v304, %v327
      %v336 = vmul.f32 %v305, %v327
      %v337 = vmul.f32 %v306, %v327
      %v338 = vmul.f32 %v307, %v327
      %v339 = vmul.f32 %v308, %v327
      %v340 = vmul.f32 %v309, %v327
      %v341 = vmul.f32 %v310, %v327
      %v342 = vmul.f32 %v311, %v327
      %v343 = vmul.f32 %v312, %v327
      %v344 = vmul.f32 %v313, %v327
      %v345 = vmul.f32 %v314, %v327
      %v346 = vmul.f32 %v315, %v327
      %v347 = vmul.f32 %v316, %v327
      %v348 = vmul.f32 %v317, %v327
      %v349 = vmul.f32 %v318, %v327
      %v350 = vmul.f32 %v319, %v327
      %v351 = vmul.f32 %v320, %v327
      %v352 = vmul.f32 %v321, %v327
      %v353 = vld [vmem:[%s2] sm:$0x1]
      %v355 = vlaneseq
      %v356 = vshrl.u32 %v355, 7
      %v357 = vsub.s32 0, %v356
      %v358 = vrot.slane %v353, %v357
      %v360 = vadd.f32 %v329, %v358
      %v361 = vadd.f32 %v330, %v358
      %v362 = vadd.f32 %v331, %v358
      %v363 = vadd.f32 %v332, %v358
      %v364 = vadd.f32 %v333, %v358
      %v365 = vadd.f32 %v334, %v358
      %v366 = vadd.f32 %v335, %v358
      %v367 = vadd.f32 %v336, %v358
      %v368 = vadd.f32 %v337, %v358
      %v369 = vadd.f32 %v338, %v358
      %v370 = vadd.f32 %v339, %v358
      %v371 = vadd.f32 %v340, %v358
      %v372 = vadd.f32 %v341, %v358
      %v373 = vadd.f32 %v342, %v358
      %v374 = vadd.f32 %v343, %v358
      %v375 = vadd.f32 %v344, %v358
      %v376 = vadd.f32 %v345, %v358
      %v377 = vadd.f32 %v346, %v358
      %v378 = vadd.f32 %v347, %v358
      %v379 = vadd.f32 %v348, %v358
      %v380 = vadd.f32 %v349, %v358
      %v381 = vadd.f32 %v350, %v358
      %v382 = vadd.f32 %v351, %v358
      %v383 = vadd.f32 %v352, %v358
      %v384 = vmax.f32 %v360, 0.0
      %v385 = vmax.f32 %v361, 0.0
      %v386 = vmax.f32 %v362, 0.0
      %v387 = vmax.f32 %v363, 0.0
      %v388 = vmax.f32 %v364, 0.0
      %v389 = vmax.f32 %v365, 0.0
      %v390 = vmax.f32 %v366, 0.0
      %v391 = vmax.f32 %v367, 0.0
      %v392 = vmax.f32 %v368, 0.0
      %v393 = vmax.f32 %v369, 0.0
      %v394 = vmax.f32 %v370, 0.0
      %v395 = vmax.f32 %v371, 0.0
      %v396 = vmax.f32 %v372, 0.0
      %v397 = vmax.f32 %v373, 0.0
      %v398 = vmax.f32 %v374, 0.0
      %v399 = vmax.f32 %v375, 0.0
      %v400 = vmax.f32 %v376, 0.0
      %v401 = vmax.f32 %v377, 0.0
      %v402 = vmax.f32 %v378, 0.0
      %v403 = vmax.f32 %v379, 0.0
      %v404 = vmax.f32 %v380, 0.0
      %v405 = vmax.f32 %v381, 0.0
      %v406 = vmax.f32 %v382, 0.0
      %v407 = vmax.f32 %v383, 0.0
      %s408 = ssub.s32 %s295, 1
      %p409 = scmp.gt.s32.totalorder %s408, 0
      %s410 = scalar_select %p409, %s408, 0
      %s411 = smul.u32 %s410, 24
      %s412 = scalar_lea.vmem %s276, %s411
      %v413 = vld [vmem:[%s412] sm:$0xff]
      %v414 = vld [vmem:[%s412 + $0x8] sm:$0xff]
      %v415 = vld [vmem:[%s412 + $0x10] sm:$0x3]
      %v416 = vmul.f32 %v413, %v327
      %v417 = vmul.f32 %v414, %v327
      %v418 = vmul.f32 %v415, %v327
      %v419 = vadd.f32 %v416, %v358
      %v420 = vadd.f32 %v417, %v358
      %v421 = vadd.f32 %v418, %v358
      %v422 = vmax.f32 %v419, 0.0
      %v423 = vmax.f32 %v420, 0.0
      %v424 = vmax.f32 %v421, 0.0
      %p425 = scmp.gt.s32.totalorder %s23, 0
      %s426 = scalar_select %p425, 1, 0
      %s427 = scvt.s32.f32 %s426
      %v428 = vstv %s427
      %v429 = vmul.f32 %v422, %v428
      %v430 = vmul.f32 %v423, %v428
      %v431 = vmul.f32 %v424, %v428
      %s432 = sadd.s32 %s295, 8
      %p433 = scmp.lt.s32.totalorder %s432, 15
      %s434 = scalar_select %p433, %s432, 15
      %s435 = smul.u32 %s434, 24
      %s436 = scalar_lea.vmem %s276, %s435
      %v437 = vld [vmem:[%s436] sm:$0xff]
      %v438 = vld [vmem:[%s436 + $0x8] sm:$0xff]
      %v439 = vld [vmem:[%s436 + $0x10] sm:$0x3]
      %v440 = vmul.f32 %v437, %v327
      %v441 = vmul.f32 %v438, %v327
      %v442 = vmul.f32 %v439, %v327
      %v443 = vadd.f32 %v440, %v358
      %v444 = vadd.f32 %v441, %v358
      %v445 = vadd.f32 %v442, %v358
      %v446 = vmax.f32 %v443, 0.0
      %v447 = vmax.f32 %v444, 0.0
      %v448 = vmax.f32 %v445, 0.0
      %p449 = scmp.lt.s32.totalorder %s23, 1
      %s450 = scalar_select %p449, 1, 0
      %s451 = scvt.s32.f32 %s450
      %v452 = vstv %s451
      %v453 = vmul.f32 %v446, %v452
      %v454 = vmul.f32 %v447, %v452
      %v455 = vmul.f32 %v448, %v452
      %v456 = vlaneseq
      %v457 = vshrl.u32 %v456, 7
      %v458 = vadd.s32 %v457, 8
      %v459 = vadd.s32 %v457, 16
      %vm460 = vcmp.ge.s32.totalorder %v457, 1
      %vm461 = vcmp.ge.s32.totalorder %v458, 1
      %vm462 = vcmp.ge.s32.totalorder %v459, 1
      %vm463 = vcmp.le.s32.totalorder %v457, 16
      %vm464 = vcmp.le.s32.totalorder %v458, 16
      %vm465 = vcmp.le.s32.totalorder %v459, 16
      %vm466 = vmand %vm460, %vm463
      %vm467 = vmand %vm461, %vm464
      %vm468 = vmand %vm462, %vm465
      %v469 = vsel %vm466, 1, 0
      %v470 = vsel %vm467, 1, 0
      %v471 = vsel %vm468, 1, 0
      %v472 = vcvt.s32.f32 %v469
      %v473 = vcvt.s32.f32 %v470
      %v474 = vcvt.s32.f32 %v471
      %v475 = vmul.f32 %v429, %v472
      %v476 = vmul.f32 %v430, %v473
      %v477 = vmul.f32 %v431, %v474
      %v478 = vmul.f32 %v384, %v472
      %v479 = vmul.f32 %v385, %v473
      %v480 = vmul.f32 %v386, %v474
      %v481 = vmul.f32 %v387, %v472
      %v482 = vmul.f32 %v388, %v473
      %v483 = vmul.f32 %v389, %v474
      %v484 = vmul.f32 %v390, %v472
      %v485 = vmul.f32 %v391, %v473
      %v486 = vmul.f32 %v392, %v474
      %v487 = vmul.f32 %v393, %v472
      %v488 = vmul.f32 %v394, %v473
      %v489 = vmul.f32 %v395, %v474
      %v490 = vmul.f32 %v396, %v472
      %v491 = vmul.f32 %v397, %v473
      %v492 = vmul.f32 %v398, %v474
      %v493 = vmul.f32 %v399, %v472
      %v494 = vmul.f32 %v400, %v473
      %v495 = vmul.f32 %v401, %v474
      %v496 = vmul.f32 %v402, %v472
      %v497 = vmul.f32 %v403, %v473
      %v498 = vmul.f32 %v404, %v474
      %v499 = vmul.f32 %v405, %v472
      %v500 = vmul.f32 %v406, %v473
      %v501 = vmul.f32 %v407, %v474
      %v502 = vmul.f32 %v453, %v472
      %v503 = vmul.f32 %v454, %v473
      %v504 = vmul.f32 %v455, %v474
      %v505 = vpack.c.bf16 %v476, %v475
      %v506 = vpack.c.bf16 %v479, %v478
      %v507 = vpack.c.bf16 %v482, %v481
      %v508 = vpack.c.bf16 %v485, %v484
      %v509 = vpack.c.bf16 %v488, %v487
      %v510 = vpack.c.bf16 %v491, %v490
      %v511 = vpack.c.bf16 %v494, %v493
      %v512 = vpack.c.bf16 %v497, %v496
      %513 = vst [vmem:[#allocation2] sm:$0xff] %v505
      %514 = vst [vmem:[#allocation2 + $0x48] sm:$0xff] %v506
      %515 = vst [vmem:[#allocation2 + $0x90] sm:$0xff] %v507
      %516 = vst [vmem:[#allocation2 + $0xd8] sm:$0xff] %v508
      %517 = vst [vmem:[#allocation2 + $0x120] sm:$0xff] %v509
      %518 = vst [vmem:[#allocation2 + $0x168] sm:$0xff] %v510
      %519 = vst [vmem:[#allocation2 + $0x1b0] sm:$0xff] %v511
      %520 = vst [vmem:[#allocation2 + $0x1f8] sm:$0xff] %v512
      %vm545 = vcmask 1046528
      %v546 = vrot.slane %v475, 1
      %v547 = vrot.slane %v476, 1
      %v548 = vsel %vm545, %v546, %v547
      %v549 = vrot.slane %v477, 1
      %v550 = vsel %vm545, %v547, %v549
      %v551 = vrot.slane %v478, 1
      %v552 = vrot.slane %v479, 1
      %v553 = vsel %vm545, %v551, %v552
      %v554 = vrot.slane %v480, 1
      %v555 = vsel %vm545, %v552, %v554
      %v556 = vrot.slane %v481, 1
      %v557 = vrot.slane %v482, 1
      %v558 = vsel %vm545, %v556, %v557
      %v559 = vrot.slane %v483, 1
      %v560 = vsel %vm545, %v557, %v559
      %v561 = vrot.slane %v484, 1
      %v562 = vrot.slane %v485, 1
      %v563 = vsel %vm545, %v561, %v562
      %v564 = vrot.slane %v486, 1
      %v565 = vsel %vm545, %v562, %v564
      %v566 = vrot.slane %v487, 1
      %v567 = vrot.slane %v488, 1
      %v568 = vsel %vm545, %v566, %v567
      %v569 = vrot.slane %v489, 1
      %v570 = vsel %vm545, %v567, %v569
      %v571 = vrot.slane %v490, 1
      %v572 = vrot.slane %v491, 1
      %v573 = vsel %vm545, %v571, %v572
      %v574 = vrot.slane %v492, 1
      %v575 = vsel %vm545, %v572, %v574
      %v576 = vrot.slane %v493, 1
      %v577 = vrot.slane %v494, 1
      %v578 = vsel %vm545, %v576, %v577
      %v579 = vrot.slane %v495, 1
      %v580 = vsel %vm545, %v577, %v579
      %v581 = vrot.slane %v496, 1
      %v582 = vrot.slane %v497, 1
      %v583 = vsel %vm545, %v581, %v582
      %v584 = vrot.slane %v498, 1
      %v585 = vsel %vm545, %v582, %v584
      %v602 = vpack.c.bf16 %v550, %v548
      %v603 = vpack.c.bf16 %v555, %v553
      %v604 = vpack.c.bf16 %v560, %v558
      %v605 = vpack.c.bf16 %v565, %v563
      %v606 = vpack.c.bf16 %v570, %v568
      %v607 = vpack.c.bf16 %v575, %v573
      %v608 = vpack.c.bf16 %v580, %v578
      %v609 = vpack.c.bf16 %v585, %v583
      %610 = vst [vmem:[#allocation2 + $0x8] sm:$0xff] %v602
      %611 = vst [vmem:[#allocation2 + $0x50] sm:$0xff] %v603
      %612 = vst [vmem:[#allocation2 + $0x98] sm:$0xff] %v604
      %613 = vst [vmem:[#allocation2 + $0xe0] sm:$0xff] %v605
      %614 = vst [vmem:[#allocation2 + $0x128] sm:$0xff] %v606
      %615 = vst [vmem:[#allocation2 + $0x170] sm:$0xff] %v607
      %616 = vst [vmem:[#allocation2 + $0x1b8] sm:$0xff] %v608
      %617 = vst [vmem:[#allocation2 + $0x200] sm:$0xff] %v609
      %vm618 = vcmask 1045504
      %v619 = vrot.slane %v475, 2
      %v620 = vrot.slane %v476, 2
      %v621 = vsel %vm618, %v619, %v620
      %v622 = vrot.slane %v477, 2
      %v623 = vsel %vm618, %v620, %v622
      %v624 = vrot.slane %v478, 2
      %v625 = vrot.slane %v479, 2
      %v626 = vsel %vm618, %v624, %v625
      %v627 = vrot.slane %v480, 2
      %v628 = vsel %vm618, %v625, %v627
      %v629 = vrot.slane %v481, 2
      %v630 = vrot.slane %v482, 2
      %v631 = vsel %vm618, %v629, %v630
      %v632 = vrot.slane %v483, 2
      %v633 = vsel %vm618, %v630, %v632
      %v634 = vrot.slane %v484, 2
      %v635 = vrot.slane %v485, 2
      %v636 = vsel %vm618, %v634, %v635
      %v637 = vrot.slane %v486, 2
      %v638 = vsel %vm618, %v635, %v637
      %v639 = vrot.slane %v487, 2
      %v640 = vrot.slane %v488, 2
      %v641 = vsel %vm618, %v639, %v640
      %v642 = vrot.slane %v489, 2
      %v643 = vsel %vm618, %v640, %v642
      %v644 = vrot.slane %v490, 2
      %v645 = vrot.slane %v491, 2
      %v646 = vsel %vm618, %v644, %v645
      %v647 = vrot.slane %v492, 2
      %v648 = vsel %vm618, %v645, %v647
      %v649 = vrot.slane %v493, 2
      %v650 = vrot.slane %v494, 2
      %v651 = vsel %vm618, %v649, %v650
      %v652 = vrot.slane %v495, 2
      %v653 = vsel %vm618, %v650, %v652
      %v654 = vrot.slane %v496, 2
      %v655 = vrot.slane %v497, 2
      %v656 = vsel %vm618, %v654, %v655
      %v657 = vrot.slane %v498, 2
      %v658 = vsel %vm618, %v655, %v657
      %v675 = vpack.c.bf16 %v623, %v621
      %v676 = vpack.c.bf16 %v628, %v626
      %v677 = vpack.c.bf16 %v633, %v631
      %v678 = vpack.c.bf16 %v638, %v636
      %v679 = vpack.c.bf16 %v643, %v641
      %v680 = vpack.c.bf16 %v648, %v646
      %v681 = vpack.c.bf16 %v653, %v651
      %v682 = vpack.c.bf16 %v658, %v656
      %683 = vst [vmem:[#allocation2 + $0x10] sm:$0xff] %v675
      %684 = vst [vmem:[#allocation2 + $0x58] sm:$0xff] %v676
      %685 = vst [vmem:[#allocation2 + $0xa0] sm:$0xff] %v677
      %686 = vst [vmem:[#allocation2 + $0xe8] sm:$0xff] %v678
      %687 = vst [vmem:[#allocation2 + $0x130] sm:$0xff] %v679
      %688 = vst [vmem:[#allocation2 + $0x178] sm:$0xff] %v680
      %689 = vst [vmem:[#allocation2 + $0x1c0] sm:$0xff] %v681
      %690 = vst [vmem:[#allocation2 + $0x208] sm:$0xff] %v682
      %v691 = vpack.c.bf16 %v500, %v499
      %692 = vst [vmem:[#allocation2 + $0x18] sm:$0xff] %v506
      %693 = vst [vmem:[#allocation2 + $0x60] sm:$0xff] %v507
      %694 = vst [vmem:[#allocation2 + $0xa8] sm:$0xff] %v508
      %695 = vst [vmem:[#allocation2 + $0xf0] sm:$0xff] %v509
      %696 = vst [vmem:[#allocation2 + $0x138] sm:$0xff] %v510
      %697 = vst [vmem:[#allocation2 + $0x180] sm:$0xff] %v511
      %698 = vst [vmem:[#allocation2 + $0x1c8] sm:$0xff] %v512
      %699 = vst [vmem:[#allocation2 + $0x210] sm:$0xff] %v691
      %v703 = vrot.slane %v499, 1
      %v704 = vrot.slane %v500, 1
      %v705 = vsel %vm545, %v703, %v704
      %v706 = vrot.slane %v501, 1
      %v707 = vsel %vm545, %v704, %v706
      %v710 = vpack.c.bf16 %v707, %v705
      %711 = vst [vmem:[#allocation2 + $0x20] sm:$0xff] %v603
      %712 = vst [vmem:[#allocation2 + $0x68] sm:$0xff] %v604
      %713 = vst [vmem:[#allocation2 + $0xb0] sm:$0xff] %v605
      %714 = vst [vmem:[#allocation2 + $0xf8] sm:$0xff] %v606
      %715 = vst [vmem:[#allocation2 + $0x140] sm:$0xff] %v607
      %716 = vst [vmem:[#allocation2 + $0x188] sm:$0xff] %v608
      %717 = vst [vmem:[#allocation2 + $0x1d0] sm:$0xff] %v609
      %718 = vst [vmem:[#allocation2 + $0x218] sm:$0xff] %v710
      %v719 = vrot.slane %v499, 2
      %v720 = vrot.slane %v500, 2
      %v721 = vsel %vm618, %v719, %v720
      %v722 = vrot.slane %v501, 2
      %v723 = vsel %vm618, %v720, %v722
      %v726 = vpack.c.bf16 %v723, %v721
      %727 = vst [vmem:[#allocation2 + $0x28] sm:$0xff] %v676
      %728 = vst [vmem:[#allocation2 + $0x70] sm:$0xff] %v677
      %729 = vst [vmem:[#allocation2 + $0xb8] sm:$0xff] %v678
      %730 = vst [vmem:[#allocation2 + $0x100] sm:$0xff] %v679
      %731 = vst [vmem:[#allocation2 + $0x148] sm:$0xff] %v680
      %732 = vst [vmem:[#allocation2 + $0x190] sm:$0xff] %v681
      %733 = vst [vmem:[#allocation2 + $0x1d8] sm:$0xff] %v682
      %734 = vst [vmem:[#allocation2 + $0x220] sm:$0xff] %v726
      %v735 = vpack.c.bf16 %v503, %v502
      %736 = vst [vmem:[#allocation2 + $0x30] sm:$0xff] %v507
      %737 = vst [vmem:[#allocation2 + $0x78] sm:$0xff] %v508
      %738 = vst [vmem:[#allocation2 + $0xc0] sm:$0xff] %v509
      %739 = vst [vmem:[#allocation2 + $0x108] sm:$0xff] %v510
      %740 = vst [vmem:[#allocation2 + $0x150] sm:$0xff] %v511
      %741 = vst [vmem:[#allocation2 + $0x198] sm:$0xff] %v512
      %742 = vst [vmem:[#allocation2 + $0x1e0] sm:$0xff] %v691
      %743 = vst [vmem:[#allocation2 + $0x228] sm:$0xff] %v735
      %v747 = vrot.slane %v502, 1
      %v748 = vrot.slane %v503, 1
      %v749 = vsel %vm545, %v747, %v748
      %v750 = vrot.slane %v504, 1
      %v751 = vsel %vm545, %v748, %v750
      %v754 = vpack.c.bf16 %v751, %v749
      %755 = vst [vmem:[#allocation2 + $0x38] sm:$0xff] %v604
      %756 = vst [vmem:[#allocation2 + $0x80] sm:$0xff] %v605
      %757 = vst [vmem:[#allocation2 + $0xc8] sm:$0xff] %v606
      %758 = vst [vmem:[#allocation2 + $0x110] sm:$0xff] %v607
      %759 = vst [vmem:[#allocation2 + $0x158] sm:$0xff] %v608
      %760 = vst [vmem:[#allocation2 + $0x1a0] sm:$0xff] %v609
      %761 = vst [vmem:[#allocation2 + $0x1e8] sm:$0xff] %v710
      %762 = vst [vmem:[#allocation2 + $0x230] sm:$0xff] %v754
      %v763 = vrot.slane %v502, 2
      %v764 = vrot.slane %v503, 2
      %v765 = vsel %vm618, %v763, %v764
      %v766 = vrot.slane %v504, 2
      %v767 = vsel %vm618, %v764, %v766
      %v770 = vpack.c.bf16 %v767, %v765
      %771 = vst [vmem:[#allocation2 + $0x40] sm:$0xff] %v677
      %772 = vst [vmem:[#allocation2 + $0x88] sm:$0xff] %v678
      %773 = vst [vmem:[#allocation2 + $0xd0] sm:$0xff] %v679
      %774 = vst [vmem:[#allocation2 + $0x118] sm:$0xff] %v680
      %775 = vst [vmem:[#allocation2 + $0x160] sm:$0xff] %v681
      %776 = vst [vmem:[#allocation2 + $0x1a8] sm:$0xff] %v682
      %777 = vst [vmem:[#allocation2 + $0x1f0] sm:$0xff] %v726
      %778 = vst [vmem:[#allocation2 + $0x238] sm:$0xff] %v770
      %v779 = vld [vmem:[#allocation2] sm:$0xff]
      %v780 = vld [vmem:[#allocation2 + $0x8] sm:$0xff]
      %v781 = vld [vmem:[#allocation2 + $0x10] sm:$0xff]
      %v782 = vld [vmem:[#allocation2 + $0x18] sm:$0xff]
      %v783 = vld [vmem:[#allocation2 + $0x20] sm:$0xff]
      %v784 = vld [vmem:[#allocation2 + $0x28] sm:$0xff]
      %v785 = vld [vmem:[#allocation2 + $0x30] sm:$0xff]
      %v786 = vld [vmem:[#allocation2 + $0x38] sm:$0xff]
      %v787 = vld [vmem:[#allocation2 + $0x40] sm:$0xff]
      %v788 = vld [vmem:[#allocation2 + $0x48] sm:$0xff]
      %v789 = vld [vmem:[#allocation2 + $0x50] sm:$0xff]
      %v790 = vld [vmem:[#allocation2 + $0x58] sm:$0xff]
      %v791 = vld [vmem:[#allocation2 + $0x60] sm:$0xff]
      %v792 = vld [vmem:[#allocation2 + $0x68] sm:$0xff]
      %v793 = vld [vmem:[#allocation2 + $0x70] sm:$0xff]
      %v794 = vld [vmem:[#allocation2 + $0x78] sm:$0xff]
      %v795 = vld [vmem:[#allocation2 + $0x80] sm:$0xff]
      %v796 = vld [vmem:[#allocation2 + $0x88] sm:$0xff]
      %v797 = vld [vmem:[#allocation2 + $0x90] sm:$0xff]
      %v798 = vld [vmem:[#allocation2 + $0x98] sm:$0xff]
      %v799 = vld [vmem:[#allocation2 + $0xa0] sm:$0xff]
      %v800 = vld [vmem:[#allocation2 + $0xa8] sm:$0xff]
      %v801 = vld [vmem:[#allocation2 + $0xb0] sm:$0xff]
      %v802 = vld [vmem:[#allocation2 + $0xb8] sm:$0xff]
      %v803 = vld [vmem:[#allocation2 + $0xc0] sm:$0xff]
      %v804 = vld [vmem:[#allocation2 + $0xc8] sm:$0xff]
      %v805 = vld [vmem:[#allocation2 + $0xd0] sm:$0xff]
      %v806 = vld [vmem:[#allocation2 + $0xd8] sm:$0xff]
      %v807 = vld [vmem:[#allocation2 + $0xe0] sm:$0xff]
      %v808 = vld [vmem:[#allocation2 + $0xe8] sm:$0xff]
      %v809 = vld [vmem:[#allocation2 + $0xf0] sm:$0xff]
      %v810 = vld [vmem:[#allocation2 + $0xf8] sm:$0xff]
      %v811 = vld [vmem:[#allocation2 + $0x100] sm:$0xff]
      %v812 = vld [vmem:[#allocation2 + $0x108] sm:$0xff]
      %v813 = vld [vmem:[#allocation2 + $0x110] sm:$0xff]
      %v814 = vld [vmem:[#allocation2 + $0x118] sm:$0xff]
      %v815 = vld [vmem:[#allocation2 + $0x120] sm:$0xff]
      %v816 = vld [vmem:[#allocation2 + $0x128] sm:$0xff]
      %v817 = vld [vmem:[#allocation2 + $0x130] sm:$0xff]
      %v818 = vld [vmem:[#allocation2 + $0x138] sm:$0xff]
      %v819 = vld [vmem:[#allocation2 + $0x140] sm:$0xff]
      %v820 = vld [vmem:[#allocation2 + $0x148] sm:$0xff]
      %v821 = vld [vmem:[#allocation2 + $0x150] sm:$0xff]
      %v822 = vld [vmem:[#allocation2 + $0x158] sm:$0xff]
      %v823 = vld [vmem:[#allocation2 + $0x160] sm:$0xff]
      %v824 = vld [vmem:[#allocation2 + $0x168] sm:$0xff]
      %v825 = vld [vmem:[#allocation2 + $0x170] sm:$0xff]
      %v826 = vld [vmem:[#allocation2 + $0x178] sm:$0xff]
      %v827 = vld [vmem:[#allocation2 + $0x180] sm:$0xff]
      %v828 = vld [vmem:[#allocation2 + $0x188] sm:$0xff]
      %v829 = vld [vmem:[#allocation2 + $0x190] sm:$0xff]
      %v830 = vld [vmem:[#allocation2 + $0x198] sm:$0xff]
      %v831 = vld [vmem:[#allocation2 + $0x1a0] sm:$0xff]
      %v832 = vld [vmem:[#allocation2 + $0x1a8] sm:$0xff]
      %v833 = vld [vmem:[#allocation2 + $0x1b0] sm:$0xff]
      %v834 = vld [vmem:[#allocation2 + $0x1b8] sm:$0xff]
      %v835 = vld [vmem:[#allocation2 + $0x1c0] sm:$0xff]
      %v836 = vld [vmem:[#allocation2 + $0x1c8] sm:$0xff]
      %v837 = vld [vmem:[#allocation2 + $0x1d0] sm:$0xff]
      %v838 = vld [vmem:[#allocation2 + $0x1d8] sm:$0xff]
      %v839 = vld [vmem:[#allocation2 + $0x1e0] sm:$0xff]
      %v840 = vld [vmem:[#allocation2 + $0x1e8] sm:$0xff]
      %v841 = vld [vmem:[#allocation2 + $0x1f0] sm:$0xff]
      %v842 = vld [vmem:[#allocation2 + $0x1f8] sm:$0xff]
      %v843 = vld [vmem:[#allocation2 + $0x200] sm:$0xff]
      %v844 = vld [vmem:[#allocation2 + $0x208] sm:$0xff]
      %v845 = vld [vmem:[#allocation2 + $0x210] sm:$0xff]
      %v846 = vld [vmem:[#allocation2 + $0x218] sm:$0xff]
      %v847 = vld [vmem:[#allocation2 + $0x220] sm:$0xff]
      %v848 = vld [vmem:[#allocation2 + $0x228] sm:$0xff]
      %v849 = vld [vmem:[#allocation2 + $0x230] sm:$0xff]
      %v850 = vld [vmem:[#allocation2 + $0x238] sm:$0xff]
      %v851 = vld [vmem:[%s3] sm:$0xf]
      %v852 = vld [vmem:[%s3 + $0x4] sm:$0xf]
      %v853 = vld [vmem:[%s3 + $0x8] sm:$0xf]
      %v854 = vld [vmem:[%s3 + $0xc] sm:$0xf]
      %v855 = vld [vmem:[%s3 + $0x10] sm:$0xf]
      %v856 = vld [vmem:[%s3 + $0x14] sm:$0xf]
      %v857 = vld [vmem:[%s3 + $0x18] sm:$0xf]
      %v858 = vld [vmem:[%s3 + $0x1c] sm:$0xf]
      %v859 = vld [vmem:[%s3 + $0x20] sm:$0xf]
      %v860 = vld [vmem:[%s3 + $0x24] sm:$0xf]
      %v861 = vld [vmem:[%s3 + $0x28] sm:$0xf]
      %v862 = vld [vmem:[%s3 + $0x2c] sm:$0xf]
      %v863 = vld [vmem:[%s3 + $0x30] sm:$0xf]
      %v864 = vld [vmem:[%s3 + $0x34] sm:$0xf]
      %v865 = vld [vmem:[%s3 + $0x38] sm:$0xf]
      %v866 = vld [vmem:[%s3 + $0x3c] sm:$0xf]
      %v867 = vld [vmem:[%s3 + $0x40] sm:$0xf]
      %v868 = vld [vmem:[%s3 + $0x44] sm:$0xf]
      %v869 = vld [vmem:[%s3 + $0x48] sm:$0xf]
      %v870 = vld [vmem:[%s3 + $0x4c] sm:$0xf]
      %v871 = vld [vmem:[%s3 + $0x50] sm:$0xf]
      %v872 = vld [vmem:[%s3 + $0x54] sm:$0xf]
      %v873 = vld [vmem:[%s3 + $0x58] sm:$0xf]
      %v874 = vld [vmem:[%s3 + $0x5c] sm:$0xf]
      %v875 = vld [vmem:[%s3 + $0x60] sm:$0xf]
      %v876 = vld [vmem:[%s3 + $0x64] sm:$0xf]
      %v877 = vld [vmem:[%s3 + $0x68] sm:$0xf]
      %v878 = vld [vmem:[%s3 + $0x6c] sm:$0xf]
      %v879 = vld [vmem:[%s3 + $0x70] sm:$0xf]
      %v880 = vld [vmem:[%s3 + $0x74] sm:$0xf]
      %v881 = vld [vmem:[%s3 + $0x78] sm:$0xf]
      %v882 = vld [vmem:[%s3 + $0x7c] sm:$0xf]
      %v883 = vld [vmem:[%s3 + $0x80] sm:$0xf]
      %v884 = vld [vmem:[%s3 + $0x84] sm:$0xf]
      %v885 = vld [vmem:[%s3 + $0x88] sm:$0xf]
      %v886 = vld [vmem:[%s3 + $0x8c] sm:$0xf]
      %v887 = vld [vmem:[%s3 + $0x90] sm:$0xf]
      %v888 = vld [vmem:[%s3 + $0x94] sm:$0xf]
      %v889 = vld [vmem:[%s3 + $0x98] sm:$0xf]
      %v890 = vld [vmem:[%s3 + $0x9c] sm:$0xf]
      %v891 = vld [vmem:[%s3 + $0xa0] sm:$0xf]
      %v892 = vld [vmem:[%s3 + $0xa4] sm:$0xf]
      %v893 = vld [vmem:[%s3 + $0xa8] sm:$0xf]
      %v894 = vld [vmem:[%s3 + $0xac] sm:$0xf]
      %v895 = vld [vmem:[%s3 + $0xb0] sm:$0xf]
      %v896 = vld [vmem:[%s3 + $0xb4] sm:$0xf]
      %v897 = vld [vmem:[%s3 + $0xb8] sm:$0xf]
      %v898 = vld [vmem:[%s3 + $0xbc] sm:$0xf]
      %v899 = vld [vmem:[%s3 + $0xc0] sm:$0xf]
      %v900 = vld [vmem:[%s3 + $0xc4] sm:$0xf]
      %v901 = vld [vmem:[%s3 + $0xc8] sm:$0xf]
      %v902 = vld [vmem:[%s3 + $0xcc] sm:$0xf]
      %v903 = vld [vmem:[%s3 + $0xd0] sm:$0xf]
      %v904 = vld [vmem:[%s3 + $0xd4] sm:$0xf]
      %v905 = vld [vmem:[%s3 + $0xd8] sm:$0xf]
      %v906 = vld [vmem:[%s3 + $0xdc] sm:$0xf]
      %v907 = vld [vmem:[%s3 + $0xe0] sm:$0xf]
      %v908 = vld [vmem:[%s3 + $0xe4] sm:$0xf]
      %v909 = vld [vmem:[%s3 + $0xe8] sm:$0xf]
      %v910 = vld [vmem:[%s3 + $0xec] sm:$0xf]
      %v911 = vld [vmem:[%s3 + $0xf0] sm:$0xf]
      %v912 = vld [vmem:[%s3 + $0xf4] sm:$0xf]
      %v913 = vld [vmem:[%s3 + $0xf8] sm:$0xf]
      %v914 = vld [vmem:[%s3 + $0xfc] sm:$0xf]
      %v915 = vld [vmem:[%s3 + $0x100] sm:$0xf]
      %v916 = vld [vmem:[%s3 + $0x104] sm:$0xf]
      %v917 = vld [vmem:[%s3 + $0x108] sm:$0xf]
      %v918 = vld [vmem:[%s3 + $0x10c] sm:$0xf]
      %v919 = vld [vmem:[%s3 + $0x110] sm:$0xf]
      %v920 = vld [vmem:[%s3 + $0x114] sm:$0xf]
      %v921 = vld [vmem:[%s3 + $0x118] sm:$0xf]
      %v922 = vld [vmem:[%s3 + $0x11c] sm:$0xf]
      %v923 = vld [vmem:[%s3 + $0x120] sm:$0xf]
      %v924 = vld [vmem:[%s3 + $0x124] sm:$0xf]
      %v925 = vld [vmem:[%s3 + $0x128] sm:$0xf]
      %v926 = vld [vmem:[%s3 + $0x12c] sm:$0xf]
      %v927 = vld [vmem:[%s3 + $0x130] sm:$0xf]
      %v928 = vld [vmem:[%s3 + $0x134] sm:$0xf]
      %v929 = vld [vmem:[%s3 + $0x138] sm:$0xf]
      %v930 = vld [vmem:[%s3 + $0x13c] sm:$0xf]
      %v931 = vld [vmem:[%s3 + $0x140] sm:$0xf]
      %v932 = vld [vmem:[%s3 + $0x144] sm:$0xf]
      %v933 = vld [vmem:[%s3 + $0x148] sm:$0xf]
      %v934 = vld [vmem:[%s3 + $0x14c] sm:$0xf]
      %v935 = vld [vmem:[%s3 + $0x150] sm:$0xf]
      %v936 = vld [vmem:[%s3 + $0x154] sm:$0xf]
      %v937 = vld [vmem:[%s3 + $0x158] sm:$0xf]
      %v938 = vld [vmem:[%s3 + $0x15c] sm:$0xf]
      %v939 = vld [vmem:[%s3 + $0x160] sm:$0xf]
      %v940 = vld [vmem:[%s3 + $0x164] sm:$0xf]
      %v941 = vld [vmem:[%s3 + $0x168] sm:$0xf]
      %v942 = vld [vmem:[%s3 + $0x16c] sm:$0xf]
      %v943 = vld [vmem:[%s3 + $0x170] sm:$0xf]
      %v944 = vld [vmem:[%s3 + $0x174] sm:$0xf]
      %v945 = vld [vmem:[%s3 + $0x178] sm:$0xf]
      %v946 = vld [vmem:[%s3 + $0x17c] sm:$0xf]
      %v947 = vld [vmem:[%s3 + $0x180] sm:$0xf]
      %v948 = vld [vmem:[%s3 + $0x184] sm:$0xf]
      %v949 = vld [vmem:[%s3 + $0x188] sm:$0xf]
      %v950 = vld [vmem:[%s3 + $0x18c] sm:$0xf]
      %v951 = vld [vmem:[%s3 + $0x190] sm:$0xf]
      %v952 = vld [vmem:[%s3 + $0x194] sm:$0xf]
      %v953 = vld [vmem:[%s3 + $0x198] sm:$0xf]
      %v954 = vld [vmem:[%s3 + $0x19c] sm:$0xf]
      %v955 = vld [vmem:[%s3 + $0x1a0] sm:$0xf]
      %v956 = vld [vmem:[%s3 + $0x1a4] sm:$0xf]
      %v957 = vld [vmem:[%s3 + $0x1a8] sm:$0xf]
      %v958 = vld [vmem:[%s3 + $0x1ac] sm:$0xf]
      %v959 = vld [vmem:[%s3 + $0x1b0] sm:$0xf]
      %v960 = vld [vmem:[%s3 + $0x1b4] sm:$0xf]
      %v961 = vld [vmem:[%s3 + $0x1b8] sm:$0xf]
      %v962 = vld [vmem:[%s3 + $0x1bc] sm:$0xf]
      %v963 = vld [vmem:[%s3 + $0x1c0] sm:$0xf]
      %v964 = vld [vmem:[%s3 + $0x1c4] sm:$0xf]
      %v965 = vld [vmem:[%s3 + $0x1c8] sm:$0xf]
      %v966 = vld [vmem:[%s3 + $0x1cc] sm:$0xf]
      %v967 = vld [vmem:[%s3 + $0x1d0] sm:$0xf]
      %v968 = vld [vmem:[%s3 + $0x1d4] sm:$0xf]
      %v969 = vld [vmem:[%s3 + $0x1d8] sm:$0xf]
      %v970 = vld [vmem:[%s3 + $0x1dc] sm:$0xf]
      %v971 = vld [vmem:[%s3 + $0x1e0] sm:$0xf]
      %v972 = vld [vmem:[%s3 + $0x1e4] sm:$0xf]
      %v973 = vld [vmem:[%s3 + $0x1e8] sm:$0xf]
      %v974 = vld [vmem:[%s3 + $0x1ec] sm:$0xf]
      %v975 = vld [vmem:[%s3 + $0x1f0] sm:$0xf]
      %v976 = vld [vmem:[%s3 + $0x1f4] sm:$0xf]
      %v977 = vld [vmem:[%s3 + $0x1f8] sm:$0xf]
      %v978 = vld [vmem:[%s3 + $0x1fc] sm:$0xf]
      %v979 = vld [vmem:[%s3 + $0x200] sm:$0xf]
      %v980 = vld [vmem:[%s3 + $0x204] sm:$0xf]
      %v981 = vld [vmem:[%s3 + $0x208] sm:$0xf]
      %v982 = vld [vmem:[%s3 + $0x20c] sm:$0xf]
      %v983 = vld [vmem:[%s3 + $0x210] sm:$0xf]
      %v984 = vld [vmem:[%s3 + $0x214] sm:$0xf]
      %v985 = vld [vmem:[%s3 + $0x218] sm:$0xf]
      %v986 = vld [vmem:[%s3 + $0x21c] sm:$0xf]
      %v987 = vld [vmem:[%s3 + $0x220] sm:$0xf]
      %v988 = vld [vmem:[%s3 + $0x224] sm:$0xf]
      %v989 = vld [vmem:[%s3 + $0x228] sm:$0xf]
      %v990 = vld [vmem:[%s3 + $0x22c] sm:$0xf]
      %v991 = vld [vmem:[%s3 + $0x230] sm:$0xf]
      %v992 = vld [vmem:[%s3 + $0x234] sm:$0xf]
      %v993 = vld [vmem:[%s3 + $0x238] sm:$0xf]
      %v994 = vld [vmem:[%s3 + $0x23c] sm:$0xf]
      %v1139 = vunpack.c.l.b16 %v851
      %v1140 = vunpack.c.l.b16 %v852
      %v1141 = vunpack.c.l.b16 %v853
      %v1142 = vunpack.c.l.b16 %v854
      %v1143 = vunpack.c.l.b16 %v855
      %v1144 = vunpack.c.l.b16 %v856
      %v1145 = vunpack.c.l.b16 %v857
      %v1146 = vunpack.c.l.b16 %v858
      %v1147 = vunpack.c.l.b16 %v859
      %v1148 = vunpack.c.l.b16 %v860
      %v1149 = vunpack.c.l.b16 %v861
      %v1150 = vunpack.c.l.b16 %v862
      %v1151 = vunpack.c.l.b16 %v863
      %v1152 = vunpack.c.l.b16 %v864
      %v1153 = vunpack.c.l.b16 %v865
      %v1154 = vunpack.c.l.b16 %v866
      %v1155 = vunpack.c.l.b16 %v867
      %v1156 = vunpack.c.l.b16 %v868
      %v1157 = vunpack.c.l.b16 %v869
      %v1158 = vunpack.c.l.b16 %v870
      %v1159 = vunpack.c.l.b16 %v871
      %v1160 = vunpack.c.l.b16 %v872
      %v1161 = vunpack.c.l.b16 %v873
      %v1162 = vunpack.c.l.b16 %v874
      %v1163 = vunpack.c.l.b16 %v875
      %v1164 = vunpack.c.l.b16 %v876
      %v1165 = vunpack.c.l.b16 %v877
      %v1166 = vunpack.c.l.b16 %v878
      %v1167 = vunpack.c.l.b16 %v879
      %v1168 = vunpack.c.l.b16 %v880
      %v1169 = vunpack.c.l.b16 %v881
      %v1170 = vunpack.c.l.b16 %v882
      %v1171 = vunpack.c.l.b16 %v883
      %v1172 = vunpack.c.l.b16 %v884
      %v1173 = vunpack.c.l.b16 %v885
      %v1174 = vunpack.c.l.b16 %v886
      %v1175 = vunpack.c.l.b16 %v887
      %v1176 = vunpack.c.l.b16 %v888
      %v1177 = vunpack.c.l.b16 %v889
      %v1178 = vunpack.c.l.b16 %v890
      %v1179 = vunpack.c.l.b16 %v891
      %v1180 = vunpack.c.l.b16 %v892
      %v1181 = vunpack.c.l.b16 %v893
      %v1182 = vunpack.c.l.b16 %v894
      %v1183 = vunpack.c.l.b16 %v895
      %v1184 = vunpack.c.l.b16 %v896
      %v1185 = vunpack.c.l.b16 %v897
      %v1186 = vunpack.c.l.b16 %v898
      %v1187 = vunpack.c.l.b16 %v899
      %v1188 = vunpack.c.l.b16 %v900
      %v1189 = vunpack.c.l.b16 %v901
      %v1190 = vunpack.c.l.b16 %v902
      %v1191 = vunpack.c.l.b16 %v903
      %v1192 = vunpack.c.l.b16 %v904
      %v1193 = vunpack.c.l.b16 %v905
      %v1194 = vunpack.c.l.b16 %v906
      %v1195 = vunpack.c.l.b16 %v907
      %v1196 = vunpack.c.l.b16 %v908
      %v1197 = vunpack.c.l.b16 %v909
      %v1198 = vunpack.c.l.b16 %v910
      %v1199 = vunpack.c.l.b16 %v911
      %v1200 = vunpack.c.l.b16 %v912
      %v1201 = vunpack.c.l.b16 %v913
      %v1202 = vunpack.c.l.b16 %v914
      %v1203 = vunpack.c.l.b16 %v915
      %v1204 = vunpack.c.l.b16 %v916
      %v1205 = vunpack.c.l.b16 %v917
      %v1206 = vunpack.c.l.b16 %v918
      %v1207 = vunpack.c.l.b16 %v919
      %v1208 = vunpack.c.l.b16 %v920
      %v1209 = vunpack.c.l.b16 %v921
      %v1210 = vunpack.c.l.b16 %v922
      %v1211 = vunpack.c.l.b16 %v923
      %v1212 = vunpack.c.l.b16 %v924
      %v1213 = vunpack.c.l.b16 %v925
      %v1214 = vunpack.c.l.b16 %v926
      %v1215 = vunpack.c.l.b16 %v927
      %v1216 = vunpack.c.l.b16 %v928
      %v1217 = vunpack.c.l.b16 %v929
      %v1218 = vunpack.c.l.b16 %v930
      %v1219 = vunpack.c.l.b16 %v931
      %v1220 = vunpack.c.l.b16 %v932
      %v1221 = vunpack.c.l.b16 %v933
      %v1222 = vunpack.c.l.b16 %v934
      %v1223 = vunpack.c.l.b16 %v935
      %v1224 = vunpack.c.l.b16 %v936
      %v1225 = vunpack.c.l.b16 %v937
      %v1226 = vunpack.c.l.b16 %v938
      %v1227 = vunpack.c.l.b16 %v939
      %v1228 = vunpack.c.l.b16 %v940
      %v1229 = vunpack.c.l.b16 %v941
      %v1230 = vunpack.c.l.b16 %v942
      %v1231 = vunpack.c.l.b16 %v943
      %v1232 = vunpack.c.l.b16 %v944
      %v1233 = vunpack.c.l.b16 %v945
      %v1234 = vunpack.c.l.b16 %v946
      %v1235 = vunpack.c.l.b16 %v947
      %v1236 = vunpack.c.l.b16 %v948
      %v1237 = vunpack.c.l.b16 %v949
      %v1238 = vunpack.c.l.b16 %v950
      %v1239 = vunpack.c.l.b16 %v951
      %v1240 = vunpack.c.l.b16 %v952
      %v1241 = vunpack.c.l.b16 %v953
      %v1242 = vunpack.c.l.b16 %v954
      %v1243 = vunpack.c.l.b16 %v955
      %v1244 = vunpack.c.l.b16 %v956
      %v1245 = vunpack.c.l.b16 %v957
      %v1246 = vunpack.c.l.b16 %v958
      %v1247 = vunpack.c.l.b16 %v959
      %v1248 = vunpack.c.l.b16 %v960
      %v1249 = vunpack.c.l.b16 %v961
      %v1250 = vunpack.c.l.b16 %v962
      %v1251 = vunpack.c.l.b16 %v963
      %v1252 = vunpack.c.l.b16 %v964
      %v1253 = vunpack.c.l.b16 %v965
      %v1254 = vunpack.c.l.b16 %v966
      %v1255 = vunpack.c.l.b16 %v967
      %v1256 = vunpack.c.l.b16 %v968
      %v1257 = vunpack.c.l.b16 %v969
      %v1258 = vunpack.c.l.b16 %v970
      %v1259 = vunpack.c.l.b16 %v971
      %v1260 = vunpack.c.l.b16 %v972
      %v1261 = vunpack.c.l.b16 %v973
      %v1262 = vunpack.c.l.b16 %v974
      %v1263 = vunpack.c.l.b16 %v975
      %v1264 = vunpack.c.l.b16 %v976
      %v1265 = vunpack.c.l.b16 %v977
      %v1266 = vunpack.c.l.b16 %v978
      %v1267 = vunpack.c.l.b16 %v979
      %v1268 = vunpack.c.l.b16 %v980
      %v1269 = vunpack.c.l.b16 %v981
      %v1270 = vunpack.c.l.b16 %v982
      %v1271 = vunpack.c.l.b16 %v983
      %v1272 = vunpack.c.l.b16 %v984
      %v1273 = vunpack.c.l.b16 %v985
      %v1274 = vunpack.c.l.b16 %v986
      %v1275 = vunpack.c.l.b16 %v987
      %v1276 = vunpack.c.l.b16 %v988
      %v1277 = vunpack.c.l.b16 %v989
      %v1278 = vunpack.c.l.b16 %v990
      %v1279 = vunpack.c.l.b16 %v991
      %v1280 = vunpack.c.l.b16 %v992
      %v1281 = vunpack.c.l.b16 %v993
      %v1282 = vunpack.c.l.b16 %v994
      %v1283 = vpack.c.b16 %v1140, %v1139
      %v1284 = vpack.c.b16 %v1142, %v1141
      %v1285 = vpack.c.b16 %v1144, %v1143
      %v1286 = vpack.c.b16 %v1146, %v1145
      %v1287 = vpack.c.b16 %v1148, %v1147
      %v1288 = vpack.c.b16 %v1150, %v1149
      %v1289 = vpack.c.b16 %v1152, %v1151
      %v1290 = vpack.c.b16 %v1154, %v1153
      %v1291 = vpack.c.b16 %v1156, %v1155
      %v1292 = vpack.c.b16 %v1158, %v1157
      %v1293 = vpack.c.b16 %v1160, %v1159
      %v1294 = vpack.c.b16 %v1162, %v1161
      %v1295 = vpack.c.b16 %v1164, %v1163
      %v1296 = vpack.c.b16 %v1166, %v1165
      %v1297 = vpack.c.b16 %v1168, %v1167
      %v1298 = vpack.c.b16 %v1170, %v1169
      %v1299 = vpack.c.b16 %v1172, %v1171
      %v1300 = vpack.c.b16 %v1174, %v1173
      %v1301 = vpack.c.b16 %v1176, %v1175
      %v1302 = vpack.c.b16 %v1178, %v1177
      %v1303 = vpack.c.b16 %v1180, %v1179
      %v1304 = vpack.c.b16 %v1182, %v1181
      %v1305 = vpack.c.b16 %v1184, %v1183
      %v1306 = vpack.c.b16 %v1186, %v1185
      %v1307 = vpack.c.b16 %v1188, %v1187
      %v1308 = vpack.c.b16 %v1190, %v1189
      %v1309 = vpack.c.b16 %v1192, %v1191
      %v1310 = vpack.c.b16 %v1194, %v1193
      %v1311 = vpack.c.b16 %v1196, %v1195
      %v1312 = vpack.c.b16 %v1198, %v1197
      %v1313 = vpack.c.b16 %v1200, %v1199
      %v1314 = vpack.c.b16 %v1202, %v1201
      %v1315 = vpack.c.b16 %v1204, %v1203
      %v1316 = vpack.c.b16 %v1206, %v1205
      %v1317 = vpack.c.b16 %v1208, %v1207
      %v1318 = vpack.c.b16 %v1210, %v1209
      %v1319 = vpack.c.b16 %v1212, %v1211
      %v1320 = vpack.c.b16 %v1214, %v1213
      %v1321 = vpack.c.b16 %v1216, %v1215
      %v1322 = vpack.c.b16 %v1218, %v1217
      %v1323 = vpack.c.b16 %v1220, %v1219
      %v1324 = vpack.c.b16 %v1222, %v1221
      %v1325 = vpack.c.b16 %v1224, %v1223
      %v1326 = vpack.c.b16 %v1226, %v1225
      %v1327 = vpack.c.b16 %v1228, %v1227
      %v1328 = vpack.c.b16 %v1230, %v1229
      %v1329 = vpack.c.b16 %v1232, %v1231
      %v1330 = vpack.c.b16 %v1234, %v1233
      %v1331 = vpack.c.b16 %v1236, %v1235
      %v1332 = vpack.c.b16 %v1238, %v1237
      %v1333 = vpack.c.b16 %v1240, %v1239
      %v1334 = vpack.c.b16 %v1242, %v1241
      %v1335 = vpack.c.b16 %v1244, %v1243
      %v1336 = vpack.c.b16 %v1246, %v1245
      %v1337 = vpack.c.b16 %v1248, %v1247
      %v1338 = vpack.c.b16 %v1250, %v1249
      %v1339 = vpack.c.b16 %v1252, %v1251
      %v1340 = vpack.c.b16 %v1254, %v1253
      %v1341 = vpack.c.b16 %v1256, %v1255
      %v1342 = vpack.c.b16 %v1258, %v1257
      %v1343 = vpack.c.b16 %v1260, %v1259
      %v1344 = vpack.c.b16 %v1262, %v1261
      %v1345 = vpack.c.b16 %v1264, %v1263
      %v1346 = vpack.c.b16 %v1266, %v1265
      %v1347 = vpack.c.b16 %v1268, %v1267
      %v1348 = vpack.c.b16 %v1270, %v1269
      %v1349 = vpack.c.b16 %v1272, %v1271
      %v1350 = vpack.c.b16 %v1274, %v1273
      %v1351 = vpack.c.b16 %v1276, %v1275
      %v1352 = vpack.c.b16 %v1278, %v1277
      %v1353 = vpack.c.b16 %v1280, %v1279
      %v1354 = vpack.c.b16 %v1282, %v1281
      %1427 = vmatprep.subr.bf16.mxu0 0
      %1428 = vmatpush1.bf16.msra.mxu0 %v1283
      %1429 = vmatprep.subr.bf16.mxu0 0
      %1430 = vmatpush1.bf16.msra.mxu0 %v1284
      %1431 = vmatprep.subr.bf16.mxu0 0
      %1432 = vmatpush1.bf16.msra.mxu0 %v1285
      %1433 = vmatprep.subr.bf16.mxu0 0
      %1434 = vmatpush1.bf16.msra.mxu0 %v1286
      %1435 = vmatprep.subr.bf16.mxu0 0
      %1436 = vmatpush1.bf16.msra.mxu0 %v1287
      %1437 = vmatprep.subr.bf16.mxu0 0
      %1438 = vmatpush1.bf16.msra.mxu0 %v1288
      %1439 = vmatprep.subr.bf16.mxu0 0
      %1440 = vmatpush1.bf16.msra.mxu0 %v1289
      %1441 = vmatprep.subr.bf16.mxu0 0
      %1442 = vmatpush1.bf16.msra.mxu0 %v1290
      %1443 = vmatprep.subr.bf16.mxu0 0
      %1444 = vmatpush1.bf16.msra.mxu0 %v1291
      %1445 = vmatprep.subr.bf16.mxu0 0
      %1446 = vmatpush1.bf16.msra.mxu0 %v1292
      %1447 = vmatprep.subr.bf16.mxu0 0
      %1448 = vmatpush1.bf16.msra.mxu0 %v1293
      %1449 = vmatprep.subr.bf16.mxu0 0
      %1450 = vmatpush1.bf16.msra.mxu0 %v1294
      %1451 = vmatprep.subr.bf16.mxu0 0
      %1452 = vmatpush1.bf16.msra.mxu0 %v1295
      %1453 = vmatprep.subr.bf16.mxu0 0
      %1454 = vmatpush1.bf16.msra.mxu0 %v1296
      %1455 = vmatprep.subr.bf16.mxu0 0
      %1456 = vmatpush1.bf16.msra.mxu0 %v1297
      %1457 = vmatprep.subr.bf16.mxu0 0
      %1458 = vmatpush1.bf16.msra.mxu0 %v1298
      %1459 = vmatprep.mubr.bf16.mxu0 %v780
      %1460 = vmatmul.mubr.bf16.gmra.mrb[0].mxu0 %v779
      %v1461 = vpop.f32.mrb[0].mxu0
      %v1462 = vadd.f32 0.0, %v1461
      %v1463 = vpop.f32.mrb[0].mxu0
      %v1464 = vpop.f32.mrb[0].mxu0
      %v1465 = vadd.f32 0.0, %v1464
      %v1466 = vpop.f32.mrb[0].mxu0
      %1467 = vmatprep.mubr.bf16.mxu0 %v789
      %1468 = vmatmul.mubr.bf16.gmra.mrb[0].mxu0 %v788
      %v1469 = vpop.f32.mrb[0].mxu0
      %v1470 = vadd.f32 0.0, %v1469
      %v1471 = vpop.f32.mrb[0].mxu0
      %v1472 = vpop.f32.mrb[0].mxu0
      %v1473 = vadd.f32 0.0, %v1472
      %v1474 = vpop.f32.mrb[0].mxu0
      %1475 = vmatprep.mubr.bf16.mxu0 %v798
      %1476 = vmatmul.mubr.bf16.gmra.mrb[0].mxu0 %v797
      %v1477 = vpop.f32.mrb[0].mxu0
      %v1478 = vadd.f32 0.0, %v1477
      %v1479 = vpop.f32.mrb[0].mxu0
      %v1480 = vpop.f32.mrb[0].mxu0
      %v1481 = vadd.f32 0.0, %v1480
      %v1482 = vpop.f32.mrb[0].mxu0
      %1483 = vmatprep.mubr.bf16.mxu0 %v807
      %1484 = vmatmul.mubr.bf16.gmra.mrb[0].mxu0 %v806
      %v1485 = vpop.f32.mrb[0].mxu0
      %v1486 = vadd.f32 0.0, %v1485
      %v1487 = vpop.f32.mrb[0].mxu0
      %v1488 = vpop.f32.mrb[0].mxu0
      %v1489 = vadd.f32 0.0, %v1488
      %v1490 = vpop.f32.mrb[0].mxu0
      %1491 = vmatprep.mubr.bf16.mxu0 %v816
      %1492 = vmatmul.mubr.bf16.gmra.mrb[0].mxu0 %v815
      %v1493 = vpop.f32.mrb[0].mxu0
      %v1494 = vadd.f32 0.0, %v1493
      %v1495 = vpop.f32.mrb[0].mxu0
      %v1496 = vpop.f32.mrb[0].mxu0
      %v1497 = vadd.f32 0.0, %v1496
      %v1498 = vpop.f32.mrb[0].mxu0
      %1499 = vmatprep.mubr.bf16.mxu0 %v825
      %1500 = vmatmul.mubr.bf16.gmra.mrb[0].mxu0 %v824
      %v1501 = vpop.f32.mrb[0].mxu0
      %v1502 = vadd.f32 0.0, %v1501
      %v1503 = vpop.f32.mrb[0].mxu0
      %v1504 = vpop.f32.mrb[0].mxu0
      %v1505 = vadd.f32 0.0, %v1504
      %v1506 = vpop.f32.mrb[0].mxu0
      %1507 = vmatprep.mubr.bf16.mxu0 %v834
      %1508 = vmatmul.mubr.bf16.gmra.mrb[0].mxu0 %v833
      %v1509 = vpop.f32.mrb[0].mxu0
      %v1510 = vadd.f32 0.0, %v1509
      %v1511 = vpop.f32.mrb[0].mxu0
      %v1512 = vpop.f32.mrb[0].mxu0
      %v1513 = vadd.f32 0.0, %v1512
      %v1514 = vpop.f32.mrb[0].mxu0
      %1515 = vmatprep.mubr.bf16.mxu0 %v843
      %1516 = vmatmul.mubr.bf16.gmra.mrb[0].mxu0 %v842
      %v1517 = vpop.f32.mrb[0].mxu0
      %v1518 = vadd.f32 0.0, %v1517
      %v1519 = vpop.f32.mrb[0].mxu0
      %v1520 = vpop.f32.mrb[0].mxu0
      %v1521 = vadd.f32 0.0, %v1520
      %v1522 = vpop.f32.mrb[0].mxu0
      %1523 = vdwg.mxu0
      %1524 = vmatprep.subr.bf16.mxu0 0
      %1525 = vmatpush1.bf16.msra.mxu0 %v1299
      %1526 = vmatprep.subr.bf16.mxu0 0
      %1527 = vmatpush1.bf16.msra.mxu0 %v1300
      %1528 = vmatprep.subr.bf16.mxu0 0
      %1529 = vmatpush1.bf16.msra.mxu0 %v1301
      %1530 = vmatprep.subr.bf16.mxu0 0
      %1531 = vmatpush1.bf16.msra.mxu0 %v1302
      %1532 = vmatprep.subr.bf16.mxu0 0
      %1533 = vmatpush1.bf16.msra.mxu0 %v1303
      %1534 = vmatprep.subr.bf16.mxu0 0
      %1535 = vmatpush1.bf16.msra.mxu0 %v1304
      %1536 = vmatprep.subr.bf16.mxu0 0
      %1537 = vmatpush1.bf16.msra.mxu0 %v1305
      %1538 = vmatprep.subr.bf16.mxu0 0
      %1539 = vmatpush1.bf16.msra.mxu0 %v1306
      %1540 = vmatprep.subr.bf16.mxu0 0
      %1541 = vmatpush1.bf16.msra.mxu0 %v1307
      %1542 = vmatprep.subr.bf16.mxu0 0
      %1543 = vmatpush1.bf16.msra.mxu0 %v1308
      %1544 = vmatprep.subr.bf16.mxu0 0
      %1545 = vmatpush1.bf16.msra.mxu0 %v1309
      %1546 = vmatprep.subr.bf16.mxu0 0
      %1547 = vmatpush1.bf16.msra.mxu0 %v1310
      %1548 = vmatprep.subr.bf16.mxu0 0
      %1549 = vmatpush1.bf16.msra.mxu0 %v1311
      %1550 = vmatprep.subr.bf16.mxu0 0
      %1551 = vmatpush1.bf16.msra.mxu0 %v1312
      %1552 = vmatprep.subr.bf16.mxu0 0
      %1553 = vmatpush1.bf16.msra.mxu0 %v1313
      %1554 = vmatprep.subr.bf16.mxu0 0
      %1555 = vmatpush1.bf16.msra.mxu0 %v1314
      %1556 = vmatprep.mubr.bf16.mxu0 %v782
      %1557 = vmatmul.mubr.bf16.gmra.mrb[0].mxu0 %v781
      %v1558 = vpop.f32.mrb[0].mxu0
      %v1559 = vadd.f32 %v1462, %v1558
      %v1560 = vpop.f32.mrb[0].mxu0
      %v1561 = vpop.f32.mrb[0].mxu0
      %v1562 = vadd.f32 %v1465, %v1561
      %v1563 = vpop.f32.mrb[0].mxu0
      %1564 = vmatprep.mubr.bf16.mxu0 %v791
      %1565 = vmatmul.mubr.bf16.gmra.mrb[0].mxu0 %v790
      %v1566 = vpop.f32.mrb[0].mxu0
      %v1567 = vadd.f32 %v1470, %v1566
      %v1568 = vpop.f32.mrb[0].mxu0
      %v1569 = vpop.f32.mrb[0].mxu0
      %v1570 = vadd.f32 %v1473, %v1569
      %v1571 = vpop.f32.mrb[0].mxu0
      %1572 = vmatprep.mubr.bf16.mxu0 %v800
      %1573 = vmatmul.mubr.bf16.gmra.mrb[0].mxu0 %v799
      %v1574 = vpop.f32.mrb[0].mxu0
      %v1575 = vadd.f32 %v1478, %v1574
      %v1576 = vpop.f32.mrb[0].mxu0
      %v1577 = vpop.f32.mrb[0].mxu0
      %v1578 = vadd.f32 %v1481, %v1577
      %v1579 = vpop.f32.mrb[0].mxu0
      %1580 = vmatprep.mubr.bf16.mxu0 %v809
      %1581 = vmatmul.mubr.bf16.gmra.mrb[0].mxu0 %v808
      %v1582 = vpop.f32.mrb[0].mxu0
      %v1583 = vadd.f32 %v1486, %v1582
      %v1584 = vpop.f32.mrb[0].mxu0
      %v1585 = vpop.f32.mrb[0].mxu0
      %v1586 = vadd.f32 %v1489, %v1585
      %v1587 = vpop.f32.mrb[0].mxu0
      %1588 = vmatprep.mubr.bf16.mxu0 %v818
      %1589 = vmatmul.mubr.bf16.gmra.mrb[0].mxu0 %v817
      %v1590 = vpop.f32.mrb[0].mxu0
      %v1591 = vadd.f32 %v1494, %v1590
      %v1592 = vpop.f32.mrb[0].mxu0
      %v1593 = vpop.f32.mrb[0].mxu0
      %v1594 = vadd.f32 %v1497, %v1593
      %v1595 = vpop.f32.mrb[0].mxu0
      %1596 = vmatprep.mubr.bf16.mxu0 %v827
      %1597 = vmatmul.mubr.bf16.gmra.mrb[0].mxu0 %v826
      %v1598 = vpop.f32.mrb[0].mxu0
      %v1599 = vadd.f32 %v1502, %v1598
      %v1600 = vpop.f32.mrb[0].mxu0
      %v1601 = vpop.f32.mrb[0].mxu0
      %v1602 = vadd.f32 %v1505, %v1601
      %v1603 = vpop.f32.mrb[0].mxu0
      %1604 = vmatprep.mubr.bf16.mxu0 %v836
      %1605 = vmatmul.mubr.bf16.gmra.mrb[0].mxu0 %v835
      %v1606 = vpop.f32.mrb[0].mxu0
      %v1607 = vadd.f32 %v1510, %v1606
      %v1608 = vpop.f32.mrb[0].mxu0
      %v1609 = vpop.f32.mrb[0].mxu0
      %v1610 = vadd.f32 %v1513, %v1609
      %v1611 = vpop.f32.mrb[0].mxu0
      %1612 = vmatprep.mubr.bf16.mxu0 %v845
      %1613 = vmatmul.mubr.bf16.gmra.mrb[0].mxu0 %v844
      %v1614 = vpop.f32.mrb[0].mxu0
      %v1615 = vadd.f32 %v1518, %v1614
      %v1616 = vpop.f32.mrb[0].mxu0
      %v1617 = vpop.f32.mrb[0].mxu0
      %v1618 = vadd.f32 %v1521, %v1617
      %v1619 = vpop.f32.mrb[0].mxu0
      %1620 = vdwg.mxu0
      %1621 = vmatprep.subr.bf16.mxu0 0
      %1622 = vmatpush1.bf16.msra.mxu0 %v1315
      %1623 = vmatprep.subr.bf16.mxu0 0
      %1624 = vmatpush1.bf16.msra.mxu0 %v1316
      %1625 = vmatprep.subr.bf16.mxu0 0
      %1626 = vmatpush1.bf16.msra.mxu0 %v1317
      %1627 = vmatprep.subr.bf16.mxu0 0
      %1628 = vmatpush1.bf16.msra.mxu0 %v1318
      %1629 = vmatprep.subr.bf16.mxu0 0
      %1630 = vmatpush1.bf16.msra.mxu0 %v1319
      %1631 = vmatprep.subr.bf16.mxu0 0
      %1632 = vmatpush1.bf16.msra.mxu0 %v1320
      %1633 = vmatprep.subr.bf16.mxu0 0
      %1634 = vmatpush1.bf16.msra.mxu0 %v1321
      %1635 = vmatprep.subr.bf16.mxu0 0
      %1636 = vmatpush1.bf16.msra.mxu0 %v1322
      %1637 = vmatprep.subr.bf16.mxu0 0
      %1638 = vmatpush1.bf16.msra.mxu0 %v1323
      %1639 = vmatprep.subr.bf16.mxu0 0
      %1640 = vmatpush1.bf16.msra.mxu0 %v1324
      %1641 = vmatprep.subr.bf16.mxu0 0
      %1642 = vmatpush1.bf16.msra.mxu0 %v1325
      %1643 = vmatprep.subr.bf16.mxu0 0
      %1644 = vmatpush1.bf16.msra.mxu0 %v1326
      %1645 = vmatprep.subr.bf16.mxu0 0
      %1646 = vmatpush1.bf16.msra.mxu0 %v1327
      %1647 = vmatprep.subr.bf16.mxu0 0
      %1648 = vmatpush1.bf16.msra.mxu0 %v1328
      %1649 = vmatprep.subr.bf16.mxu0 0
      %1650 = vmatpush1.bf16.msra.mxu0 %v1329
      %1651 = vmatprep.subr.bf16.mxu0 0
      %1652 = vmatpush1.bf16.msra.mxu0 %v1330
      %1653 = vmatprep.mubr.bf16.mxu0 %v784
      %1654 = vmatmul.mubr.bf16.gmra.mrb[0].mxu0 %v783
      %v1655 = vpop.f32.mrb[0].mxu0
      %v1656 = vadd.f32 %v1559, %v1655
      %v1657 = vpop.f32.mrb[0].mxu0
      %v1658 = vpop.f32.mrb[0].mxu0
      %v1659 = vadd.f32 %v1562, %v1658
      %v1660 = vpop.f32.mrb[0].mxu0
      %1661 = vmatprep.mubr.bf16.mxu0 %v793
      %1662 = vmatmul.mubr.bf16.gmra.mrb[0].mxu0 %v792
      %v1663 = vpop.f32.mrb[0].mxu0
      %v1664 = vadd.f32 %v1567, %v1663
      %v1665 = vpop.f32.mrb[0].mxu0
      %v1666 = vpop.f32.mrb[0].mxu0
      %v1667 = vadd.f32 %v1570, %v1666
      %v1668 = vpop.f32.mrb[0].mxu0
      %1669 = vmatprep.mubr.bf16.mxu0 %v802
      %1670 = vmatmul.mubr.bf16.gmra.mrb[0].mxu0 %v801
      %v1671 = vpop.f32.mrb[0].mxu0
      %v1672 = vadd.f32 %v1575, %v1671
      %v1673 = vpop.f32.mrb[0].mxu0
      %v1674 = vpop.f32.mrb[0].mxu0
      %v1675 = vadd.f32 %v1578, %v1674
      %v1676 = vpop.f32.mrb[0].mxu0
      %1677 = vmatprep.mubr.bf16.mxu0 %v811
      %1678 = vmatmul.mubr.bf16.gmra.mrb[0].mxu0 %v810
      %v1679 = vpop.f32.mrb[0].mxu0
      %v1680 = vadd.f32 %v1583, %v1679
      %v1681 = vpop.f32.mrb[0].mxu0
      %v1682 = vpop.f32.mrb[0].mxu0
      %v1683 = vadd.f32 %v1586, %v1682
      %v1684 = vpop.f32.mrb[0].mxu0
      %1685 = vmatprep.mubr.bf16.mxu0 %v820
      %1686 = vmatmul.mubr.bf16.gmra.mrb[0].mxu0 %v819
      %v1687 = vpop.f32.mrb[0].mxu0
      %v1688 = vadd.f32 %v1591, %v1687
      %v1689 = vpop.f32.mrb[0].mxu0
      %v1690 = vpop.f32.mrb[0].mxu0
      %v1691 = vadd.f32 %v1594, %v1690
      %v1692 = vpop.f32.mrb[0].mxu0
      %1693 = vmatprep.mubr.bf16.mxu0 %v829
      %1694 = vmatmul.mubr.bf16.gmra.mrb[0].mxu0 %v828
      %v1695 = vpop.f32.mrb[0].mxu0
      %v1696 = vadd.f32 %v1599, %v1695
      %v1697 = vpop.f32.mrb[0].mxu0
      %v1698 = vpop.f32.mrb[0].mxu0
      %v1699 = vadd.f32 %v1602, %v1698
      %v1700 = vpop.f32.mrb[0].mxu0
      %1701 = vmatprep.mubr.bf16.mxu0 %v838
      %1702 = vmatmul.mubr.bf16.gmra.mrb[0].mxu0 %v837
      %v1703 = vpop.f32.mrb[0].mxu0
      %v1704 = vadd.f32 %v1607, %v1703
      %v1705 = vpop.f32.mrb[0].mxu0
      %v1706 = vpop.f32.mrb[0].mxu0
      %v1707 = vadd.f32 %v1610, %v1706
      %v1708 = vpop.f32.mrb[0].mxu0
      %1709 = vmatprep.mubr.bf16.mxu0 %v847
      %1710 = vmatmul.mubr.bf16.gmra.mrb[0].mxu0 %v846
      %v1711 = vpop.f32.mrb[0].mxu0
      %v1712 = vadd.f32 %v1615, %v1711
      %v1713 = vpop.f32.mrb[0].mxu0
      %v1714 = vpop.f32.mrb[0].mxu0
      %v1715 = vadd.f32 %v1618, %v1714
      %v1716 = vpop.f32.mrb[0].mxu0
      %1717 = vdwg.mxu0
      %1718 = vmatprep.subr.bf16.mxu0 0
      %1719 = vmatpush1.bf16.msra.mxu0 %v1331
      %1720 = vmatprep.subr.bf16.mxu0 0
      %1721 = vmatpush1.bf16.msra.mxu0 %v1332
      %1722 = vmatprep.subr.bf16.mxu0 0
      %1723 = vmatpush1.bf16.msra.mxu0 %v1333
      %1724 = vmatprep.subr.bf16.mxu0 0
      %1725 = vmatpush1.bf16.msra.mxu0 %v1334
      %1726 = vmatprep.subr.bf16.mxu0 0
      %1727 = vmatpush1.bf16.msra.mxu0 %v1335
      %1728 = vmatprep.subr.bf16.mxu0 0
      %1729 = vmatpush1.bf16.msra.mxu0 %v1336
      %1730 = vmatprep.subr.bf16.mxu0 0
      %1731 = vmatpush1.bf16.msra.mxu0 %v1337
      %1732 = vmatprep.subr.bf16.mxu0 0
      %1733 = vmatpush1.bf16.msra.mxu0 %v1338
      %1734 = vmatprep.subr.bf16.mxu0 0
      %1735 = vmatpush1.bf16.msra.mxu0 %v1339
      %1736 = vmatprep.subr.bf16.mxu0 0
      %1737 = vmatpush1.bf16.msra.mxu0 %v1340
      %1738 = vmatprep.subr.bf16.mxu0 0
      %1739 = vmatpush1.bf16.msra.mxu0 %v1341
      %1740 = vmatprep.subr.bf16.mxu0 0
      %1741 = vmatpush1.bf16.msra.mxu0 %v1342
      %1742 = vmatprep.subr.bf16.mxu0 0
      %1743 = vmatpush1.bf16.msra.mxu0 %v1343
      %1744 = vmatprep.subr.bf16.mxu0 0
      %1745 = vmatpush1.bf16.msra.mxu0 %v1344
      %1746 = vmatprep.subr.bf16.mxu0 0
      %1747 = vmatpush1.bf16.msra.mxu0 %v1345
      %1748 = vmatprep.subr.bf16.mxu0 0
      %1749 = vmatpush1.bf16.msra.mxu0 %v1346
      %1750 = vmatprep.mubr.bf16.mxu0 %v786
      %1751 = vmatmul.mubr.bf16.gmra.mrb[0].mxu0 %v785
      %v1752 = vpop.f32.mrb[0].mxu0
      %v1753 = vadd.f32 %v1656, %v1752
      %v1754 = vpop.f32.mrb[0].mxu0
      %v1755 = vpop.f32.mrb[0].mxu0
      %v1756 = vadd.f32 %v1659, %v1755
      %v1757 = vpop.f32.mrb[0].mxu0
      %1758 = vmatprep.mubr.bf16.mxu0 %v795
      %1759 = vmatmul.mubr.bf16.gmra.mrb[0].mxu0 %v794
      %v1760 = vpop.f32.mrb[0].mxu0
      %v1761 = vadd.f32 %v1664, %v1760
      %v1762 = vpop.f32.mrb[0].mxu0
      %v1763 = vpop.f32.mrb[0].mxu0
      %v1764 = vadd.f32 %v1667, %v1763
      %v1765 = vpop.f32.mrb[0].mxu0
      %1766 = vmatprep.mubr.bf16.mxu0 %v804
      %1767 = vmatmul.mubr.bf16.gmra.mrb[0].mxu0 %v803
      %v1768 = vpop.f32.mrb[0].mxu0
      %v1769 = vadd.f32 %v1672, %v1768
      %v1770 = vpop.f32.mrb[0].mxu0
      %v1771 = vpop.f32.mrb[0].mxu0
      %v1772 = vadd.f32 %v1675, %v1771
      %v1773 = vpop.f32.mrb[0].mxu0
      %1774 = vmatprep.mubr.bf16.mxu0 %v813
      %1775 = vmatmul.mubr.bf16.gmra.mrb[0].mxu0 %v812
      %v1776 = vpop.f32.mrb[0].mxu0
      %v1777 = vadd.f32 %v1680, %v1776
      %v1778 = vpop.f32.mrb[0].mxu0
      %v1779 = vpop.f32.mrb[0].mxu0
      %v1780 = vadd.f32 %v1683, %v1779
      %v1781 = vpop.f32.mrb[0].mxu0
      %1782 = vmatprep.mubr.bf16.mxu0 %v822
      %1783 = vmatmul.mubr.bf16.gmra.mrb[0].mxu0 %v821
      %v1784 = vpop.f32.mrb[0].mxu0
      %v1785 = vadd.f32 %v1688, %v1784
      %v1786 = vpop.f32.mrb[0].mxu0
      %v1787 = vpop.f32.mrb[0].mxu0
      %v1788 = vadd.f32 %v1691, %v1787
      %v1789 = vpop.f32.mrb[0].mxu0
      %1790 = vmatprep.mubr.bf16.mxu0 %v831
      %1791 = vmatmul.mubr.bf16.gmra.mrb[0].mxu0 %v830
      %v1792 = vpop.f32.mrb[0].mxu0
      %v1793 = vadd.f32 %v1696, %v1792
      %v1794 = vpop.f32.mrb[0].mxu0
      %v1795 = vpop.f32.mrb[0].mxu0
      %v1796 = vadd.f32 %v1699, %v1795
      %v1797 = vpop.f32.mrb[0].mxu0
      %1798 = vmatprep.mubr.bf16.mxu0 %v840
      %1799 = vmatmul.mubr.bf16.gmra.mrb[0].mxu0 %v839
      %v1800 = vpop.f32.mrb[0].mxu0
      %v1801 = vadd.f32 %v1704, %v1800
      %v1802 = vpop.f32.mrb[0].mxu0
      %v1803 = vpop.f32.mrb[0].mxu0
      %v1804 = vadd.f32 %v1707, %v1803
      %v1805 = vpop.f32.mrb[0].mxu0
      %1806 = vmatprep.mubr.bf16.mxu0 %v849
      %1807 = vmatmul.mubr.bf16.gmra.mrb[0].mxu0 %v848
      %v1808 = vpop.f32.mrb[0].mxu0
      %v1809 = vadd.f32 %v1712, %v1808
      %v1810 = vpop.f32.mrb[0].mxu0
      %v1811 = vpop.f32.mrb[0].mxu0
      %v1812 = vadd.f32 %v1715, %v1811
      %v1813 = vpop.f32.mrb[0].mxu0
      %1814 = vdwg.mxu0
      %1815 = vmatprep.subr.bf16.mxu0 0
      %1816 = vmatpush1.bf16.msra.mxu0 %v1347
      %1817 = vmatprep.subr.bf16.mxu0 0
      %1818 = vmatpush1.bf16.msra.mxu0 %v1348
      %1819 = vmatprep.subr.bf16.mxu0 0
      %1820 = vmatpush1.bf16.msra.mxu0 %v1349
      %1821 = vmatprep.subr.bf16.mxu0 0
      %1822 = vmatpush1.bf16.msra.mxu0 %v1350
      %1823 = vmatprep.subr.bf16.mxu0 0
      %1824 = vmatpush1.bf16.msra.mxu0 %v1351
      %1825 = vmatprep.subr.bf16.mxu0 0
      %1826 = vmatpush1.bf16.msra.mxu0 %v1352
      %1827 = vmatprep.subr.bf16.mxu0 0
      %1828 = vmatpush1.bf16.msra.mxu0 %v1353
      %1829 = vmatprep.subr.bf16.mxu0 0
      %1830 = vmatpush1.bf16.msra.mxu0 %v1354
      %1831 = vmatprep.subr.bf16.mxu0 0
      %1832 = vmatpush1.bf16.msra.mxu0 0
      %1833 = vmatprep.subr.bf16.mxu0 0
      %1834 = vmatpush1.bf16.msra.mxu0 0
      %1835 = vmatprep.subr.bf16.mxu0 0
      %1836 = vmatpush1.bf16.msra.mxu0 0
      %1837 = vmatprep.subr.bf16.mxu0 0
      %1838 = vmatpush1.bf16.msra.mxu0 0
      %1839 = vmatprep.subr.bf16.mxu0 0
      %1840 = vmatpush1.bf16.msra.mxu0 0
      %1841 = vmatprep.subr.bf16.mxu0 0
      %1842 = vmatpush1.bf16.msra.mxu0 0
      %1843 = vmatprep.subr.bf16.mxu0 0
      %1844 = vmatpush1.bf16.msra.mxu0 0
      %1845 = vmatprep.subr.bf16.mxu0 0
      %1846 = vmatpush1.bf16.msra.mxu0 0
      %1847 = vmatprep.mubr.bf16.mxu0 0
      %1848 = vmatmul.mubr.bf16.gmra.mrb[0].mxu0 %v787
      %v1849 = vpop.f32.mrb[0].mxu0
      %v1850 = vadd.f32 %v1753, %v1849
      %v1851 = vpop.f32.mrb[0].mxu0
      %v1852 = vpop.f32.mrb[0].mxu0
      %v1853 = vadd.f32 %v1756, %v1852
      %v1854 = vpop.f32.mrb[0].mxu0
      %1855 = vmatprep.mubr.bf16.mxu0 0
      %1856 = vmatmul.mubr.bf16.gmra.mrb[0].mxu0 %v796
      %v1857 = vpop.f32.mrb[0].mxu0
      %v1858 = vadd.f32 %v1761, %v1857
      %v1859 = vpop.f32.mrb[0].mxu0
      %v1860 = vpop.f32.mrb[0].mxu0
      %v1861 = vadd.f32 %v1764, %v1860
      %v1862 = vpop.f32.mrb[0].mxu0
      %1863 = vmatprep.mubr.bf16.mxu0 0
      %1864 = vmatmul.mubr.bf16.gmra.mrb[0].mxu0 %v805
      %v1865 = vpop.f32.mrb[0].mxu0
      %v1866 = vadd.f32 %v1769, %v1865
      %v1867 = vpop.f32.mrb[0].mxu0
      %v1868 = vpop.f32.mrb[0].mxu0
      %v1869 = vadd.f32 %v1772, %v1868
      %v1870 = vpop.f32.mrb[0].mxu0
      %1871 = vmatprep.mubr.bf16.mxu0 0
      %1872 = vmatmul.mubr.bf16.gmra.mrb[0].mxu0 %v814
      %v1873 = vpop.f32.mrb[0].mxu0
      %v1874 = vadd.f32 %v1777, %v1873
      %v1875 = vpop.f32.mrb[0].mxu0
      %v1876 = vpop.f32.mrb[0].mxu0
      %v1877 = vadd.f32 %v1780, %v1876
      %v1878 = vpop.f32.mrb[0].mxu0
      %1879 = vmatprep.mubr.bf16.mxu0 0
      %1880 = vmatmul.mubr.bf16.gmra.mrb[0].mxu0 %v823
      %v1881 = vpop.f32.mrb[0].mxu0
      %v1882 = vadd.f32 %v1785, %v1881
      %v1883 = vpop.f32.mrb[0].mxu0
      %v1884 = vpop.f32.mrb[0].mxu0
      %v1885 = vadd.f32 %v1788, %v1884
      %v1886 = vpop.f32.mrb[0].mxu0
      %1887 = vmatprep.mubr.bf16.mxu0 0
      %1888 = vmatmul.mubr.bf16.gmra.mrb[0].mxu0 %v832
      %v1889 = vpop.f32.mrb[0].mxu0
      %v1890 = vadd.f32 %v1793, %v1889
      %v1891 = vpop.f32.mrb[0].mxu0
      %v1892 = vpop.f32.mrb[0].mxu0
      %v1893 = vadd.f32 %v1796, %v1892
      %v1894 = vpop.f32.mrb[0].mxu0
      %1895 = vmatprep.mubr.bf16.mxu0 0
      %1896 = vmatmul.mubr.bf16.gmra.mrb[0].mxu0 %v841
      %v1897 = vpop.f32.mrb[0].mxu0
      %v1898 = vadd.f32 %v1801, %v1897
      %v1899 = vpop.f32.mrb[0].mxu0
      %v1900 = vpop.f32.mrb[0].mxu0
      %v1901 = vadd.f32 %v1804, %v1900
      %v1902 = vpop.f32.mrb[0].mxu0
      %1903 = vmatprep.mubr.bf16.mxu0 0
      %1904 = vmatmul.mubr.bf16.gmra.mrb[0].mxu0 %v850
      %v1905 = vpop.f32.mrb[0].mxu0
      %v1906 = vadd.f32 %v1809, %v1905
      %v1907 = vpop.f32.mrb[0].mxu0
      %v1908 = vpop.f32.mrb[0].mxu0
      %v1909 = vadd.f32 %v1812, %v1908
      %v1910 = vpop.f32.mrb[0].mxu0
      %1911 = vdwg.mxu0
      %p1912 = scmp.eq.s32.totalorder %s23, 0
      // Predicated region
      $region37: #{unet_conv_block.4} parent=35 // pred_check
        %p1913 = pneg %p1912
      $region38: #{unet_conv_block.4} parent=35 // pred_check_branch
        %1915 = sbr.rel (%p1913) target = $region40
      $region39: #{unet_conv_block.4} parent=35 // pred_region
        %1916 = vst [vmem:[%s290] sm:$0x1] 0.0
        %1917 = vst [vmem:[%s293] sm:$0x1] 0.0
      $region40: #{unet_conv_block.4} parent=35 // pred_fallthru
        _
      %v1918 = vld [vmem:[%s290] sm:$0x1]
      %v1919 = vadd.f32 %v1850, %v1853
      %v1920 = vadd.f32 %v1919, %v1858
      %v1921 = vadd.f32 %v1920, %v1861
      %v1922 = vadd.f32 %v1921, %v1866
      %v1923 = vadd.f32 %v1922, %v1869
      %v1924 = vadd.f32 %v1923, %v1874
      %v1925 = vadd.f32 %v1924, %v1877
      %v1926 = vadd.f32 %v1925, %v1882
      %v1927 = vadd.f32 %v1926, %v1885
      %v1928 = vadd.f32 %v1927, %v1890
      %v1929 = vadd.f32 %v1928, %v1893
      %v1930 = vadd.f32 %v1929, %v1898
      %v1931 = vadd.f32 %v1930, %v1901
      %v1932 = vadd.f32 %v1931, %v1906
      %v1933 = vadd.f32 %v1932, %v1909
      %v1934 = vrot.slane %v1933, 4
      %v1935 = vadd.f32 %v1933, %v1934
      %v1936 = vrot.slane %v1935, 2
      %v1937 = vadd.f32 %v1935, %v1936
      %v1938 = vrot.slane %v1937, 1
      %v1939 = vadd.f32 %v1937, %v1938
      %v1940 = vadd.f32 %v1918, %v1939
      %1941 = vst [vmem:[%s290] sm:$0x1] %v1940
      %v1942 = vld [vmem:[%s293] sm:$0x1]
      %v1943 = vmul.f32 %v1850, %v1850
      %v1944 = vmul.f32 %v1853, %v1853
      %v1945 = vmul.f32 %v1858, %v1858
      %v1946 = vmul.f32 %v1861, %v1861
      %v1947 = vmul.f32 %v1866, %v1866
      %v1948 = vmul.f32 %v1869, %v1869
      %v1949 = vmul.f32 %v1874, %v1874
      %v1950 = vmul.f32 %v1877, %v1877
      %v1951 = vmul.f32 %v1882, %v1882
      %v1952 = vmul.f32 %v1885, %v1885
      %v1953 = vmul.f32 %v1890, %v1890
      %v1954 = vmul.f32 %v1893, %v1893
      %v1955 = vmul.f32 %v1898, %v1898
      %v1956 = vmul.f32 %v1901, %v1901
      %v1957 = vmul.f32 %v1906, %v1906
      %v1958 = vmul.f32 %v1909, %v1909
      %v1959 = vadd.f32 %v1943, %v1944
      %v1960 = vadd.f32 %v1959, %v1945
      %v1961 = vadd.f32 %v1960, %v1946
      %v1962 = vadd.f32 %v1961, %v1947
      %v1963 = vadd.f32 %v1962, %v1948
      %v1964 = vadd.f32 %v1963, %v1949
      %v1965 = vadd.f32 %v1964, %v1950
      %v1966 = vadd.f32 %v1965, %v1951
      %v1967 = vadd.f32 %v1966, %v1952
      %v1968 = vadd.f32 %v1967, %v1953
      %v1969 = vadd.f32 %v1968, %v1954
      %v1970 = vadd.f32 %v1969, %v1955
      %v1971 = vadd.f32 %v1970, %v1956
      %v1972 = vadd.f32 %v1971, %v1957
      %v1973 = vadd.f32 %v1972, %v1958
      %v1974 = vrot.slane %v1973, 4
      %v1975 = vadd.f32 %v1973, %v1974
      %v1976 = vrot.slane %v1975, 2
      %v1977 = vadd.f32 %v1975, %v1976
      %v1978 = vrot.slane %v1977, 1
      %v1979 = vadd.f32 %v1977, %v1978
      %v1980 = vadd.f32 %v1942, %v1979
      %1981 = vst [vmem:[%s293] sm:$0x1] %v1980
      %1982 = vst [vmem:[%s286 + $0x1] sm:$0xff] %v1850
      %1983 = vst [vmem:[%s286 + $0x9] sm:$0xff] %v1853
      %1984 = vst [vmem:[%s286 + $0x19] sm:$0xff] %v1858
      %1985 = vst [vmem:[%s286 + $0x21] sm:$0xff] %v1861
      %1986 = vst [vmem:[%s286 + $0x31] sm:$0xff] %v1866
      %1987 = vst [vmem:[%s286 + $0x39] sm:$0xff] %v1869
      %1988 = vst [vmem:[%s286 + $0x49] sm:$0xff] %v1874
      %1989 = vst [vmem:[%s286 + $0x51] sm:$0xff] %v1877
      %1990 = vst [vmem:[%s286 + $0x61] sm:$0xff] %v1882
      %1991 = vst [vmem:[%s286 + $0x69] sm:$0xff] %v1885
      %1992 = vst [vmem:[%s286 + $0x79] sm:$0xff] %v1890
      %1993 = vst [vmem:[%s286 + $0x81] sm:$0xff] %v1893
      %1994 = vst [vmem:[%s286 + $0x91] sm:$0xff] %v1898
      %1995 = vst [vmem:[%s286 + $0x99] sm:$0xff] %v1901
      %1996 = vst [vmem:[%s286 + $0xa9] sm:$0xff] %v1906
      %1997 = vst [vmem:[%s286 + $0xb1] sm:$0xff] %v1909
      %1998 = vst [vmem:[%s286] sm:$0x1] 0.0
      %1999 = vst [vmem:[%s286 + $0x18] sm:$0x1] 0.0
      %2000 = vst [vmem:[%s286 + $0x30] sm:$0x1] 0.0
      %2001 = vst [vmem:[%s286 + $0x48] sm:$0x1] 0.0
      %2002 = vst [vmem:[%s286 + $0x60] sm:$0x1] 0.0
      %2003 = vst [vmem:[%s286 + $0x78] sm:$0x1] 0.0
      %2004 = vst [vmem:[%s286 + $0x90] sm:$0x1] 0.0
      %2005 = vst [vmem:[%s286 + $0xa8] sm:$0x1] 0.0
      %2006 = vst [vmem:[%s286 + $0x11] sm:$0x1] 0.0
      %2007 = vst [vmem:[%s286 + $0x29] sm:$0x1] 0.0
      %2008 = vst [vmem:[%s286 + $0x41] sm:$0x1] 0.0
      %2009 = vst [vmem:[%s286 + $0x59] sm:$0x1] 0.0
      %2010 = vst [vmem:[%s286 + $0x71] sm:$0x1] 0.0
      %2011 = vst [vmem:[%s286 + $0x89] sm:$0x1] 0.0
      %2012 = vst [vmem:[%s286 + $0xa1] sm:$0x1] 0.0
      %2013 = vst [vmem:[%s286 + $0xb9] sm:$0x1] 0.0
      %s2014 = smul.u32 8, %s23
      %p2015 = scmp.lt.s32.totalorder %s22, 1
      %s2016 = scalar_select %p2015, %s22, 1
      %p2017 = scmp.lt.s32.totalorder %s2014, 15
      %s2018 = scalar_select %p2017, %s2014, 15
      %s2019 = smul.addr %s2018, 3
      %s2020 = smul.addr %s2016, 48
      %s2021 = sadd.s32 %s2019, %s2020
      %s2022 = smul.addr %s2021, 8
      %s2023 = scalar_lea.vmem %s4, %s2022
      %p2024 = scmp.lt.s32.totalorder %s22, 1
      %s2025 = scalar_select %p2024, %s22, 1
      %s2026 = scalar_lea.vmem %s5, %s2025
      %p2027 = scmp.lt.s32.totalorder %s22, 1
      %s2028 = scalar_select %p2027, %s22, 1
      %s2029 = scalar_lea.vmem %s6, %s2028
      // Predicated region
      $region41: #{unet_conv_block.4} parent=35 // pred_check
        %p2030 = pneg %p139
      $region42: #{unet_conv_block.4} parent=35 // pred_check_branch
        %2032 = sbr.rel (%p2030) target = $region44
      $region43: #{unet_conv_block.4} parent=35 // pred_region
        %s2033 = smul.u32 8, %s23
      $region44: #{unet_conv_block.4} parent=35 // pred_fallthru
        _
      // Predicated region
      $region45: #{unet_conv_block.4} parent=35 // pred_check
        %p2034 = pneg %p165
      $region46: #{unet_conv_block.4} parent=35 // pred_check_branch
        %2036 = sbr.rel (%p2034) target = $region48
      $region47: #{unet_conv_block.4} parent=35 // pred_region
        _
      $region48: #{unet_conv_block.4} parent=35 // pred_fallthru
        _
      // Predicated region
      $region49: #{unet_conv_block.4} parent=35 // pred_check
        %p2037 = pneg %p191
      $region50: #{unet_conv_block.4} parent=35 // pred_check_branch
        %2039 = sbr.rel (%p2037) target = $region52
      $region51: #{unet_conv_block.4} parent=35 // pred_region
        _
      $region52: #{unet_conv_block.4} parent=35 // pred_fallthru
        _
    $region36: #{unet_conv_block.4} parent=5 // pred_fallthru
      _
    %p2040 = scmp.le.s32.totalorder 2, %s13
    // Predicated region
    $region53: #{unet_conv_block.4} parent=5 // pred_check
      %p2041 = pneg %p2040
    $region54: #{unet_conv_block.4} parent=5 // pred_check_branch
      %2043 = sbr.rel (%p2041) target = $region56
    $region55: #{unet_conv_block.4} parent=5 // pred_region
      %s2044 = ssub.s32 %s13, 2
      // Predicated region
      $region57: #{unet_conv_block.4} parent=55 // pred_check
        %p2045 = pneg %p145
      $region58: #{unet_conv_block.4} parent=55 // pred_check_branch
        %2047 = sbr.rel (%p2045) target = $region60
      $region59: #{unet_conv_block.4} parent=55 // pred_region
        %s2048 = smul.u32 8, %s25
        %p2049 = scmp.lt.s32.totalorder %s24, 1
        %s2050 = scalar_select %p2049, %s24, 1
        %p2051 = scmp.lt.s32.totalorder %s2048, 15
        %s2052 = scalar_select %p2051, %s2048, 15
        %s2053 = smul.addr %s2052, 3
        %s2054 = smul.addr %s2050, 48
        %s2055 = sadd.s32 %s2053, %s2054
        %s2056 = smul.addr %s2055, 8
        %s2057 = scalar_lea.vmem %s4, %s2056
      $region60: #{unet_conv_block.4} parent=55 // pred_fallthru
        _
      // Predicated region
      $region61: #{unet_conv_block.4} parent=55 // pred_check
        %p2058 = pneg %p171
      $region62: #{unet_conv_block.4} parent=55 // pred_check_branch
        %2060 = sbr.rel (%p2058) target = $region64
      $region63: #{unet_conv_block.4} parent=55 // pred_region
        %p2061 = scmp.lt.s32.totalorder %s24, 1
        %s2062 = scalar_select %p2061, %s24, 1
        %s2063 = scalar_lea.vmem %s5, %s2062
      $region64: #{unet_conv_block.4} parent=55 // pred_fallthru
        _
      // Predicated region
      $region65: #{unet_conv_block.4} parent=55 // pred_check
        %p2064 = pneg %p197
      $region66: #{unet_conv_block.4} parent=55 // pred_check_branch
        %2066 = sbr.rel (%p2064) target = $region68
      $region67: #{unet_conv_block.4} parent=55 // pred_region
        %p2067 = scmp.lt.s32.totalorder %s24, 1
        %s2068 = scalar_select %p2067, %s24, 1
        %s2069 = scalar_lea.vmem %s6, %s2068
      $region68: #{unet_conv_block.4} parent=55 // pred_fallthru
        _
    $region56: #{unet_conv_block.4} parent=5 // pred_fallthru
      _
  $region6: #{unet_conv_block.4} parent=0 // loop_footer
    %s17 = sadd.s32 1, %s13
  $region7: #{unet_conv_block.4} parent=0 // loop_footer_branch
    %12 = sbr.rel target = $region3
  $region8: #{unet_conv_block.4} parent=0 // loop_exit
    _

</llo_original>
